<compile_context>
chip_gen: v5e
topology: v5e:2x2
jax: 0.10.0
libtpu: 0.0.40
codegen_flags: <defaults>
</compile_context>

<pallas_src>
import jax
import jax.numpy as jnp
from jax.experimental import pallas as pl
from jax.experimental.pallas import tpu as pltpu


# Original / lane-padded feature sizes.
D_IN, D_IN_P = 784, 896        # 28*28 -> 7*128
D_H, D_H_P = 400, 512          # hidden
D_Z, D_Z_P = 20, 128           # latent
D_HEAD_P = 2 * D_Z_P           # fused mu || logvar head output (256 lanes)


def _vae_kernel(x_ref, eps_ref,
                ew1_ref, eb1_ref,          # encoder trunk: 896 -> 512
                wh_ref, bh_ref,            # fused mu||logvar heads: 512 -> 256
                dw1_ref, db1_ref,          # decoder: 128 -> 512
                dw2_ref, db2_ref,          # decoder: 512 -> 896
                recon_ref, head_ref):
    x = x_ref[...]                                          # (TB, 896) bf16

    # ---- Encoder trunk: Linear + ReLU (f32 accumulation on MXU) ----
    h = jnp.dot(x, ew1_ref[...], preferred_element_type=jnp.float32)
    h = jnp.maximum(h + eb1_ref[...], 0.0)                  # (TB, 512) f32

    # ---- Fused heads: one 256-lane matmul; mu in [0,128), logvar in [128,256) ----
    heads = jnp.dot(h.astype(jnp.bfloat16), wh_ref[...],
                    preferred_element_type=jnp.float32) + bh_ref[...]
    mu = heads[:, :D_Z_P]                                   # 128-aligned slices
    lv = heads[:, D_Z_P:]

    # ---- Reparameterization: z = mu + eps * exp(0.5 * logvar) ----
    # (padding lanes: lv == 0, eps == 0  =>  z padding stays 0)
    z = mu + eps_ref[...] * jnp.exp(0.5 * lv)               # (TB, 128) f32

    # ---- Decoder: Linear + ReLU, Linear + Sigmoid ----
    h2 = jnp.dot(z.astype(jnp.bfloat16), dw1_ref[...],
                 preferred_element_type=jnp.float32)
    h2 = jnp.maximum(h2 + db1_ref[...], 0.0)                # (TB, 512) f32
    logits = jnp.dot(h2.astype(jnp.bfloat16), dw2_ref[...],
                     preferred_element_type=jnp.float32) + db2_ref[...]
    # sigmoid = 1 / (1 + exp(-x)); exp and approx reciprocal both run on EUP.
    recon_ref[...] = pl.reciprocal(1.0 + jnp.exp(-logits), approx=True)

    head_ref[...] = heads                                   # lane-dense (TB, 256)


def _round_up(x, m):
    return (x + m - 1) // m * m


def vae_forward(img, eps, kparams):
    """img: (B, 1, 28, 28) f32 NCHW.  eps: (B, 20) f32 standard-normal noise.
    kparams: padded/fused bf16 params from prepare_params().

    Returns (reconstruction (B, 784), mu (B, 20), logvar (B, 20)), matching
    torch VAE.forward (logvar is the raw second-head output, `sigma` in torch).
    """
    B = img.shape[0]
    x = img.reshape(B, -1).astype(jnp.float32)              # torch .view(B, -1)

    # Batch tiling: pad rows to a multiple of 8 (f32 sublane); for large batch
    # tile at 128 rows and pipeline over a "parallel" grid axis.
    B_pad = _round_up(B, 8)
    if B_pad > 128:
        TB = 128
        B_pad = _round_up(B_pad, TB)
    else:
        TB = B_pad
    grid = (B_pad // TB,)

    # Lane/row-pad activations once in the wrapper; x goes in as bf16.
    x_p = jnp.zeros((B_pad, D_IN_P), jnp.bfloat16)
    x_p = x_p.at[:B, :D_IN].set(x.astype(jnp.bfloat16))
    eps_p = jnp.zeros((B_pad, D_Z_P), jnp.float32)
    eps_p = eps_p.at[:B, :D_Z].set(eps.astype(jnp.float32))

    def resident(shape):
        # whole-array block, constant block index => fetched once, stays in VMEM
        return pl.BlockSpec(shape, lambda i: (0, 0))

    in_specs = [
        pl.BlockSpec((TB, D_IN_P), lambda i: (i, 0)),       # x tile
        pl.BlockSpec((TB, D_Z_P), lambda i: (i, 0)),        # eps tile
        resident((D_IN_P, D_H_P)), resident((1, D_H_P)),    # ew1, eb1
        resident((D_H_P, D_HEAD_P)), resident((1, D_HEAD_P)),  # wh, bh
        resident((D_Z_P, D_H_P)), resident((1, D_H_P)),     # dw1, db1
        resident((D_H_P, D_IN_P)), resident((1, D_IN_P)),   # dw2, db2
    ]
    out_specs = (
        pl.BlockSpec((TB, D_IN_P), lambda i: (i, 0)),       # recon tile
        pl.BlockSpec((TB, D_HEAD_P), lambda i: (i, 0)),     # fused mu||lv tile
    )
    out_shape = (
        jax.ShapeDtypeStruct((B_pad, D_IN_P), jnp.float32),
        jax.ShapeDtypeStruct((B_pad, D_HEAD_P), jnp.float32),
    )

    # Advisory cost estimate for the XLA scheduler.
    flops = 2 * B_pad * (D_IN_P * D_H_P + D_H_P * D_HEAD_P
                         + D_Z_P * D_H_P + D_H_P * D_IN_P)
    transcendentals = B_pad * (D_Z_P + 2 * D_IN_P)
    weight_bytes = 2 * (D_IN_P * D_H_P + D_H_P * D_HEAD_P
                        + D_Z_P * D_H_P + D_H_P * D_IN_P) \
        + 4 * (D_H_P + D_HEAD_P + D_H_P + D_IN_P)
    act_bytes = B_pad * (D_IN_P * 2 + D_Z_P * 4 + D_IN_P * 4 + D_HEAD_P * 4)
    cost = pl.CostEstimate(flops=flops, transcendentals=transcendentals,
                           bytes_accessed=weight_bytes + act_bytes)

    recon_p, heads_p = pl.pallas_call(
        _vae_kernel,
        out_shape=out_shape,
        grid=grid,
        in_specs=in_specs,
        out_specs=out_specs,
        compiler_params=pltpu.CompilerParams(
            dimension_semantics=("parallel",),
            vmem_limit_bytes=16 * 1024 * 1024,
        ),
        cost_estimate=cost,
    )(
        x_p, eps_p,
        kparams["ew1"], kparams["eb1"],
        kparams["wh"], kparams["bh"],
        kparams["dw1"], kparams["db1"],
        kparams["dw2"], kparams["db2"],
    )

    recon = recon_p[:B, :D_IN]
    mu = heads_p[:B, :D_Z]
    logvar = heads_p[:B, D_Z_P:D_Z_P + D_Z]
    return recon, mu, logvar


def init_params(key):
    """PyTorch nn.Linear-style init at the ORIGINAL sizes.
    Weights stored transposed: (in_features, out_features). Biases 1-D."""
    def linear(key, fan_in, fan_out):
        kw, kb = jax.random.split(key)
        bound = 1.0 / jnp.sqrt(fan_in)
        w = jax.random.uniform(kw, (fan_in, fan_out), jnp.float32, -bound, bound)
        b = jax.random.uniform(kb, (fan_out,), jnp.float32, -bound, bound)
        return w, b

    keys = jax.random.split(key, 5)
    ew1, eb1 = linear(keys[0], D_IN, D_H)    # encoder common
    wmu, bmu = linear(keys[1], D_H, D_Z)     # mu head
    wlv, blv = linear(keys[2], D_H, D_Z)     # logvar head
    dw1, db1 = linear(keys[3], D_Z, D_H)     # decoder layer 1
    dw2, db2 = linear(keys[4], D_H, D_IN)    # decoder layer 2
    return dict(ew1=ew1, eb1=eb1, wmu=wmu, bmu=bmu, wlv=wlv, blv=blv,
                dw1=dw1, db1=db1, dw2=dw2, db2=db2)


def prepare_params(p):
    """Zero-pad to lane-dense shapes, fuse the mu/logvar heads into one
    (512, 256) weight, and cast weights to bf16 (biases stay f32)."""
    def pad_w(w, rows, cols):
        out = jnp.zeros((rows, cols), jnp.bfloat16)
        return out.at[:w.shape[0], :w.shape[1]].set(w.astype(jnp.bfloat16))

    def pad_b(b, cols, offset=0):
        out = jnp.zeros((1, cols), jnp.float32)
        return out.at[0, offset:offset + b.shape[0]].set(b.astype(jnp.float32))

    ew1 = pad_w(p["ew1"], D_IN_P, D_H_P)
    eb1 = pad_b(p["eb1"], D_H_P)

    wh = jnp.zeros((D_H_P, D_HEAD_P), jnp.bfloat16)
    wh = wh.at[:D_H, :D_Z].set(p["wmu"].astype(jnp.bfloat16))
    wh = wh.at[:D_H, D_Z_P:D_Z_P + D_Z].set(p["wlv"].astype(jnp.bfloat16))
    bh = jnp.zeros((1, D_HEAD_P), jnp.float32)
    bh = bh.at[0, :D_Z].set(p["bmu"])
    bh = bh.at[0, D_Z_P:D_Z_P + D_Z].set(p["blv"])

    dw1 = pad_w(p["dw1"], D_Z_P, D_H_P)
    db1 = pad_b(p["db1"], D_H_P)
    dw2 = pad_w(p["dw2"], D_H_P, D_IN_P)
    db2 = pad_b(p["db2"], D_IN_P)
    return dict(ew1=ew1, eb1=eb1, wh=wh, bh=bh,
                dw1=dw1, db1=db1, dw2=dw2, db2=db2)


def _reference_forward(img, eps, p):
    """Plain-JAX reference mirroring the kernel's numerics
    (bf16 matmul inputs, f32 accumulation)."""
    def mm(a, w):
        return jnp.dot(a.astype(jnp.bfloat16).astype(jnp.float32),
                       w.astype(jnp.bfloat16).astype(jnp.float32),
                       precision=jax.lax.Precision.HIGHEST)

    B = img.shape[0]
    x = img.reshape(B, -1).astype(jnp.float32)
    h = jnp.maximum(mm(x, p["ew1"]) + p["eb1"], 0.0)
    mu = mm(h, p["wmu"]) + p["bmu"]
    lv = mm(h, p["wlv"]) + p["blv"]
    z = mu + eps * jnp.exp(0.5 * lv)
    h2 = jnp.maximum(mm(z, p["dw1"]) + p["db1"], 0.0)
    recon = jax.nn.sigmoid(mm(h2, p["dw2"]) + p["db2"])
    return recon, mu, lv


if __name__ == "__main__":
    key = jax.random.PRNGKey(0)
    k_param, k_img, k_eps = jax.random.split(key, 3)

    B = 8
    img = jax.random.uniform(k_img, (B, 1, 28, 28), jnp.float32)   # NCHW
    eps = jax.random.normal(k_eps, (B, D_Z), jnp.float32)          # randn_like(std)

    raw_params = init_params(k_param)
    kparams = prepare_params(raw_params)

    recon, mu, logvar = jax.block_until_ready(
        jax.jit(vae_forward)(img, eps, kparams))

    # Sanity check against a plain-JAX reference with matching numerics.
    r_ref, mu_ref, lv_ref = _reference_forward(img, eps, raw_params)
    assert recon.shape == (B, D_IN) and mu.shape == (B, D_Z) and logvar.shape == (B, D_Z)
    assert jnp.allclose(mu, mu_ref, atol=1e-3, rtol=1e-3)
    assert jnp.allclose(logvar, lv_ref, atol=1e-3, rtol=1e-3)
    assert jnp.allclose(recon, r_ref, atol=5e-3, rtol=0.0)   # approx reciprocal in sigmoid

    print("KERNEL_OK")
</pallas_src>

<mosaic_0001>
module attributes {stable_mosaic.version = 11 : i64} {
  func.func @_vae_kernel(%arg0: i32, %arg1: memref<8x896xbf16, #tpu.memory_space<vmem>>, %arg2: memref<8x128xf32, #tpu.memory_space<vmem>>, %arg3: memref<896x512xbf16, #tpu.memory_space<vmem>>, %arg4: memref<1x512xf32, #tpu.memory_space<vmem>>, %arg5: memref<512x256xbf16, #tpu.memory_space<vmem>>, %arg6: memref<1x256xf32, #tpu.memory_space<vmem>>, %arg7: memref<128x512xbf16, #tpu.memory_space<vmem>>, %arg8: memref<1x512xf32, #tpu.memory_space<vmem>>, %arg9: memref<512x896xbf16, #tpu.memory_space<vmem>>, %arg10: memref<1x896xf32, #tpu.memory_space<vmem>>, %arg11: memref<8x896xf32, #tpu.memory_space<vmem>>, %arg12: memref<8x256xf32, #tpu.memory_space<vmem>>) attributes {dimension_semantics = [#tpu.dimension_semantics<parallel>], iteration_bounds = array<i64: 1>, scalar_prefetch = 0 : i64, scratch_operands = 0 : i64, tpu.core_type = #tpu.core_type<tc>, window_params = [{transform_indices = @transform_0, window_bounds = array<i64: 8, 896>}, {transform_indices = @transform_1, window_bounds = array<i64: 8, 128>}, {pipeline_mode = #tpu.pipeline_mode<synchronous>, transform_indices = @transform_2, window_bounds = array<i64: 896, 512>}, {pipeline_mode = #tpu.pipeline_mode<synchronous>, transform_indices = @transform_3, window_bounds = array<i64: 1, 512>}, {pipeline_mode = #tpu.pipeline_mode<synchronous>, transform_indices = @transform_4, window_bounds = array<i64: 512, 256>}, {pipeline_mode = #tpu.pipeline_mode<synchronous>, transform_indices = @transform_5, window_bounds = array<i64: 1, 256>}, {pipeline_mode = #tpu.pipeline_mode<synchronous>, transform_indices = @transform_6, window_bounds = array<i64: 128, 512>}, {pipeline_mode = #tpu.pipeline_mode<synchronous>, transform_indices = @transform_7, window_bounds = array<i64: 1, 512>}, {pipeline_mode = #tpu.pipeline_mode<synchronous>, transform_indices = @transform_8, window_bounds = array<i64: 512, 896>}, {pipeline_mode = #tpu.pipeline_mode<synchronous>, transform_indices = @transform_9, window_bounds = array<i64: 1, 896>}, {transform_indices = @transform_10, window_bounds = array<i64: 8, 896>}, {transform_indices = @transform_11, window_bounds = array<i64: 8, 256>}]} {
    %c0 = arith.constant 0 : index
    %c0_0 = arith.constant 0 : index
    %0 = vector.load %arg1[%c0, %c0_0] : memref<8x896xbf16, #tpu.memory_space<vmem>>, vector<8x896xbf16>
    %c0_1 = arith.constant 0 : index
    %c0_2 = arith.constant 0 : index
    %1 = vector.load %arg3[%c0_1, %c0_2] : memref<896x512xbf16, #tpu.memory_space<vmem>>, vector<896x512xbf16>
    %cst = arith.constant dense<0.000000e+00> : vector<8x512xf32>
    %2 = tpu.matmul %0, %1, %cst {dimension_numbers = #tpu.dot_dimension_numbers<[1], [0], [0], [1], [0, 0, 1, 1], [], []>} : vector<8x896xbf16>, vector<896x512xbf16>, vector<8x512xf32> -> vector<8x512xf32>
    %c0_3 = arith.constant 0 : index
    %c0_4 = arith.constant 0 : index
    %3 = vector.load %arg4[%c0_3, %c0_4] : memref<1x512xf32, #tpu.memory_space<vmem>>, vector<1x512xf32>
    %4 = vector.broadcast %3 : vector<1x512xf32> to vector<8x512xf32>
    %5 = arith.addf %2, %4 : vector<8x512xf32>
    %cst_5 = arith.constant 0.000000e+00 : f32
    %6 = vector.broadcast %cst_5 : f32 to vector<8x512xf32>
    %7 = arith.maximumf %5, %6 : vector<8x512xf32>
    %8 = arith.truncf %7 : vector<8x512xf32> to vector<8x512xbf16>
    %c0_6 = arith.constant 0 : index
    %c0_7 = arith.constant 0 : index
    %9 = vector.load %arg5[%c0_6, %c0_7] : memref<512x256xbf16, #tpu.memory_space<vmem>>, vector<512x256xbf16>
    %cst_8 = arith.constant dense<0.000000e+00> : vector<8x256xf32>
    %10 = tpu.matmul %8, %9, %cst_8 {dimension_numbers = #tpu.dot_dimension_numbers<[1], [0], [0], [1], [0, 0, 1, 1], [], []>} : vector<8x512xbf16>, vector<512x256xbf16>, vector<8x256xf32> -> vector<8x256xf32>
    %c0_9 = arith.constant 0 : index
    %c0_10 = arith.constant 0 : index
    %11 = vector.load %arg6[%c0_9, %c0_10] : memref<1x256xf32, #tpu.memory_space<vmem>>, vector<1x256xf32>
    %12 = vector.broadcast %11 : vector<1x256xf32> to vector<8x256xf32>
    %13 = arith.addf %10, %12 : vector<8x256xf32>
    %14 = vector.extract_strided_slice %13 {offsets = [0, 0], sizes = [8, 128], strides = [1, 1]} : vector<8x256xf32> to vector<8x128xf32>
    %15 = vector.extract_strided_slice %13 {offsets = [0, 128], sizes = [8, 128], strides = [1, 1]} : vector<8x256xf32> to vector<8x128xf32>
    %c0_11 = arith.constant 0 : index
    %c0_12 = arith.constant 0 : index
    %16 = vector.load %arg2[%c0_11, %c0_12] : memref<8x128xf32, #tpu.memory_space<vmem>>, vector<8x128xf32>
    %cst_13 = arith.constant 5.000000e-01 : f32
    %17 = vector.broadcast %cst_13 : f32 to vector<8x128xf32>
    %18 = arith.mulf %17, %15 : vector<8x128xf32>
    %19 = math.exp %18 : vector<8x128xf32>
    %20 = arith.mulf %16, %19 : vector<8x128xf32>
    %21 = arith.addf %14, %20 : vector<8x128xf32>
    %22 = arith.truncf %21 : vector<8x128xf32> to vector<8x128xbf16>
    %c0_14 = arith.constant 0 : index
    %c0_15 = arith.constant 0 : index
    %23 = vector.load %arg7[%c0_14, %c0_15] : memref<128x512xbf16, #tpu.memory_space<vmem>>, vector<128x512xbf16>
    %cst_16 = arith.constant dense<0.000000e+00> : vector<8x512xf32>
    %24 = tpu.matmul %22, %23, %cst_16 {dimension_numbers = #tpu.dot_dimension_numbers<[1], [0], [0], [1], [0, 0, 1, 1], [], []>} : vector<8x128xbf16>, vector<128x512xbf16>, vector<8x512xf32> -> vector<8x512xf32>
    %c0_17 = arith.constant 0 : index
    %c0_18 = arith.constant 0 : index
    %25 = vector.load %arg8[%c0_17, %c0_18] : memref<1x512xf32, #tpu.memory_space<vmem>>, vector<1x512xf32>
    %26 = vector.broadcast %25 : vector<1x512xf32> to vector<8x512xf32>
    %27 = arith.addf %24, %26 : vector<8x512xf32>
    %cst_19 = arith.constant 0.000000e+00 : f32
    %28 = vector.broadcast %cst_19 : f32 to vector<8x512xf32>
    %29 = arith.maximumf %27, %28 : vector<8x512xf32>
    %30 = arith.truncf %29 : vector<8x512xf32> to vector<8x512xbf16>
    %c0_20 = arith.constant 0 : index
    %c0_21 = arith.constant 0 : index
    %31 = vector.load %arg9[%c0_20, %c0_21] : memref<512x896xbf16, #tpu.memory_space<vmem>>, vector<512x896xbf16>
    %cst_22 = arith.constant dense<0.000000e+00> : vector<8x896xf32>
    %32 = tpu.matmul %30, %31, %cst_22 {dimension_numbers = #tpu.dot_dimension_numbers<[1], [0], [0], [1], [0, 0, 1, 1], [], []>} : vector<8x512xbf16>, vector<512x896xbf16>, vector<8x896xf32> -> vector<8x896xf32>
    %c0_23 = arith.constant 0 : index
    %c0_24 = arith.constant 0 : index
    %33 = vector.load %arg10[%c0_23, %c0_24] : memref<1x896xf32, #tpu.memory_space<vmem>>, vector<1x896xf32>
    %34 = vector.broadcast %33 : vector<1x896xf32> to vector<8x896xf32>
    %35 = arith.addf %32, %34 : vector<8x896xf32>
    %cst_25 = arith.constant 0.000000e+00 : f32
    %36 = vector.broadcast %cst_25 : f32 to vector<8x896xf32>
    %37 = arith.subf %36, %35 : vector<8x896xf32>
    %38 = math.exp %37 : vector<8x896xf32>
    %cst_26 = arith.constant 1.000000e+00 : f32
    %39 = vector.broadcast %cst_26 : f32 to vector<8x896xf32>
    %40 = arith.addf %39, %38 : vector<8x896xf32>
    %41 = tpu.reciprocal %40 {approx = true} : vector<8x896xf32> -> vector<8x896xf32>
    %c0_27 = arith.constant 0 : index
    %c0_28 = arith.constant 0 : index
    %42 = vector.load %arg11[%c0_27, %c0_28] : memref<8x896xf32, #tpu.memory_space<vmem>>, vector<8x896xf32>
    tpu.vector_store %arg11[%c0_27, %c0_28], %41 {strides = array<i32>} : memref<8x896xf32, #tpu.memory_space<vmem>>, vector<8x896xf32>,
    %c0_29 = arith.constant 0 : index
    %c0_30 = arith.constant 0 : index
    %43 = vector.load %arg12[%c0_29, %c0_30] : memref<8x256xf32, #tpu.memory_space<vmem>>, vector<8x256xf32>
    tpu.vector_store %arg12[%c0_29, %c0_30], %13 {strides = array<i32>} : memref<8x256xf32, #tpu.memory_space<vmem>>, vector<8x256xf32>,
    return
  }
  func.func @transform_0(%arg0: i32) -> (i32, i32) {
    %c0_i32 = arith.constant 0 : i32
    %c0_i32_0 = arith.constant 0 : i32
    return %arg0, %c0_i32 : i32, i32
  }
  func.func @transform_1(%arg0: i32) -> (i32, i32) {
    %c0_i32 = arith.constant 0 : i32
    %c0_i32_0 = arith.constant 0 : i32
    return %arg0, %c0_i32 : i32, i32
  }
  func.func @transform_2(%arg0: i32) -> (i32, i32) {
    %c0_i32 = arith.constant 0 : i32
    %c0_i32_0 = arith.constant 0 : i32
    %c0_i32_1 = arith.constant 0 : i32
    return %c0_i32, %c0_i32_0 : i32, i32
  }
  func.func @transform_3(%arg0: i32) -> (i32, i32) {
    %c0_i32 = arith.constant 0 : i32
    %c0_i32_0 = arith.constant 0 : i32
    %c0_i32_1 = arith.constant 0 : i32
    return %c0_i32, %c0_i32_0 : i32, i32
  }
  func.func @transform_4(%arg0: i32) -> (i32, i32) {
    %c0_i32 = arith.constant 0 : i32
    %c0_i32_0 = arith.constant 0 : i32
    %c0_i32_1 = arith.constant 0 : i32
    return %c0_i32, %c0_i32_0 : i32, i32
  }
  func.func @transform_5(%arg0: i32) -> (i32, i32) {
    %c0_i32 = arith.constant 0 : i32
    %c0_i32_0 = arith.constant 0 : i32
    %c0_i32_1 = arith.constant 0 : i32
    return %c0_i32, %c0_i32_0 : i32, i32
  }
  func.func @transform_6(%arg0: i32) -> (i32, i32) {
    %c0_i32 = arith.constant 0 : i32
    %c0_i32_0 = arith.constant 0 : i32
    %c0_i32_1 = arith.constant 0 : i32
    return %c0_i32, %c0_i32_0 : i32, i32
  }
  func.func @transform_7(%arg0: i32) -> (i32, i32) {
    %c0_i32 = arith.constant 0 : i32
    %c0_i32_0 = arith.constant 0 : i32
    %c0_i32_1 = arith.constant 0 : i32
    return %c0_i32, %c0_i32_0 : i32, i32
  }
  func.func @transform_8(%arg0: i32) -> (i32, i32) {
    %c0_i32 = arith.constant 0 : i32
    %c0_i32_0 = arith.constant 0 : i32
    %c0_i32_1 = arith.constant 0 : i32
    return %c0_i32, %c0_i32_0 : i32, i32
  }
  func.func @transform_9(%arg0: i32) -> (i32, i32) {
    %c0_i32 = arith.constant 0 : i32
    %c0_i32_0 = arith.constant 0 : i32
    %c0_i32_1 = arith.constant 0 : i32
    return %c0_i32, %c0_i32_0 : i32, i32
  }
  func.func @transform_10(%arg0: i32) -> (i32, i32) {
    %c0_i32 = arith.constant 0 : i32
    %c0_i32_0 = arith.constant 0 : i32
    return %arg0, %c0_i32 : i32, i32
  }
  func.func @transform_11(%arg0: i32) -> (i32, i32) {
    %c0_i32 = arith.constant 0 : i32
    %c0_i32_0 = arith.constant 0 : i32
    return %arg0, %c0_i32 : i32, i32
  }
}

</mosaic_0001>

<llo_original>
// kernel: vae_forward.1
$region0: #{vae_forward.1}
  #allocation0 [shape = 'u32[]', space=smem, size = 0x4, offset = 0x4, fixed_abs, tag = 'smem constant byte address 0x4 - core index']
  #allocation1 [shape = 'u32[72,128]{1,0:T(1,128)}', space=vmem, size = 0x9000, scoped, tag = 'internal scratch']
  %s0 = inlined_call_operand.vmem [shape: bf16[8,896], index: 0, kind: input, shape index: {}]
  %s1 = inlined_call_operand.vmem [shape: f32[8,128], index: 1, kind: input, shape index: {}]
  %s2 = inlined_call_operand.hbm [shape: bf16[896,512], index: 2, kind: input, shape index: {}]
  %s3 = inlined_call_operand.vmem [shape: f32[1,512], index: 3, kind: input, shape index: {}]
  %s4 = inlined_call_operand.vmem [shape: bf16[512,256], index: 4, kind: input, shape index: {}]
  %s5 = inlined_call_operand.vmem [shape: f32[1,256], index: 5, kind: input, shape index: {}]
  %s6 = inlined_call_operand.hbm [shape: bf16[128,512], index: 6, kind: input, shape index: {}]
  %s7 = inlined_call_operand.vmem [shape: f32[1,512], index: 7, kind: input, shape index: {}]
  %s8 = inlined_call_operand.hbm [shape: bf16[512,896], index: 8, kind: input, shape index: {}]
  %s9 = inlined_call_operand.vmem [shape: f32[1,896], index: 9, kind: input, shape index: {}]
  %s10 = inlined_call_operand.hbm [shape: f32[8,896], index: 10, kind: output, shape index: {0}]
  %s11 = inlined_call_operand.vmem [shape: f32[8,256], index: 11, kind: output, shape index: {1}]
  %12 = xla_tuple %s10, %s11
  %s13 = sld [smem:[#allocation0]]
  $region70: #{vae_forward.1} parent=0
    _
  %s15 = ssub.s32 1, %s13
  %s16 = scalar_select 0, %s15, %s13
  $region1: #{vae_forward.1} parent=0
    #allocation2 [shape = 'u8[917504]{0}', space=vmem, size = 0xe0000, scoped, tag = 'input window, operand 2, single buffered']
    #allocation3 [shape = 's32[1]{0}', space=sflag, size = 0x4, scoped, tag = 'scoped memory for vae_forward.1']
    #allocation4 [shape = 's32[1]{0}', space=sflag, size = 0x4, scoped, tag = 'scoped memory for vae_forward.1']
    #allocation5 [shape = 'u8[131072]{0}', space=vmem, size = 0x20000, scoped, tag = 'input window, operand 6, single buffered']
    #allocation6 [shape = 's32[1]{0}', space=sflag, size = 0x4, scoped, tag = 'scoped memory for vae_forward.1']
    #allocation7 [shape = 'u8[917504]{0}', space=vmem, size = 0xe0000, scoped, tag = 'input window, operand 8, single buffered']
    #allocation8 [shape = 'u8[28672]{0}', space=vmem, size = 0x7000, scoped, tag = 'output window, operand 0, single buffered']
    %17 = vsyncpa [#allocation3], 0
    %18 = vsyncpa [#allocation6], 0
    %19 = vsyncpa [#allocation4], 0
    // Predicated region
    $region2: #{vae_forward.1} parent=1 // pred_check
      _
    $region3: #{vae_forward.1} parent=1 // pred_check_branch
      %21 = sbr.rel (0) target = $region5
    $region4: #{vae_forward.1} parent=1 // pred_region
      _
    $region5: #{vae_forward.1} parent=1 // pred_fallthru
      _
    // Predicated region
    $region6: #{vae_forward.1} parent=1 // pred_check
      _
    $region7: #{vae_forward.1} parent=1 // pred_check_branch
      %23 = sbr.rel (0) target = $region9
    $region8: #{vae_forward.1} parent=1 // pred_region
      _
    $region9: #{vae_forward.1} parent=1 // pred_fallthru
      _
    // Predicated region
    $region10: #{vae_forward.1} parent=1 // pred_check
      _
    $region11: #{vae_forward.1} parent=1 // pred_check_branch
      %25 = sbr.rel (0) target = $region13
    $region12: #{vae_forward.1} parent=1 // pred_region
      %27 = vsyncadd [#allocation3], 0
      %s28 = sshll.u32 %s2, 4
      %s29 = int_to_ptr.hbm [resolvable:$true] %s28
      %s30 = sshll.u32 [#allocation2], 4
      %s31 = int_to_ptr.vmem [resolvable:$true] %s30
      %36 = dma.hbm_to_vmem [thread:$0]  %s29, 28672, %s31, [#allocation3], 256, 256, 16
    $region13: #{vae_forward.1} parent=1 // pred_fallthru
      _
    // Predicated region
    $region14: #{vae_forward.1} parent=1 // pred_check
      _
    $region15: #{vae_forward.1} parent=1 // pred_check_branch
      %38 = sbr.rel (0) target = $region17
    $region16: #{vae_forward.1} parent=1 // pred_region
      _
    $region17: #{vae_forward.1} parent=1 // pred_fallthru
      _
    // Predicated region
    $region18: #{vae_forward.1} parent=1 // pred_check
      _
    $region19: #{vae_forward.1} parent=1 // pred_check_branch
      %40 = sbr.rel (0) target = $region21
    $region20: #{vae_forward.1} parent=1 // pred_region
      _
    $region21: #{vae_forward.1} parent=1 // pred_fallthru
      _
    // Predicated region
    $region22: #{vae_forward.1} parent=1 // pred_check
      _
    $region23: #{vae_forward.1} parent=1 // pred_check_branch
      %42 = sbr.rel (0) target = $region25
    $region24: #{vae_forward.1} parent=1 // pred_region
      _
    $region25: #{vae_forward.1} parent=1 // pred_fallthru
      _
    // Predicated region
    $region26: #{vae_forward.1} parent=1 // pred_check
      _
    $region27: #{vae_forward.1} parent=1 // pred_check_branch
      %44 = sbr.rel (0) target = $region29
    $region28: #{vae_forward.1} parent=1 // pred_region
      %46 = vsyncadd [#allocation6], 0
      %s47 = sshll.u32 %s6, 4
      %s48 = int_to_ptr.hbm [resolvable:$true] %s47
      %s49 = sshll.u32 [#allocation5], 4
      %s50 = int_to_ptr.vmem [resolvable:$true] %s49
      %55 = dma.hbm_to_vmem [thread:$0]  %s48, 4096, %s50, [#allocation6], 256, 256, 16
    $region29: #{vae_forward.1} parent=1 // pred_fallthru
      _
    // Predicated region
    $region30: #{vae_forward.1} parent=1 // pred_check
      _
    $region31: #{vae_forward.1} parent=1 // pred_check_branch
      %57 = sbr.rel (0) target = $region33
    $region32: #{vae_forward.1} parent=1 // pred_region
      _
    $region33: #{vae_forward.1} parent=1 // pred_fallthru
      _
    // Predicated region
    $region34: #{vae_forward.1} parent=1 // pred_check
      _
    $region35: #{vae_forward.1} parent=1 // pred_check_branch
      %59 = sbr.rel (0) target = $region37
    $region36: #{vae_forward.1} parent=1 // pred_region
      %61 = vsyncadd [#allocation6], 0
      %s62 = sshll.u32 %s8, 4
      %s63 = int_to_ptr.hbm [resolvable:$true] %s62
      %s64 = sshll.u32 [#allocation7], 4
      %s65 = int_to_ptr.vmem [resolvable:$true] %s64
      %70 = dma.hbm_to_vmem [thread:$0]  %s63, 28672, %s65, [#allocation6], 448, 448, 28
    $region37: #{vae_forward.1} parent=1 // pred_fallthru
      _
    // Predicated region
    $region38: #{vae_forward.1} parent=1 // pred_check
      _
    $region39: #{vae_forward.1} parent=1 // pred_check_branch
      %72 = sbr.rel (0) target = $region41
    $region40: #{vae_forward.1} parent=1 // pred_region
      _
    $region41: #{vae_forward.1} parent=1 // pred_fallthru
      _
    // Predicated region
    $region42: #{vae_forward.1} parent=1 // pred_check
      _
    $region43: #{vae_forward.1} parent=1 // pred_check_branch
      %74 = sbr.rel (0) target = $region45
    $region44: #{vae_forward.1} parent=1 // pred_region
      %76 = dma.done [#allocation3], 28672
    $region45: #{vae_forward.1} parent=1 // pred_fallthru
      _
    // Predicated region
    $region46: #{vae_forward.1} parent=1 // pred_check
      _
    $region47: #{vae_forward.1} parent=1 // pred_check_branch
      %78 = sbr.rel (0) target = $region49
    $region48: #{vae_forward.1} parent=1 // pred_region
      %80 = dma.done [#allocation6], 4096
    $region49: #{vae_forward.1} parent=1 // pred_fallthru
      _
    // Predicated region
    $region50: #{vae_forward.1} parent=1 // pred_check
      _
    $region51: #{vae_forward.1} parent=1 // pred_check_branch
      %82 = sbr.rel (0) target = $region53
    $region52: #{vae_forward.1} parent=1 // pred_region
      %84 = dma.done [#allocation6], 28672
    $region53: #{vae_forward.1} parent=1 // pred_fallthru
      _
    %v85 = vld [vmem:[%s0] sm:$0xff]
    %v86 = vld [vmem:[%s0 + $0x8] sm:$0xff]
    %v87 = vld [vmem:[%s0 + $0x10] sm:$0xff]
    %v88 = vld [vmem:[%s0 + $0x18] sm:$0xf]
    %v89 = vld [vmem:[#allocation2] sm:$0xff]
    %v90 = vld [vmem:[#allocation2 + $0x8] sm:$0xff]
    %v91 = vld [vmem:[#allocation2 + $0x10] sm:$0xff]
    %v92 = vld [vmem:[#allocation2 + $0x18] sm:$0xff]
    %v93 = vld [vmem:[#allocation2 + $0x20] sm:$0xff]
    %v94 = vld [vmem:[#allocation2 + $0x28] sm:$0xff]
    %v95 = vld [vmem:[#allocation2 + $0x30] sm:$0xff]
    %v96 = vld [vmem:[#allocation2 + $0x38] sm:$0xff]
    %v97 = vld [vmem:[#allocation2 + $0x40] sm:$0xff]
    %v98 = vld [vmem:[#allocation2 + $0x48] sm:$0xff]
    %v99 = vld [vmem:[#allocation2 + $0x50] sm:$0xff]
    %v100 = vld [vmem:[#allocation2 + $0x58] sm:$0xff]
    %v101 = vld [vmem:[#allocation2 + $0x60] sm:$0xff]
    %v102 = vld [vmem:[#allocation2 + $0x68] sm:$0xff]
    %v103 = vld [vmem:[#allocation2 + $0x70] sm:$0xff]
    %v104 = vld [vmem:[#allocation2 + $0x78] sm:$0xff]
    %v105 = vld [vmem:[#allocation2 + $0x80] sm:$0xff]
    %v106 = vld [vmem:[#allocation2 + $0x88] sm:$0xff]
    %v107 = vld [vmem:[#allocation2 + $0x90] sm:$0xff]
    %v108 = vld [vmem:[#allocation2 + $0x98] sm:$0xff]
    %v109 = vld [vmem:[#allocation2 + $0xa0] sm:$0xff]
    %v110 = vld [vmem:[#allocation2 + $0xa8] sm:$0xff]
    %v111 = vld [vmem:[#allocation2 + $0xb0] sm:$0xff]
    %v112 = vld [vmem:[#allocation2 + $0xb8] sm:$0xff]
    %v113 = vld [vmem:[#allocation2 + $0xc0] sm:$0xff]
    %v114 = vld [vmem:[#allocation2 + $0xc8] sm:$0xff]
    %v115 = vld [vmem:[#allocation2 + $0xd0] sm:$0xff]
    %v116 = vld [vmem:[#allocation2 + $0xd8] sm:$0xff]
    %v117 = vld [vmem:[#allocation2 + $0xe0] sm:$0xff]
    %v118 = vld [vmem:[#allocation2 + $0xe8] sm:$0xff]
    %v119 = vld [vmem:[#allocation2 + $0xf0] sm:$0xff]
    %v120 = vld [vmem:[#allocation2 + $0xf8] sm:$0xff]
    %v121 = vld [vmem:[#allocation2 + $0x100] sm:$0xff]
    %v122 = vld [vmem:[#allocation2 + $0x108] sm:$0xff]
    %v123 = vld [vmem:[#allocation2 + $0x110] sm:$0xff]
    %v124 = vld [vmem:[#allocation2 + $0x118] sm:$0xff]
    %v125 = vld [vmem:[#allocation2 + $0x120] sm:$0xff]
    %v126 = vld [vmem:[#allocation2 + $0x128] sm:$0xff]
    %v127 = vld [vmem:[#allocation2 + $0x130] sm:$0xff]
    %v128 = vld [vmem:[#allocation2 + $0x138] sm:$0xff]
    %v129 = vld [vmem:[#allocation2 + $0x140] sm:$0xff]
    %v130 = vld [vmem:[#allocation2 + $0x148] sm:$0xff]
    %v131 = vld [vmem:[#allocation2 + $0x150] sm:$0xff]
    %v132 = vld [vmem:[#allocation2 + $0x158] sm:$0xff]
    %v133 = vld [vmem:[#allocation2 + $0x160] sm:$0xff]
    %v134 = vld [vmem:[#allocation2 + $0x168] sm:$0xff]
    %v135 = vld [vmem:[#allocation2 + $0x170] sm:$0xff]
    %v136 = vld [vmem:[#allocation2 + $0x178] sm:$0xff]
    %v137 = vld [vmem:[#allocation2 + $0x180] sm:$0xff]
    %v138 = vld [vmem:[#allocation2 + $0x188] sm:$0xff]
    %v139 = vld [vmem:[#allocation2 + $0x190] sm:$0xff]
    %v140 = vld [vmem:[#allocation2 + $0x198] sm:$0xff]
    %v141 = vld [vmem:[#allocation2 + $0x1a0] sm:$0xff]
    %v142 = vld [vmem:[#allocation2 + $0x1a8] sm:$0xff]
    %v143 = vld [vmem:[#allocation2 + $0x1b0] sm:$0xff]
    %v144 = vld [vmem:[#allocation2 + $0x1b8] sm:$0xff]
    %v145 = vld [vmem:[#allocation2 + $0x1c0] sm:$0xff]
    %v146 = vld [vmem:[#allocation2 + $0x1c8] sm:$0xff]
    %v147 = vld [vmem:[#allocation2 + $0x1d0] sm:$0xff]
    %v148 = vld [vmem:[#allocation2 + $0x1d8] sm:$0xff]
    %v149 = vld [vmem:[#allocation2 + $0x1e0] sm:$0xff]
    %v150 = vld [vmem:[#allocation2 + $0x1e8] sm:$0xff]
    %v151 = vld [vmem:[#allocation2 + $0x1f0] sm:$0xff]
    %v152 = vld [vmem:[#allocation2 + $0x1f8] sm:$0xff]
    %v153 = vld [vmem:[#allocation2 + $0x200] sm:$0xff]
    %v154 = vld [vmem:[#allocation2 + $0x208] sm:$0xff]
    %v155 = vld [vmem:[#allocation2 + $0x210] sm:$0xff]
    %v156 = vld [vmem:[#allocation2 + $0x218] sm:$0xff]
    %v157 = vld [vmem:[#allocation2 + $0x220] sm:$0xff]
    %v158 = vld [vmem:[#allocation2 + $0x228] sm:$0xff]
    %v159 = vld [vmem:[#allocation2 + $0x230] sm:$0xff]
    %v160 = vld [vmem:[#allocation2 + $0x238] sm:$0xff]
    %v161 = vld [vmem:[#allocation2 + $0x240] sm:$0xff]
    %v162 = vld [vmem:[#allocation2 + $0x248] sm:$0xff]
    %v163 = vld [vmem:[#allocation2 + $0x250] sm:$0xff]
    %v164 = vld [vmem:[#allocation2 + $0x258] sm:$0xff]
    %v165 = vld [vmem:[#allocation2 + $0x260] sm:$0xff]
    %v166 = vld [vmem:[#allocation2 + $0x268] sm:$0xff]
    %v167 = vld [vmem:[#allocation2 + $0x270] sm:$0xff]
    %v168 = vld [vmem:[#allocation2 + $0x278] sm:$0xff]
    %v169 = vld [vmem:[#allocation2 + $0x280] sm:$0xff]
    %v170 = vld [vmem:[#allocation2 + $0x288] sm:$0xff]
    %v171 = vld [vmem:[#allocation2 + $0x290] sm:$0xff]
    %v172 = vld [vmem:[#allocation2 + $0x298] sm:$0xff]
    %v173 = vld [vmem:[#allocation2 + $0x2a0] sm:$0xff]
    %v174 = vld [vmem:[#allocation2 + $0x2a8] sm:$0xff]
    %v175 = vld [vmem:[#allocation2 + $0x2b0] sm:$0xff]
    %v176 = vld [vmem:[#allocation2 + $0x2b8] sm:$0xff]
    %v177 = vld [vmem:[#allocation2 + $0x2c0] sm:$0xff]
    %v178 = vld [vmem:[#allocation2 + $0x2c8] sm:$0xff]
    %v179 = vld [vmem:[#allocation2 + $0x2d0] sm:$0xff]
    %v180 = vld [vmem:[#allocation2 + $0x2d8] sm:$0xff]
    %v181 = vld [vmem:[#allocation2 + $0x2e0] sm:$0xff]
    %v182 = vld [vmem:[#allocation2 + $0x2e8] sm:$0xff]
    %v183 = vld [vmem:[#allocation2 + $0x2f0] sm:$0xff]
    %v184 = vld [vmem:[#allocation2 + $0x2f8] sm:$0xff]
    %v185 = vld [vmem:[#allocation2 + $0x300] sm:$0xff]
    %v186 = vld [vmem:[#allocation2 + $0x308] sm:$0xff]
    %v187 = vld [vmem:[#allocation2 + $0x310] sm:$0xff]
    %v188 = vld [vmem:[#allocation2 + $0x318] sm:$0xff]
    %v189 = vld [vmem:[#allocation2 + $0x320] sm:$0xff]
    %v190 = vld [vmem:[#allocation2 + $0x328] sm:$0xff]
    %v191 = vld [vmem:[#allocation2 + $0x330] sm:$0xff]
    %v192 = vld [vmem:[#allocation2 + $0x338] sm:$0xff]
    %v193 = vld [vmem:[#allocation2 + $0x340] sm:$0xff]
    %v194 = vld [vmem:[#allocation2 + $0x348] sm:$0xff]
    %v195 = vld [vmem:[#allocation2 + $0x350] sm:$0xff]
    %v196 = vld [vmem:[#allocation2 + $0x358] sm:$0xff]
    %v197 = vld [vmem:[#allocation2 + $0x360] sm:$0xff]
    %v198 = vld [vmem:[#allocation2 + $0x368] sm:$0xff]
    %v199 = vld [vmem:[#allocation2 + $0x370] sm:$0xff]
    %v200 = vld [vmem:[#allocation2 + $0x378] sm:$0xff]
    %v201 = vld [vmem:[#allocation2 + $0x380] sm:$0xff]
    %v202 = vld [vmem:[#allocation2 + $0x388] sm:$0xff]
    %v203 = vld [vmem:[#allocation2 + $0x390] sm:$0xff]
    %v204 = vld [vmem:[#allocation2 + $0x398] sm:$0xff]
    %v205 = vld [vmem:[#allocation2 + $0x3a0] sm:$0xff]
    %v206 = vld [vmem:[#allocation2 + $0x3a8] sm:$0xff]
    %v207 = vld [vmem:[#allocation2 + $0x3b0] sm:$0xff]
    %v208 = vld [vmem:[#allocation2 + $0x3b8] sm:$0xff]
    %v209 = vld [vmem:[#allocation2 + $0x3c0] sm:$0xff]
    %v210 = vld [vmem:[#allocation2 + $0x3c8] sm:$0xff]
    %v211 = vld [vmem:[#allocation2 + $0x3d0] sm:$0xff]
    %v212 = vld [vmem:[#allocation2 + $0x3d8] sm:$0xff]
    %v213 = vld [vmem:[#allocation2 + $0x3e0] sm:$0xff]
    %v214 = vld [vmem:[#allocation2 + $0x3e8] sm:$0xff]
    %v215 = vld [vmem:[#allocation2 + $0x3f0] sm:$0xff]
    %v216 = vld [vmem:[#allocation2 + $0x3f8] sm:$0xff]
    %v217 = vld [vmem:[#allocation2 + $0x400] sm:$0xff]
    %v218 = vld [vmem:[#allocation2 + $0x408] sm:$0xff]
    %v219 = vld [vmem:[#allocation2 + $0x410] sm:$0xff]
    %v220 = vld [vmem:[#allocation2 + $0x418] sm:$0xff]
    %v221 = vld [vmem:[#allocation2 + $0x420] sm:$0xff]
    %v222 = vld [vmem:[#allocation2 + $0x428] sm:$0xff]
    %v223 = vld [vmem:[#allocation2 + $0x430] sm:$0xff]
    %v224 = vld [vmem:[#allocation2 + $0x438] sm:$0xff]
    %v225 = vld [vmem:[#allocation2 + $0x440] sm:$0xff]
    %v226 = vld [vmem:[#allocation2 + $0x448] sm:$0xff]
    %v227 = vld [vmem:[#allocation2 + $0x450] sm:$0xff]
    %v228 = vld [vmem:[#allocation2 + $0x458] sm:$0xff]
    %v229 = vld [vmem:[#allocation2 + $0x460] sm:$0xff]
    %v230 = vld [vmem:[#allocation2 + $0x468] sm:$0xff]
    %v231 = vld [vmem:[#allocation2 + $0x470] sm:$0xff]
    %v232 = vld [vmem:[#allocation2 + $0x478] sm:$0xff]
    %v233 = vld [vmem:[#allocation2 + $0x480] sm:$0xff]
    %v234 = vld [vmem:[#allocation2 + $0x488] sm:$0xff]
    %v235 = vld [vmem:[#allocation2 + $0x490] sm:$0xff]
    %v236 = vld [vmem:[#allocation2 + $0x498] sm:$0xff]
    %v237 = vld [vmem:[#allocation2 + $0x4a0] sm:$0xff]
    %v238 = vld [vmem:[#allocation2 + $0x4a8] sm:$0xff]
    %v239 = vld [vmem:[#allocation2 + $0x4b0] sm:$0xff]
    %v240 = vld [vmem:[#allocation2 + $0x4b8] sm:$0xff]
    %v241 = vld [vmem:[#allocation2 + $0x4c0] sm:$0xff]
    %v242 = vld [vmem:[#allocation2 + $0x4c8] sm:$0xff]
    %v243 = vld [vmem:[#allocation2 + $0x4d0] sm:$0xff]
    %v244 = vld [vmem:[#allocation2 + $0x4d8] sm:$0xff]
    %v245 = vld [vmem:[#allocation2 + $0x4e0] sm:$0xff]
    %v246 = vld [vmem:[#allocation2 + $0x4e8] sm:$0xff]
    %v247 = vld [vmem:[#allocation2 + $0x4f0] sm:$0xff]
    %v248 = vld [vmem:[#allocation2 + $0x4f8] sm:$0xff]
    %v249 = vld [vmem:[#allocation2 + $0x500] sm:$0xff]
    %v250 = vld [vmem:[#allocation2 + $0x508] sm:$0xff]
    %v251 = vld [vmem:[#allocation2 + $0x510] sm:$0xff]
    %v252 = vld [vmem:[#allocation2 + $0x518] sm:$0xff]
    %v253 = vld [vmem:[#allocation2 + $0x520] sm:$0xff]
    %v254 = vld [vmem:[#allocation2 + $0x528] sm:$0xff]
    %v255 = vld [vmem:[#allocation2 + $0x530] sm:$0xff]
    %v256 = vld [vmem:[#allocation2 + $0x538] sm:$0xff]
    %v257 = vld [vmem:[#allocation2 + $0x540] sm:$0xff]
    %v258 = vld [vmem:[#allocation2 + $0x548] sm:$0xff]
    %v259 = vld [vmem:[#allocation2 + $0x550] sm:$0xff]
    %v260 = vld [vmem:[#allocation2 + $0x558] sm:$0xff]
    %v261 = vld [vmem:[#allocation2 + $0x560] sm:$0xff]
    %v262 = vld [vmem:[#allocation2 + $0x568] sm:$0xff]
    %v263 = vld [vmem:[#allocation2 + $0x570] sm:$0xff]
    %v264 = vld [vmem:[#allocation2 + $0x578] sm:$0xff]
    %v265 = vld [vmem:[#allocation2 + $0x580] sm:$0xff]
    %v266 = vld [vmem:[#allocation2 + $0x588] sm:$0xff]
    %v267 = vld [vmem:[#allocation2 + $0x590] sm:$0xff]
    %v268 = vld [vmem:[#allocation2 + $0x598] sm:$0xff]
    %v269 = vld [vmem:[#allocation2 + $0x5a0] sm:$0xff]
    %v270 = vld [vmem:[#allocation2 + $0x5a8] sm:$0xff]
    %v271 = vld [vmem:[#allocation2 + $0x5b0] sm:$0xff]
    %v272 = vld [vmem:[#allocation2 + $0x5b8] sm:$0xff]
    %v273 = vld [vmem:[#allocation2 + $0x5c0] sm:$0xff]
    %v274 = vld [vmem:[#allocation2 + $0x5c8] sm:$0xff]
    %v275 = vld [vmem:[#allocation2 + $0x5d0] sm:$0xff]
    %v276 = vld [vmem:[#allocation2 + $0x5d8] sm:$0xff]
    %v277 = vld [vmem:[#allocation2 + $0x5e0] sm:$0xff]
    %v278 = vld [vmem:[#allocation2 + $0x5e8] sm:$0xff]
    %v279 = vld [vmem:[#allocation2 + $0x5f0] sm:$0xff]
    %v280 = vld [vmem:[#allocation2 + $0x5f8] sm:$0xff]
    %v281 = vld [vmem:[#allocation2 + $0x600] sm:$0xff]
    %v282 = vld [vmem:[#allocation2 + $0x608] sm:$0xff]
    %v283 = vld [vmem:[#allocation2 + $0x610] sm:$0xff]
    %v284 = vld [vmem:[#allocation2 + $0x618] sm:$0xff]
    %v285 = vld [vmem:[#allocation2 + $0x620] sm:$0xff]
    %v286 = vld [vmem:[#allocation2 + $0x628] sm:$0xff]
    %v287 = vld [vmem:[#allocation2 + $0x630] sm:$0xff]
    %v288 = vld [vmem:[#allocation2 + $0x638] sm:$0xff]
    %v289 = vld [vmem:[#allocation2 + $0x640] sm:$0xff]
    %v290 = vld [vmem:[#allocation2 + $0x648] sm:$0xff]
    %v291 = vld [vmem:[#allocation2 + $0x650] sm:$0xff]
    %v292 = vld [vmem:[#allocation2 + $0x658] sm:$0xff]
    %v293 = vld [vmem:[#allocation2 + $0x660] sm:$0xff]
    %v294 = vld [vmem:[#allocation2 + $0x668] sm:$0xff]
    %v295 = vld [vmem:[#allocation2 + $0x670] sm:$0xff]
    %v296 = vld [vmem:[#allocation2 + $0x678] sm:$0xff]
    %v297 = vld [vmem:[#allocation2 + $0x680] sm:$0xff]
    %v298 = vld [vmem:[#allocation2 + $0x688] sm:$0xff]
    %v299 = vld [vmem:[#allocation2 + $0x690] sm:$0xff]
    %v300 = vld [vmem:[#allocation2 + $0x698] sm:$0xff]
    %v301 = vld [vmem:[#allocation2 + $0x6a0] sm:$0xff]
    %v302 = vld [vmem:[#allocation2 + $0x6a8] sm:$0xff]
    %v303 = vld [vmem:[#allocation2 + $0x6b0] sm:$0xff]
    %v304 = vld [vmem:[#allocation2 + $0x6b8] sm:$0xff]
    %v305 = vld [vmem:[#allocation2 + $0x6c0] sm:$0xff]
    %v306 = vld [vmem:[#allocation2 + $0x6c8] sm:$0xff]
    %v307 = vld [vmem:[#allocation2 + $0x6d0] sm:$0xff]
    %v308 = vld [vmem:[#allocation2 + $0x6d8] sm:$0xff]
    %v309 = vld [vmem:[#allocation2 + $0x6e0] sm:$0xff]
    %v310 = vld [vmem:[#allocation2 + $0x6e8] sm:$0xff]
    %v311 = vld [vmem:[#allocation2 + $0x6f0] sm:$0xff]
    %v312 = vld [vmem:[#allocation2 + $0x6f8] sm:$0xff]
    %v313 = vld [vmem:[%s3] sm:$0xf]
    %v315 = vperm.slane %v313, 0
    %v316 = vperm.slane %v313, 1
    %v317 = vperm.slane %v313, 2
    %v318 = vperm.slane %v313, 3
    %v327 = vunpack.c.l.b16 %v85
    %v328 = vunpack.c.h.b16 %v85
    %v329 = vunpack.c.l.b16 %v86
    %v330 = vunpack.c.h.b16 %v86
    %v331 = vunpack.c.l.b16 %v87
    %v332 = vunpack.c.h.b16 %v87
    %v333 = vunpack.c.l.b16 %v88
    %v334 = vpack.c.b16 %v327, %v327
    %v335 = vpack.c.b16 %v328, %v328
    %v336 = vpack.c.b16 %v329, %v329
    %v337 = vpack.c.b16 %v330, %v330
    %v338 = vpack.c.b16 %v331, %v331
    %v339 = vpack.c.b16 %v332, %v332
    %v340 = vpack.c.b16 %v333, %v333
    %v572 = vunpack.c.l.b16 %v89
    %v573 = vunpack.c.h.b16 %v89
    %v574 = vunpack.c.l.b16 %v90
    %v575 = vunpack.c.h.b16 %v90
    %v576 = vunpack.c.l.b16 %v91
    %v577 = vunpack.c.h.b16 %v91
    %v578 = vunpack.c.l.b16 %v92
    %v579 = vunpack.c.h.b16 %v92
    %v580 = vunpack.c.l.b16 %v93
    %v581 = vunpack.c.h.b16 %v93
    %v582 = vunpack.c.l.b16 %v94
    %v583 = vunpack.c.h.b16 %v94
    %v584 = vunpack.c.l.b16 %v95
    %v585 = vunpack.c.h.b16 %v95
    %v586 = vunpack.c.l.b16 %v96
    %v587 = vunpack.c.h.b16 %v96
    %v588 = vunpack.c.l.b16 %v97
    %v589 = vunpack.c.h.b16 %v97
    %v590 = vunpack.c.l.b16 %v98
    %v591 = vunpack.c.h.b16 %v98
    %v592 = vunpack.c.l.b16 %v99
    %v593 = vunpack.c.h.b16 %v99
    %v594 = vunpack.c.l.b16 %v100
    %v595 = vunpack.c.h.b16 %v100
    %v596 = vunpack.c.l.b16 %v101
    %v597 = vunpack.c.h.b16 %v101
    %v598 = vunpack.c.l.b16 %v102
    %v599 = vunpack.c.h.b16 %v102
    %v600 = vunpack.c.l.b16 %v103
    %v601 = vunpack.c.h.b16 %v103
    %v602 = vunpack.c.l.b16 %v104
    %v603 = vunpack.c.h.b16 %v104
    %v604 = vunpack.c.l.b16 %v105
    %v605 = vunpack.c.h.b16 %v105
    %v606 = vunpack.c.l.b16 %v106
    %v607 = vunpack.c.h.b16 %v106
    %v608 = vunpack.c.l.b16 %v107
    %v609 = vunpack.c.h.b16 %v107
    %v610 = vunpack.c.l.b16 %v108
    %v611 = vunpack.c.h.b16 %v108
    %v612 = vunpack.c.l.b16 %v109
    %v613 = vunpack.c.h.b16 %v109
    %v614 = vunpack.c.l.b16 %v110
    %v615 = vunpack.c.h.b16 %v110
    %v616 = vunpack.c.l.b16 %v111
    %v617 = vunpack.c.h.b16 %v111
    %v618 = vunpack.c.l.b16 %v112
    %v619 = vunpack.c.h.b16 %v112
    %v620 = vunpack.c.l.b16 %v113
    %v621 = vunpack.c.h.b16 %v113
    %v622 = vunpack.c.l.b16 %v114
    %v623 = vunpack.c.h.b16 %v114
    %v624 = vunpack.c.l.b16 %v115
    %v625 = vunpack.c.h.b16 %v115
    %v626 = vunpack.c.l.b16 %v116
    %v627 = vunpack.c.h.b16 %v116
    %v628 = vunpack.c.l.b16 %v117
    %v629 = vunpack.c.h.b16 %v117
    %v630 = vunpack.c.l.b16 %v118
    %v631 = vunpack.c.h.b16 %v118
    %v632 = vunpack.c.l.b16 %v119
    %v633 = vunpack.c.h.b16 %v119
    %v634 = vunpack.c.l.b16 %v120
    %v635 = vunpack.c.h.b16 %v120
    %v636 = vunpack.c.l.b16 %v121
    %v637 = vunpack.c.h.b16 %v121
    %v638 = vunpack.c.l.b16 %v122
    %v639 = vunpack.c.h.b16 %v122
    %v640 = vunpack.c.l.b16 %v123
    %v641 = vunpack.c.h.b16 %v123
    %v642 = vunpack.c.l.b16 %v124
    %v643 = vunpack.c.h.b16 %v124
    %v644 = vunpack.c.l.b16 %v125
    %v645 = vunpack.c.h.b16 %v125
    %v646 = vunpack.c.l.b16 %v126
    %v647 = vunpack.c.h.b16 %v126
    %v648 = vunpack.c.l.b16 %v127
    %v649 = vunpack.c.h.b16 %v127
    %v650 = vunpack.c.l.b16 %v128
    %v651 = vunpack.c.h.b16 %v128
    %v652 = vunpack.c.l.b16 %v129
    %v653 = vunpack.c.h.b16 %v129
    %v654 = vunpack.c.l.b16 %v130
    %v655 = vunpack.c.h.b16 %v130
    %v656 = vunpack.c.l.b16 %v131
    %v657 = vunpack.c.h.b16 %v131
    %v658 = vunpack.c.l.b16 %v132
    %v659 = vunpack.c.h.b16 %v132
    %v660 = vunpack.c.l.b16 %v133
    %v661 = vunpack.c.h.b16 %v133
    %v662 = vunpack.c.l.b16 %v134
    %v663 = vunpack.c.h.b16 %v134
    %v664 = vunpack.c.l.b16 %v135
    %v665 = vunpack.c.h.b16 %v135
    %v666 = vunpack.c.l.b16 %v136
    %v667 = vunpack.c.h.b16 %v136
    %v668 = vunpack.c.l.b16 %v137
    %v669 = vunpack.c.h.b16 %v137
    %v670 = vunpack.c.l.b16 %v138
    %v671 = vunpack.c.h.b16 %v138
    %v672 = vunpack.c.l.b16 %v139
    %v673 = vunpack.c.h.b16 %v139
    %v674 = vunpack.c.l.b16 %v140
    %v675 = vunpack.c.h.b16 %v140
    %v676 = vunpack.c.l.b16 %v141
    %v677 = vunpack.c.h.b16 %v141
    %v678 = vunpack.c.l.b16 %v142
    %v679 = vunpack.c.h.b16 %v142
    %v680 = vunpack.c.l.b16 %v143
    %v681 = vunpack.c.h.b16 %v143
    %v682 = vunpack.c.l.b16 %v144
    %v683 = vunpack.c.h.b16 %v144
    %v684 = vunpack.c.l.b16 %v145
    %v685 = vunpack.c.h.b16 %v145
    %v686 = vunpack.c.l.b16 %v146
    %v687 = vunpack.c.h.b16 %v146
    %v688 = vunpack.c.l.b16 %v147
    %v689 = vunpack.c.h.b16 %v147
    %v690 = vunpack.c.l.b16 %v148
    %v691 = vunpack.c.h.b16 %v148
    %v692 = vunpack.c.l.b16 %v149
    %v693 = vunpack.c.h.b16 %v149
    %v694 = vunpack.c.l.b16 %v150
    %v695 = vunpack.c.h.b16 %v150
    %v696 = vunpack.c.l.b16 %v151
    %v697 = vunpack.c.h.b16 %v151
    %v698 = vunpack.c.l.b16 %v152
    %v699 = vunpack.c.h.b16 %v152
    %v700 = vunpack.c.l.b16 %v153
    %v701 = vunpack.c.h.b16 %v153
    %v702 = vunpack.c.l.b16 %v154
    %v703 = vunpack.c.h.b16 %v154
    %v704 = vunpack.c.l.b16 %v155
    %v705 = vunpack.c.h.b16 %v155
    %v706 = vunpack.c.l.b16 %v156
    %v707 = vunpack.c.h.b16 %v156
    %v708 = vunpack.c.l.b16 %v157
    %v709 = vunpack.c.h.b16 %v157
    %v710 = vunpack.c.l.b16 %v158
    %v711 = vunpack.c.h.b16 %v158
    %v712 = vunpack.c.l.b16 %v159
    %v713 = vunpack.c.h.b16 %v159
    %v714 = vunpack.c.l.b16 %v160
    %v715 = vunpack.c.h.b16 %v160
    %v716 = vunpack.c.l.b16 %v161
    %v717 = vunpack.c.h.b16 %v161
    %v718 = vunpack.c.l.b16 %v162
    %v719 = vunpack.c.h.b16 %v162
    %v720 = vunpack.c.l.b16 %v163
    %v721 = vunpack.c.h.b16 %v163
    %v722 = vunpack.c.l.b16 %v164
    %v723 = vunpack.c.h.b16 %v164
    %v724 = vunpack.c.l.b16 %v165
    %v725 = vunpack.c.h.b16 %v165
    %v726 = vunpack.c.l.b16 %v166
    %v727 = vunpack.c.h.b16 %v166
    %v728 = vunpack.c.l.b16 %v167
    %v729 = vunpack.c.h.b16 %v167
    %v730 = vunpack.c.l.b16 %v168
    %v731 = vunpack.c.h.b16 %v168
    %v732 = vunpack.c.l.b16 %v169
    %v733 = vunpack.c.h.b16 %v169
    %v734 = vunpack.c.l.b16 %v170
    %v735 = vunpack.c.h.b16 %v170
    %v736 = vunpack.c.l.b16 %v171
    %v737 = vunpack.c.h.b16 %v171
    %v738 = vunpack.c.l.b16 %v172
    %v739 = vunpack.c.h.b16 %v172
    %v740 = vunpack.c.l.b16 %v173
    %v741 = vunpack.c.h.b16 %v173
    %v742 = vunpack.c.l.b16 %v174
    %v743 = vunpack.c.h.b16 %v174
    %v744 = vunpack.c.l.b16 %v175
    %v745 = vunpack.c.h.b16 %v175
    %v746 = vunpack.c.l.b16 %v176
    %v747 = vunpack.c.h.b16 %v176
    %v748 = vunpack.c.l.b16 %v177
    %v749 = vunpack.c.h.b16 %v177
    %v750 = vunpack.c.l.b16 %v178
    %v751 = vunpack.c.h.b16 %v178
    %v752 = vunpack.c.l.b16 %v179
    %v753 = vunpack.c.h.b16 %v179
    %v754 = vunpack.c.l.b16 %v180
    %v755 = vunpack.c.h.b16 %v180
    %v756 = vunpack.c.l.b16 %v181
    %v757 = vunpack.c.h.b16 %v181
    %v758 = vunpack.c.l.b16 %v182
    %v759 = vunpack.c.h.b16 %v182
    %v760 = vunpack.c.l.b16 %v183
    %v761 = vunpack.c.h.b16 %v183
    %v762 = vunpack.c.l.b16 %v184
    %v763 = vunpack.c.h.b16 %v184
    %v764 = vunpack.c.l.b16 %v185
    %v765 = vunpack.c.h.b16 %v185
    %v766 = vunpack.c.l.b16 %v186
    %v767 = vunpack.c.h.b16 %v186
    %v768 = vunpack.c.l.b16 %v187
    %v769 = vunpack.c.h.b16 %v187
    %v770 = vunpack.c.l.b16 %v188
    %v771 = vunpack.c.h.b16 %v188
    %v772 = vunpack.c.l.b16 %v189
    %v773 = vunpack.c.h.b16 %v189
    %v774 = vunpack.c.l.b16 %v190
    %v775 = vunpack.c.h.b16 %v190
    %v776 = vunpack.c.l.b16 %v191
    %v777 = vunpack.c.h.b16 %v191
    %v778 = vunpack.c.l.b16 %v192
    %v779 = vunpack.c.h.b16 %v192
    %v780 = vunpack.c.l.b16 %v193
    %v781 = vunpack.c.h.b16 %v193
    %v782 = vunpack.c.l.b16 %v194
    %v783 = vunpack.c.h.b16 %v194
    %v784 = vunpack.c.l.b16 %v195
    %v785 = vunpack.c.h.b16 %v195
    %v786 = vunpack.c.l.b16 %v196
    %v787 = vunpack.c.h.b16 %v196
    %v788 = vunpack.c.l.b16 %v197
    %v789 = vunpack.c.h.b16 %v197
    %v790 = vunpack.c.l.b16 %v198
    %v791 = vunpack.c.h.b16 %v198
    %v792 = vunpack.c.l.b16 %v199
    %v793 = vunpack.c.h.b16 %v199
    %v794 = vunpack.c.l.b16 %v200
    %v795 = vunpack.c.h.b16 %v200
    %v796 = vunpack.c.l.b16 %v201
    %v797 = vunpack.c.h.b16 %v201
    %v798 = vunpack.c.l.b16 %v202
    %v799 = vunpack.c.h.b16 %v202
    %v800 = vunpack.c.l.b16 %v203
    %v801 = vunpack.c.h.b16 %v203
    %v802 = vunpack.c.l.b16 %v204
    %v803 = vunpack.c.h.b16 %v204
    %v804 = vunpack.c.l.b16 %v205
    %v805 = vunpack.c.h.b16 %v205
    %v806 = vunpack.c.l.b16 %v206
    %v807 = vunpack.c.h.b16 %v206
    %v808 = vunpack.c.l.b16 %v207
    %v809 = vunpack.c.h.b16 %v207
    %v810 = vunpack.c.l.b16 %v208
    %v811 = vunpack.c.h.b16 %v208
    %v812 = vunpack.c.l.b16 %v209
    %v813 = vunpack.c.h.b16 %v209
    %v814 = vunpack.c.l.b16 %v210
    %v815 = vunpack.c.h.b16 %v210
    %v816 = vunpack.c.l.b16 %v211
    %v817 = vunpack.c.h.b16 %v211
    %v818 = vunpack.c.l.b16 %v212
    %v819 = vunpack.c.h.b16 %v212
    %v820 = vunpack.c.l.b16 %v213
    %v821 = vunpack.c.h.b16 %v213
    %v822 = vunpack.c.l.b16 %v214
    %v823 = vunpack.c.h.b16 %v214
    %v824 = vunpack.c.l.b16 %v215
    %v825 = vunpack.c.h.b16 %v215
    %v826 = vunpack.c.l.b16 %v216
    %v827 = vunpack.c.h.b16 %v216
    %v828 = vunpack.c.l.b16 %v217
    %v829 = vunpack.c.h.b16 %v217
    %v830 = vunpack.c.l.b16 %v218
    %v831 = vunpack.c.h.b16 %v218
    %v832 = vunpack.c.l.b16 %v219
    %v833 = vunpack.c.h.b16 %v219
    %v834 = vunpack.c.l.b16 %v220
    %v835 = vunpack.c.h.b16 %v220
    %v836 = vunpack.c.l.b16 %v221
    %v837 = vunpack.c.h.b16 %v221
    %v838 = vunpack.c.l.b16 %v222
    %v839 = vunpack.c.h.b16 %v222
    %v840 = vunpack.c.l.b16 %v223
    %v841 = vunpack.c.h.b16 %v223
    %v842 = vunpack.c.l.b16 %v224
    %v843 = vunpack.c.h.b16 %v224
    %v844 = vunpack.c.l.b16 %v225
    %v845 = vunpack.c.h.b16 %v225
    %v846 = vunpack.c.l.b16 %v226
    %v847 = vunpack.c.h.b16 %v226
    %v848 = vunpack.c.l.b16 %v227
    %v849 = vunpack.c.h.b16 %v227
    %v850 = vunpack.c.l.b16 %v228
    %v851 = vunpack.c.h.b16 %v228
    %v852 = vunpack.c.l.b16 %v229
    %v853 = vunpack.c.h.b16 %v229
    %v854 = vunpack.c.l.b16 %v230
    %v855 = vunpack.c.h.b16 %v230
    %v856 = vunpack.c.l.b16 %v231
    %v857 = vunpack.c.h.b16 %v231
    %v858 = vunpack.c.l.b16 %v232
    %v859 = vunpack.c.h.b16 %v232
    %v860 = vunpack.c.l.b16 %v233
    %v861 = vunpack.c.h.b16 %v233
    %v862 = vunpack.c.l.b16 %v234
    %v863 = vunpack.c.h.b16 %v234
    %v864 = vunpack.c.l.b16 %v235
    %v865 = vunpack.c.h.b16 %v235
    %v866 = vunpack.c.l.b16 %v236
    %v867 = vunpack.c.h.b16 %v236
    %v868 = vunpack.c.l.b16 %v237
    %v869 = vunpack.c.h.b16 %v237
    %v870 = vunpack.c.l.b16 %v238
    %v871 = vunpack.c.h.b16 %v238
    %v872 = vunpack.c.l.b16 %v239
    %v873 = vunpack.c.h.b16 %v239
    %v874 = vunpack.c.l.b16 %v240
    %v875 = vunpack.c.h.b16 %v240
    %v876 = vunpack.c.l.b16 %v241
    %v877 = vunpack.c.h.b16 %v241
    %v878 = vunpack.c.l.b16 %v242
    %v879 = vunpack.c.h.b16 %v242
    %v880 = vunpack.c.l.b16 %v243
    %v881 = vunpack.c.h.b16 %v243
    %v882 = vunpack.c.l.b16 %v244
    %v883 = vunpack.c.h.b16 %v244
    %v884 = vunpack.c.l.b16 %v245
    %v885 = vunpack.c.h.b16 %v245
    %v886 = vunpack.c.l.b16 %v246
    %v887 = vunpack.c.h.b16 %v246
    %v888 = vunpack.c.l.b16 %v247
    %v889 = vunpack.c.h.b16 %v247
    %v890 = vunpack.c.l.b16 %v248
    %v891 = vunpack.c.h.b16 %v248
    %v892 = vunpack.c.l.b16 %v249
    %v893 = vunpack.c.h.b16 %v249
    %v894 = vunpack.c.l.b16 %v250
    %v895 = vunpack.c.h.b16 %v250
    %v896 = vunpack.c.l.b16 %v251
    %v897 = vunpack.c.h.b16 %v251
    %v898 = vunpack.c.l.b16 %v252
    %v899 = vunpack.c.h.b16 %v252
    %v900 = vunpack.c.l.b16 %v253
    %v901 = vunpack.c.h.b16 %v253
    %v902 = vunpack.c.l.b16 %v254
    %v903 = vunpack.c.h.b16 %v254
    %v904 = vunpack.c.l.b16 %v255
    %v905 = vunpack.c.h.b16 %v255
    %v906 = vunpack.c.l.b16 %v256
    %v907 = vunpack.c.h.b16 %v256
    %v908 = vunpack.c.l.b16 %v257
    %v909 = vunpack.c.h.b16 %v257
    %v910 = vunpack.c.l.b16 %v258
    %v911 = vunpack.c.h.b16 %v258
    %v912 = vunpack.c.l.b16 %v259
    %v913 = vunpack.c.h.b16 %v259
    %v914 = vunpack.c.l.b16 %v260
    %v915 = vunpack.c.h.b16 %v260
    %v916 = vunpack.c.l.b16 %v261
    %v917 = vunpack.c.h.b16 %v261
    %v918 = vunpack.c.l.b16 %v262
    %v919 = vunpack.c.h.b16 %v262
    %v920 = vunpack.c.l.b16 %v263
    %v921 = vunpack.c.h.b16 %v263
    %v922 = vunpack.c.l.b16 %v264
    %v923 = vunpack.c.h.b16 %v264
    %v924 = vunpack.c.l.b16 %v265
    %v925 = vunpack.c.h.b16 %v265
    %v926 = vunpack.c.l.b16 %v266
    %v927 = vunpack.c.h.b16 %v266
    %v928 = vunpack.c.l.b16 %v267
    %v929 = vunpack.c.h.b16 %v267
    %v930 = vunpack.c.l.b16 %v268
    %v931 = vunpack.c.h.b16 %v268
    %v932 = vunpack.c.l.b16 %v269
    %v933 = vunpack.c.h.b16 %v269
    %v934 = vunpack.c.l.b16 %v270
    %v935 = vunpack.c.h.b16 %v270
    %v936 = vunpack.c.l.b16 %v271
    %v937 = vunpack.c.h.b16 %v271
    %v938 = vunpack.c.l.b16 %v272
    %v939 = vunpack.c.h.b16 %v272
    %v940 = vunpack.c.l.b16 %v273
    %v941 = vunpack.c.h.b16 %v273
    %v942 = vunpack.c.l.b16 %v274
    %v943 = vunpack.c.h.b16 %v274
    %v944 = vunpack.c.l.b16 %v275
    %v945 = vunpack.c.h.b16 %v275
    %v946 = vunpack.c.l.b16 %v276
    %v947 = vunpack.c.h.b16 %v276
    %v948 = vunpack.c.l.b16 %v277
    %v949 = vunpack.c.h.b16 %v277
    %v950 = vunpack.c.l.b16 %v278
    %v951 = vunpack.c.h.b16 %v278
    %v952 = vunpack.c.l.b16 %v279
    %v953 = vunpack.c.h.b16 %v279
    %v954 = vunpack.c.l.b16 %v280
    %v955 = vunpack.c.h.b16 %v280
    %v956 = vunpack.c.l.b16 %v281
    %v957 = vunpack.c.h.b16 %v281
    %v958 = vunpack.c.l.b16 %v282
    %v959 = vunpack.c.h.b16 %v282
    %v960 = vunpack.c.l.b16 %v283
    %v961 = vunpack.c.h.b16 %v283
    %v962 = vunpack.c.l.b16 %v284
    %v963 = vunpack.c.h.b16 %v284
    %v964 = vunpack.c.l.b16 %v285
    %v965 = vunpack.c.h.b16 %v285
    %v966 = vunpack.c.l.b16 %v286
    %v967 = vunpack.c.h.b16 %v286
    %v968 = vunpack.c.l.b16 %v287
    %v969 = vunpack.c.h.b16 %v287
    %v970 = vunpack.c.l.b16 %v288
    %v971 = vunpack.c.h.b16 %v288
    %v972 = vunpack.c.l.b16 %v289
    %v973 = vunpack.c.h.b16 %v289
    %v974 = vunpack.c.l.b16 %v290
    %v975 = vunpack.c.h.b16 %v290
    %v976 = vunpack.c.l.b16 %v291
    %v977 = vunpack.c.h.b16 %v291
    %v978 = vunpack.c.l.b16 %v292
    %v979 = vunpack.c.h.b16 %v292
    %v980 = vunpack.c.l.b16 %v293
    %v981 = vunpack.c.h.b16 %v293
    %v982 = vunpack.c.l.b16 %v294
    %v983 = vunpack.c.h.b16 %v294
    %v984 = vunpack.c.l.b16 %v295
    %v985 = vunpack.c.h.b16 %v295
    %v986 = vunpack.c.l.b16 %v296
    %v987 = vunpack.c.h.b16 %v296
    %v988 = vunpack.c.l.b16 %v297
    %v989 = vunpack.c.h.b16 %v297
    %v990 = vunpack.c.l.b16 %v298
    %v991 = vunpack.c.h.b16 %v298
    %v992 = vunpack.c.l.b16 %v299
    %v993 = vunpack.c.h.b16 %v299
    %v994 = vunpack.c.l.b16 %v300
    %v995 = vunpack.c.h.b16 %v300
    %v996 = vunpack.c.l.b16 %v301
    %v997 = vunpack.c.h.b16 %v301
    %v998 = vunpack.c.l.b16 %v302
    %v999 = vunpack.c.h.b16 %v302
    %v1000 = vunpack.c.l.b16 %v303
    %v1001 = vunpack.c.h.b16 %v303
    %v1002 = vunpack.c.l.b16 %v304
    %v1003 = vunpack.c.h.b16 %v304
    %v1004 = vunpack.c.l.b16 %v305
    %v1005 = vunpack.c.h.b16 %v305
    %v1006 = vunpack.c.l.b16 %v306
    %v1007 = vunpack.c.h.b16 %v306
    %v1008 = vunpack.c.l.b16 %v307
    %v1009 = vunpack.c.h.b16 %v307
    %v1010 = vunpack.c.l.b16 %v308
    %v1011 = vunpack.c.h.b16 %v308
    %v1012 = vunpack.c.l.b16 %v309
    %v1013 = vunpack.c.h.b16 %v309
    %v1014 = vunpack.c.l.b16 %v310
    %v1015 = vunpack.c.h.b16 %v310
    %v1016 = vunpack.c.l.b16 %v311
    %v1017 = vunpack.c.h.b16 %v311
    %v1018 = vunpack.c.l.b16 %v312
    %v1019 = vunpack.c.h.b16 %v312
    %v1020 = vpack.c.b16 %v576, %v572
    %v1021 = vpack.c.b16 %v577, %v573
    %v1022 = vpack.c.b16 %v578, %v574
    %v1023 = vpack.c.b16 %v579, %v575
    %v1024 = vpack.c.b16 %v584, %v580
    %v1025 = vpack.c.b16 %v585, %v581
    %v1026 = vpack.c.b16 %v586, %v582
    %v1027 = vpack.c.b16 %v587, %v583
    %v1028 = vpack.c.b16 %v592, %v588
    %v1029 = vpack.c.b16 %v593, %v589
    %v1030 = vpack.c.b16 %v594, %v590
    %v1031 = vpack.c.b16 %v595, %v591
    %v1032 = vpack.c.b16 %v600, %v596
    %v1033 = vpack.c.b16 %v601, %v597
    %v1034 = vpack.c.b16 %v602, %v598
    %v1035 = vpack.c.b16 %v603, %v599
    %v1036 = vpack.c.b16 %v608, %v604
    %v1037 = vpack.c.b16 %v609, %v605
    %v1038 = vpack.c.b16 %v610, %v606
    %v1039 = vpack.c.b16 %v611, %v607
    %v1040 = vpack.c.b16 %v616, %v612
    %v1041 = vpack.c.b16 %v617, %v613
    %v1042 = vpack.c.b16 %v618, %v614
    %v1043 = vpack.c.b16 %v619, %v615
    %v1044 = vpack.c.b16 %v624, %v620
    %v1045 = vpack.c.b16 %v625, %v621
    %v1046 = vpack.c.b16 %v626, %v622
    %v1047 = vpack.c.b16 %v627, %v623
    %v1048 = vpack.c.b16 %v632, %v628
    %v1049 = vpack.c.b16 %v633, %v629
    %v1050 = vpack.c.b16 %v634, %v630
    %v1051 = vpack.c.b16 %v635, %v631
    %v1052 = vpack.c.b16 %v640, %v636
    %v1053 = vpack.c.b16 %v641, %v637
    %v1054 = vpack.c.b16 %v642, %v638
    %v1055 = vpack.c.b16 %v643, %v639
    %v1056 = vpack.c.b16 %v648, %v644
    %v1057 = vpack.c.b16 %v649, %v645
    %v1058 = vpack.c.b16 %v650, %v646
    %v1059 = vpack.c.b16 %v651, %v647
    %v1060 = vpack.c.b16 %v656, %v652
    %v1061 = vpack.c.b16 %v657, %v653
    %v1062 = vpack.c.b16 %v658, %v654
    %v1063 = vpack.c.b16 %v659, %v655
    %v1064 = vpack.c.b16 %v664, %v660
    %v1065 = vpack.c.b16 %v665, %v661
    %v1066 = vpack.c.b16 %v666, %v662
    %v1067 = vpack.c.b16 %v667, %v663
    %v1068 = vpack.c.b16 %v672, %v668
    %v1069 = vpack.c.b16 %v673, %v669
    %v1070 = vpack.c.b16 %v674, %v670
    %v1071 = vpack.c.b16 %v675, %v671
    %v1072 = vpack.c.b16 %v680, %v676
    %v1073 = vpack.c.b16 %v681, %v677
    %v1074 = vpack.c.b16 %v682, %v678
    %v1075 = vpack.c.b16 %v683, %v679
    %v1076 = vpack.c.b16 %v688, %v684
    %v1077 = vpack.c.b16 %v689, %v685
    %v1078 = vpack.c.b16 %v690, %v686
    %v1079 = vpack.c.b16 %v691, %v687
    %v1080 = vpack.c.b16 %v696, %v692
    %v1081 = vpack.c.b16 %v697, %v693
    %v1082 = vpack.c.b16 %v698, %v694
    %v1083 = vpack.c.b16 %v699, %v695
    %v1084 = vpack.c.b16 %v704, %v700
    %v1085 = vpack.c.b16 %v705, %v701
    %v1086 = vpack.c.b16 %v706, %v702
    %v1087 = vpack.c.b16 %v707, %v703
    %v1088 = vpack.c.b16 %v712, %v708
    %v1089 = vpack.c.b16 %v713, %v709
    %v1090 = vpack.c.b16 %v714, %v710
    %v1091 = vpack.c.b16 %v715, %v711
    %v1092 = vpack.c.b16 %v720, %v716
    %v1093 = vpack.c.b16 %v721, %v717
    %v1094 = vpack.c.b16 %v722, %v718
    %v1095 = vpack.c.b16 %v723, %v719
    %v1096 = vpack.c.b16 %v728, %v724
    %v1097 = vpack.c.b16 %v729, %v725
    %v1098 = vpack.c.b16 %v730, %v726
    %v1099 = vpack.c.b16 %v731, %v727
    %v1100 = vpack.c.b16 %v736, %v732
    %v1101 = vpack.c.b16 %v737, %v733
    %v1102 = vpack.c.b16 %v738, %v734
    %v1103 = vpack.c.b16 %v739, %v735
    %v1104 = vpack.c.b16 %v744, %v740
    %v1105 = vpack.c.b16 %v745, %v741
    %v1106 = vpack.c.b16 %v746, %v742
    %v1107 = vpack.c.b16 %v747, %v743
    %v1108 = vpack.c.b16 %v752, %v748
    %v1109 = vpack.c.b16 %v753, %v749
    %v1110 = vpack.c.b16 %v754, %v750
    %v1111 = vpack.c.b16 %v755, %v751
    %v1112 = vpack.c.b16 %v760, %v756
    %v1113 = vpack.c.b16 %v761, %v757
    %v1114 = vpack.c.b16 %v762, %v758
    %v1115 = vpack.c.b16 %v763, %v759
    %v1116 = vpack.c.b16 %v768, %v764
    %v1117 = vpack.c.b16 %v769, %v765
    %v1118 = vpack.c.b16 %v770, %v766
    %v1119 = vpack.c.b16 %v771, %v767
    %v1120 = vpack.c.b16 %v776, %v772
    %v1121 = vpack.c.b16 %v777, %v773
    %v1122 = vpack.c.b16 %v778, %v774
    %v1123 = vpack.c.b16 %v779, %v775
    %v1124 = vpack.c.b16 %v784, %v780
    %v1125 = vpack.c.b16 %v785, %v781
    %v1126 = vpack.c.b16 %v786, %v782
    %v1127 = vpack.c.b16 %v787, %v783
    %v1128 = vpack.c.b16 %v792, %v788
    %v1129 = vpack.c.b16 %v793, %v789
    %v1130 = vpack.c.b16 %v794, %v790
    %v1131 = vpack.c.b16 %v795, %v791
    %v1132 = vpack.c.b16 %v800, %v796
    %v1133 = vpack.c.b16 %v801, %v797
    %v1134 = vpack.c.b16 %v802, %v798
    %v1135 = vpack.c.b16 %v803, %v799
    %v1136 = vpack.c.b16 %v808, %v804
    %v1137 = vpack.c.b16 %v809, %v805
    %v1138 = vpack.c.b16 %v810, %v806
    %v1139 = vpack.c.b16 %v811, %v807
    %v1140 = vpack.c.b16 %v816, %v812
    %v1141 = vpack.c.b16 %v817, %v813
    %v1142 = vpack.c.b16 %v818, %v814
    %v1143 = vpack.c.b16 %v819, %v815
    %v1144 = vpack.c.b16 %v824, %v820
    %v1145 = vpack.c.b16 %v825, %v821
    %v1146 = vpack.c.b16 %v826, %v822
    %v1147 = vpack.c.b16 %v827, %v823
    %v1148 = vpack.c.b16 %v832, %v828
    %v1149 = vpack.c.b16 %v833, %v829
    %v1150 = vpack.c.b16 %v834, %v830
    %v1151 = vpack.c.b16 %v835, %v831
    %v1152 = vpack.c.b16 %v840, %v836
    %v1153 = vpack.c.b16 %v841, %v837
    %v1154 = vpack.c.b16 %v842, %v838
    %v1155 = vpack.c.b16 %v843, %v839
    %v1156 = vpack.c.b16 %v848, %v844
    %v1157 = vpack.c.b16 %v849, %v845
    %v1158 = vpack.c.b16 %v850, %v846
    %v1159 = vpack.c.b16 %v851, %v847
    %v1160 = vpack.c.b16 %v856, %v852
    %v1161 = vpack.c.b16 %v857, %v853
    %v1162 = vpack.c.b16 %v858, %v854
    %v1163 = vpack.c.b16 %v859, %v855
    %v1164 = vpack.c.b16 %v864, %v860
    %v1165 = vpack.c.b16 %v865, %v861
    %v1166 = vpack.c.b16 %v866, %v862
    %v1167 = vpack.c.b16 %v867, %v863
    %v1168 = vpack.c.b16 %v872, %v868
    %v1169 = vpack.c.b16 %v873, %v869
    %v1170 = vpack.c.b16 %v874, %v870
    %v1171 = vpack.c.b16 %v875, %v871
    %v1172 = vpack.c.b16 %v880, %v876
    %v1173 = vpack.c.b16 %v881, %v877
    %v1174 = vpack.c.b16 %v882, %v878
    %v1175 = vpack.c.b16 %v883, %v879
    %v1176 = vpack.c.b16 %v888, %v884
    %v1177 = vpack.c.b16 %v889, %v885
    %v1178 = vpack.c.b16 %v890, %v886
    %v1179 = vpack.c.b16 %v891, %v887
    %v1180 = vpack.c.b16 %v896, %v892
    %v1181 = vpack.c.b16 %v897, %v893
    %v1182 = vpack.c.b16 %v898, %v894
    %v1183 = vpack.c.b16 %v899, %v895
    %v1184 = vpack.c.b16 %v904, %v900
    %v1185 = vpack.c.b16 %v905, %v901
    %v1186 = vpack.c.b16 %v906, %v902
    %v1187 = vpack.c.b16 %v907, %v903
    %v1188 = vpack.c.b16 %v912, %v908
    %v1189 = vpack.c.b16 %v913, %v909
    %v1190 = vpack.c.b16 %v914, %v910
    %v1191 = vpack.c.b16 %v915, %v911
    %v1192 = vpack.c.b16 %v920, %v916
    %v1193 = vpack.c.b16 %v921, %v917
    %v1194 = vpack.c.b16 %v922, %v918
    %v1195 = vpack.c.b16 %v923, %v919
    %v1196 = vpack.c.b16 %v928, %v924
    %v1197 = vpack.c.b16 %v929, %v925
    %v1198 = vpack.c.b16 %v930, %v926
    %v1199 = vpack.c.b16 %v931, %v927
    %v1200 = vpack.c.b16 %v936, %v932
    %v1201 = vpack.c.b16 %v937, %v933
    %v1202 = vpack.c.b16 %v938, %v934
    %v1203 = vpack.c.b16 %v939, %v935
    %v1204 = vpack.c.b16 %v944, %v940
    %v1205 = vpack.c.b16 %v945, %v941
    %v1206 = vpack.c.b16 %v946, %v942
    %v1207 = vpack.c.b16 %v947, %v943
    %v1208 = vpack.c.b16 %v952, %v948
    %v1209 = vpack.c.b16 %v953, %v949
    %v1210 = vpack.c.b16 %v954, %v950
    %v1211 = vpack.c.b16 %v955, %v951
    %v1212 = vpack.c.b16 %v960, %v956
    %v1213 = vpack.c.b16 %v961, %v957
    %v1214 = vpack.c.b16 %v962, %v958
    %v1215 = vpack.c.b16 %v963, %v959
    %v1216 = vpack.c.b16 %v968, %v964
    %v1217 = vpack.c.b16 %v969, %v965
    %v1218 = vpack.c.b16 %v970, %v966
    %v1219 = vpack.c.b16 %v971, %v967
    %v1220 = vpack.c.b16 %v976, %v972
    %v1221 = vpack.c.b16 %v977, %v973
    %v1222 = vpack.c.b16 %v978, %v974
    %v1223 = vpack.c.b16 %v979, %v975
    %v1224 = vpack.c.b16 %v984, %v980
    %v1225 = vpack.c.b16 %v985, %v981
    %v1226 = vpack.c.b16 %v986, %v982
    %v1227 = vpack.c.b16 %v987, %v983
    %v1228 = vpack.c.b16 %v992, %v988
    %v1229 = vpack.c.b16 %v993, %v989
    %v1230 = vpack.c.b16 %v994, %v990
    %v1231 = vpack.c.b16 %v995, %v991
    %v1232 = vpack.c.b16 %v1000, %v996
    %v1233 = vpack.c.b16 %v1001, %v997
    %v1234 = vpack.c.b16 %v1002, %v998
    %v1235 = vpack.c.b16 %v1003, %v999
    %v1236 = vpack.c.b16 %v1008, %v1004
    %v1237 = vpack.c.b16 %v1009, %v1005
    %v1238 = vpack.c.b16 %v1010, %v1006
    %v1239 = vpack.c.b16 %v1011, %v1007
    %v1240 = vpack.c.b16 %v1016, %v1012
    %v1241 = vpack.c.b16 %v1017, %v1013
    %v1242 = vpack.c.b16 %v1018, %v1014
    %v1243 = vpack.c.b16 %v1019, %v1015
    %1468 = vmatpush.bf16.msra.mxu0 %v1048
    %1469 = vmatpush.bf16.msra.mxu0 %v1044
    %1470 = vmatpush.bf16.msra.mxu0 %v1040
    %1471 = vmatpush.bf16.msra.mxu0 %v1036
    %1472 = vmatpush.bf16.msra.mxu0 %v1032
    %1473 = vmatpush.bf16.msra.mxu0 %v1028
    %1474 = vmatpush.bf16.msra.mxu0 %v1024
    %1475 = vmatpush.bf16.msra.mxu0 %v1020
    %1476 = vmatmul.bf16.gmra.mxu0 %v334
    %v1477 = vpop.f32.mrf.mxu0
    %v1478 = vadd.f32 %v315, %v1477
    %v1479 = vpop.f32.mrf.mxu0
    %1480 = vdwg.mxu0
    %1481 = vmatpush.bf16.msra.mxu0 %v1080
    %1482 = vmatpush.bf16.msra.mxu0 %v1076
    %1483 = vmatpush.bf16.msra.mxu0 %v1072
    %1484 = vmatpush.bf16.msra.mxu0 %v1068
    %1485 = vmatpush.bf16.msra.mxu0 %v1064
    %1486 = vmatpush.bf16.msra.mxu0 %v1060
    %1487 = vmatpush.bf16.msra.mxu0 %v1056
    %1488 = vmatpush.bf16.msra.mxu0 %v1052
    %1489 = vmatmul.bf16.gmra.mxu0 %v335
    %v1490 = vpop.f32.mrf.mxu0
    %v1491 = vadd.f32 %v1478, %v1490
    %v1492 = vpop.f32.mrf.mxu0
    %1493 = vdwg.mxu0
    %1494 = vmatpush.bf16.msra.mxu0 %v1112
    %1495 = vmatpush.bf16.msra.mxu0 %v1108
    %1496 = vmatpush.bf16.msra.mxu0 %v1104
    %1497 = vmatpush.bf16.msra.mxu0 %v1100
    %1498 = vmatpush.bf16.msra.mxu0 %v1096
    %1499 = vmatpush.bf16.msra.mxu0 %v1092
    %1500 = vmatpush.bf16.msra.mxu0 %v1088
    %1501 = vmatpush.bf16.msra.mxu0 %v1084
    %1502 = vmatmul.bf16.gmra.mxu0 %v336
    %v1503 = vpop.f32.mrf.mxu0
    %v1504 = vadd.f32 %v1491, %v1503
    %v1505 = vpop.f32.mrf.mxu0
    %1506 = vdwg.mxu0
    %1507 = vmatpush.bf16.msra.mxu0 %v1144
    %1508 = vmatpush.bf16.msra.mxu0 %v1140
    %1509 = vmatpush.bf16.msra.mxu0 %v1136
    %1510 = vmatpush.bf16.msra.mxu0 %v1132
    %1511 = vmatpush.bf16.msra.mxu0 %v1128
    %1512 = vmatpush.bf16.msra.mxu0 %v1124
    %1513 = vmatpush.bf16.msra.mxu0 %v1120
    %1514 = vmatpush.bf16.msra.mxu0 %v1116
    %1515 = vmatmul.bf16.gmra.mxu0 %v337
    %v1516 = vpop.f32.mrf.mxu0
    %v1517 = vadd.f32 %v1504, %v1516
    %v1518 = vpop.f32.mrf.mxu0
    %1519 = vdwg.mxu0
    %1520 = vmatpush.bf16.msra.mxu0 %v1176
    %1521 = vmatpush.bf16.msra.mxu0 %v1172
    %1522 = vmatpush.bf16.msra.mxu0 %v1168
    %1523 = vmatpush.bf16.msra.mxu0 %v1164
    %1524 = vmatpush.bf16.msra.mxu0 %v1160
    %1525 = vmatpush.bf16.msra.mxu0 %v1156
    %1526 = vmatpush.bf16.msra.mxu0 %v1152
    %1527 = vmatpush.bf16.msra.mxu0 %v1148
    %1528 = vmatmul.bf16.gmra.mxu0 %v338
    %v1529 = vpop.f32.mrf.mxu0
    %v1530 = vadd.f32 %v1517, %v1529
    %v1531 = vpop.f32.mrf.mxu0
    %1532 = vdwg.mxu0
    %1533 = vmatpush.bf16.msra.mxu0 %v1208
    %1534 = vmatpush.bf16.msra.mxu0 %v1204
    %1535 = vmatpush.bf16.msra.mxu0 %v1200
    %1536 = vmatpush.bf16.msra.mxu0 %v1196
    %1537 = vmatpush.bf16.msra.mxu0 %v1192
    %1538 = vmatpush.bf16.msra.mxu0 %v1188
    %1539 = vmatpush.bf16.msra.mxu0 %v1184
    %1540 = vmatpush.bf16.msra.mxu0 %v1180
    %1541 = vmatmul.bf16.gmra.mxu0 %v339
    %v1542 = vpop.f32.mrf.mxu0
    %v1543 = vadd.f32 %v1530, %v1542
    %v1544 = vpop.f32.mrf.mxu0
    %1545 = vdwg.mxu0
    %1546 = vmatpush.bf16.msra.mxu0 %v1240
    %1547 = vmatpush.bf16.msra.mxu0 %v1236
    %1548 = vmatpush.bf16.msra.mxu0 %v1232
    %1549 = vmatpush.bf16.msra.mxu0 %v1228
    %1550 = vmatpush.bf16.msra.mxu0 %v1224
    %1551 = vmatpush.bf16.msra.mxu0 %v1220
    %1552 = vmatpush.bf16.msra.mxu0 %v1216
    %1553 = vmatpush.bf16.msra.mxu0 %v1212
    %1554 = vmatmul.bf16.gmra.mxu0 %v340
    %v1555 = vpop.f32.mrf.mxu0
    %v1556 = vadd.f32 %v1543, %v1555
    %v1557 = vpop.f32.mrf.mxu0
    %1558 = vdwg.mxu0
    %1559 = vmatpush.bf16.msra.mxu0 %v1049
    %1560 = vmatpush.bf16.msra.mxu0 %v1045
    %1561 = vmatpush.bf16.msra.mxu0 %v1041
    %1562 = vmatpush.bf16.msra.mxu0 %v1037
    %1563 = vmatpush.bf16.msra.mxu0 %v1033
    %1564 = vmatpush.bf16.msra.mxu0 %v1029
    %1565 = vmatpush.bf16.msra.mxu0 %v1025
    %1566 = vmatpush.bf16.msra.mxu0 %v1021
    %1567 = vmatmul.bf16.gmra.mxu0 %v334
    %v1568 = vpop.f32.mrf.mxu0
    %v1569 = vadd.f32 %v316, %v1568
    %v1570 = vpop.f32.mrf.mxu0
    %1571 = vdwg.mxu0
    %1572 = vmatpush.bf16.msra.mxu0 %v1081
    %1573 = vmatpush.bf16.msra.mxu0 %v1077
    %1574 = vmatpush.bf16.msra.mxu0 %v1073
    %1575 = vmatpush.bf16.msra.mxu0 %v1069
    %1576 = vmatpush.bf16.msra.mxu0 %v1065
    %1577 = vmatpush.bf16.msra.mxu0 %v1061
    %1578 = vmatpush.bf16.msra.mxu0 %v1057
    %1579 = vmatpush.bf16.msra.mxu0 %v1053
    %1580 = vmatmul.bf16.gmra.mxu0 %v335
    %v1581 = vpop.f32.mrf.mxu0
    %v1582 = vadd.f32 %v1569, %v1581
    %v1583 = vpop.f32.mrf.mxu0
    %1584 = vdwg.mxu0
    %1585 = vmatpush.bf16.msra.mxu0 %v1113
    %1586 = vmatpush.bf16.msra.mxu0 %v1109
    %1587 = vmatpush.bf16.msra.mxu0 %v1105
    %1588 = vmatpush.bf16.msra.mxu0 %v1101
    %1589 = vmatpush.bf16.msra.mxu0 %v1097
    %1590 = vmatpush.bf16.msra.mxu0 %v1093
    %1591 = vmatpush.bf16.msra.mxu0 %v1089
    %1592 = vmatpush.bf16.msra.mxu0 %v1085
    %1593 = vmatmul.bf16.gmra.mxu0 %v336
    %v1594 = vpop.f32.mrf.mxu0
    %v1595 = vadd.f32 %v1582, %v1594
    %v1596 = vpop.f32.mrf.mxu0
    %1597 = vdwg.mxu0
    %1598 = vmatpush.bf16.msra.mxu0 %v1145
    %1599 = vmatpush.bf16.msra.mxu0 %v1141
    %1600 = vmatpush.bf16.msra.mxu0 %v1137
    %1601 = vmatpush.bf16.msra.mxu0 %v1133
    %1602 = vmatpush.bf16.msra.mxu0 %v1129
    %1603 = vmatpush.bf16.msra.mxu0 %v1125
    %1604 = vmatpush.bf16.msra.mxu0 %v1121
    %1605 = vmatpush.bf16.msra.mxu0 %v1117
    %1606 = vmatmul.bf16.gmra.mxu0 %v337
    %v1607 = vpop.f32.mrf.mxu0
    %v1608 = vadd.f32 %v1595, %v1607
    %v1609 = vpop.f32.mrf.mxu0
    %1610 = vdwg.mxu0
    %1611 = vmatpush.bf16.msra.mxu0 %v1177
    %1612 = vmatpush.bf16.msra.mxu0 %v1173
    %1613 = vmatpush.bf16.msra.mxu0 %v1169
    %1614 = vmatpush.bf16.msra.mxu0 %v1165
    %1615 = vmatpush.bf16.msra.mxu0 %v1161
    %1616 = vmatpush.bf16.msra.mxu0 %v1157
    %1617 = vmatpush.bf16.msra.mxu0 %v1153
    %1618 = vmatpush.bf16.msra.mxu0 %v1149
    %1619 = vmatmul.bf16.gmra.mxu0 %v338
    %v1620 = vpop.f32.mrf.mxu0
    %v1621 = vadd.f32 %v1608, %v1620
    %v1622 = vpop.f32.mrf.mxu0
    %1623 = vdwg.mxu0
    %1624 = vmatpush.bf16.msra.mxu0 %v1209
    %1625 = vmatpush.bf16.msra.mxu0 %v1205
    %1626 = vmatpush.bf16.msra.mxu0 %v1201
    %1627 = vmatpush.bf16.msra.mxu0 %v1197
    %1628 = vmatpush.bf16.msra.mxu0 %v1193
    %1629 = vmatpush.bf16.msra.mxu0 %v1189
    %1630 = vmatpush.bf16.msra.mxu0 %v1185
    %1631 = vmatpush.bf16.msra.mxu0 %v1181
    %1632 = vmatmul.bf16.gmra.mxu0 %v339
    %v1633 = vpop.f32.mrf.mxu0
    %v1634 = vadd.f32 %v1621, %v1633
    %v1635 = vpop.f32.mrf.mxu0
    %1636 = vdwg.mxu0
    %1637 = vmatpush.bf16.msra.mxu0 %v1241
    %1638 = vmatpush.bf16.msra.mxu0 %v1237
    %1639 = vmatpush.bf16.msra.mxu0 %v1233
    %1640 = vmatpush.bf16.msra.mxu0 %v1229
    %1641 = vmatpush.bf16.msra.mxu0 %v1225
    %1642 = vmatpush.bf16.msra.mxu0 %v1221
    %1643 = vmatpush.bf16.msra.mxu0 %v1217
    %1644 = vmatpush.bf16.msra.mxu0 %v1213
    %1645 = vmatmul.bf16.gmra.mxu0 %v340
    %v1646 = vpop.f32.mrf.mxu0
    %v1647 = vadd.f32 %v1634, %v1646
    %v1648 = vpop.f32.mrf.mxu0
    %1649 = vdwg.mxu0
    %1650 = vmatpush.bf16.msra.mxu0 %v1050
    %1651 = vmatpush.bf16.msra.mxu0 %v1046
    %1652 = vmatpush.bf16.msra.mxu0 %v1042
    %1653 = vmatpush.bf16.msra.mxu0 %v1038
    %1654 = vmatpush.bf16.msra.mxu0 %v1034
    %1655 = vmatpush.bf16.msra.mxu0 %v1030
    %1656 = vmatpush.bf16.msra.mxu0 %v1026
    %1657 = vmatpush.bf16.msra.mxu0 %v1022
    %1658 = vmatmul.bf16.gmra.mxu0 %v334
    %v1659 = vpop.f32.mrf.mxu0
    %v1660 = vadd.f32 %v317, %v1659
    %v1661 = vpop.f32.mrf.mxu0
    %1662 = vdwg.mxu0
    %1663 = vmatpush.bf16.msra.mxu0 %v1082
    %1664 = vmatpush.bf16.msra.mxu0 %v1078
    %1665 = vmatpush.bf16.msra.mxu0 %v1074
    %1666 = vmatpush.bf16.msra.mxu0 %v1070
    %1667 = vmatpush.bf16.msra.mxu0 %v1066
    %1668 = vmatpush.bf16.msra.mxu0 %v1062
    %1669 = vmatpush.bf16.msra.mxu0 %v1058
    %1670 = vmatpush.bf16.msra.mxu0 %v1054
    %1671 = vmatmul.bf16.gmra.mxu0 %v335
    %v1672 = vpop.f32.mrf.mxu0
    %v1673 = vadd.f32 %v1660, %v1672
    %v1674 = vpop.f32.mrf.mxu0
    %1675 = vdwg.mxu0
    %1676 = vmatpush.bf16.msra.mxu0 %v1114
    %1677 = vmatpush.bf16.msra.mxu0 %v1110
    %1678 = vmatpush.bf16.msra.mxu0 %v1106
    %1679 = vmatpush.bf16.msra.mxu0 %v1102
    %1680 = vmatpush.bf16.msra.mxu0 %v1098
    %1681 = vmatpush.bf16.msra.mxu0 %v1094
    %1682 = vmatpush.bf16.msra.mxu0 %v1090
    %1683 = vmatpush.bf16.msra.mxu0 %v1086
    %1684 = vmatmul.bf16.gmra.mxu0 %v336
    %v1685 = vpop.f32.mrf.mxu0
    %v1686 = vadd.f32 %v1673, %v1685
    %v1687 = vpop.f32.mrf.mxu0
    %1688 = vdwg.mxu0
    %1689 = vmatpush.bf16.msra.mxu0 %v1146
    %1690 = vmatpush.bf16.msra.mxu0 %v1142
    %1691 = vmatpush.bf16.msra.mxu0 %v1138
    %1692 = vmatpush.bf16.msra.mxu0 %v1134
    %1693 = vmatpush.bf16.msra.mxu0 %v1130
    %1694 = vmatpush.bf16.msra.mxu0 %v1126
    %1695 = vmatpush.bf16.msra.mxu0 %v1122
    %1696 = vmatpush.bf16.msra.mxu0 %v1118
    %1697 = vmatmul.bf16.gmra.mxu0 %v337
    %v1698 = vpop.f32.mrf.mxu0
    %v1699 = vadd.f32 %v1686, %v1698
    %v1700 = vpop.f32.mrf.mxu0
    %1701 = vdwg.mxu0
    %1702 = vmatpush.bf16.msra.mxu0 %v1178
    %1703 = vmatpush.bf16.msra.mxu0 %v1174
    %1704 = vmatpush.bf16.msra.mxu0 %v1170
    %1705 = vmatpush.bf16.msra.mxu0 %v1166
    %1706 = vmatpush.bf16.msra.mxu0 %v1162
    %1707 = vmatpush.bf16.msra.mxu0 %v1158
    %1708 = vmatpush.bf16.msra.mxu0 %v1154
    %1709 = vmatpush.bf16.msra.mxu0 %v1150
    %1710 = vmatmul.bf16.gmra.mxu0 %v338
    %v1711 = vpop.f32.mrf.mxu0
    %v1712 = vadd.f32 %v1699, %v1711
    %v1713 = vpop.f32.mrf.mxu0
    %1714 = vdwg.mxu0
    %1715 = vmatpush.bf16.msra.mxu0 %v1210
    %1716 = vmatpush.bf16.msra.mxu0 %v1206
    %1717 = vmatpush.bf16.msra.mxu0 %v1202
    %1718 = vmatpush.bf16.msra.mxu0 %v1198
    %1719 = vmatpush.bf16.msra.mxu0 %v1194
    %1720 = vmatpush.bf16.msra.mxu0 %v1190
    %1721 = vmatpush.bf16.msra.mxu0 %v1186
    %1722 = vmatpush.bf16.msra.mxu0 %v1182
    %1723 = vmatmul.bf16.gmra.mxu0 %v339
    %v1724 = vpop.f32.mrf.mxu0
    %v1725 = vadd.f32 %v1712, %v1724
    %v1726 = vpop.f32.mrf.mxu0
    %1727 = vdwg.mxu0
    %1728 = vmatpush.bf16.msra.mxu0 %v1242
    %1729 = vmatpush.bf16.msra.mxu0 %v1238
    %1730 = vmatpush.bf16.msra.mxu0 %v1234
    %1731 = vmatpush.bf16.msra.mxu0 %v1230
    %1732 = vmatpush.bf16.msra.mxu0 %v1226
    %1733 = vmatpush.bf16.msra.mxu0 %v1222
    %1734 = vmatpush.bf16.msra.mxu0 %v1218
    %1735 = vmatpush.bf16.msra.mxu0 %v1214
    %1736 = vmatmul.bf16.gmra.mxu0 %v340
    %v1737 = vpop.f32.mrf.mxu0
    %v1738 = vadd.f32 %v1725, %v1737
    %v1739 = vpop.f32.mrf.mxu0
    %1740 = vdwg.mxu0
    %1741 = vmatpush.bf16.msra.mxu0 %v1051
    %1742 = vmatpush.bf16.msra.mxu0 %v1047
    %1743 = vmatpush.bf16.msra.mxu0 %v1043
    %1744 = vmatpush.bf16.msra.mxu0 %v1039
    %1745 = vmatpush.bf16.msra.mxu0 %v1035
    %1746 = vmatpush.bf16.msra.mxu0 %v1031
    %1747 = vmatpush.bf16.msra.mxu0 %v1027
    %1748 = vmatpush.bf16.msra.mxu0 %v1023
    %1749 = vmatmul.bf16.gmra.mxu0 %v334
    %v1750 = vpop.f32.mrf.mxu0
    %v1751 = vadd.f32 %v318, %v1750
    %v1752 = vpop.f32.mrf.mxu0
    %1753 = vdwg.mxu0
    %1754 = vmatpush.bf16.msra.mxu0 %v1083
    %1755 = vmatpush.bf16.msra.mxu0 %v1079
    %1756 = vmatpush.bf16.msra.mxu0 %v1075
    %1757 = vmatpush.bf16.msra.mxu0 %v1071
    %1758 = vmatpush.bf16.msra.mxu0 %v1067
    %1759 = vmatpush.bf16.msra.mxu0 %v1063
    %1760 = vmatpush.bf16.msra.mxu0 %v1059
    %1761 = vmatpush.bf16.msra.mxu0 %v1055
    %1762 = vmatmul.bf16.gmra.mxu0 %v335
    %v1763 = vpop.f32.mrf.mxu0
    %v1764 = vadd.f32 %v1751, %v1763
    %v1765 = vpop.f32.mrf.mxu0
    %1766 = vdwg.mxu0
    %1767 = vmatpush.bf16.msra.mxu0 %v1115
    %1768 = vmatpush.bf16.msra.mxu0 %v1111
    %1769 = vmatpush.bf16.msra.mxu0 %v1107
    %1770 = vmatpush.bf16.msra.mxu0 %v1103
    %1771 = vmatpush.bf16.msra.mxu0 %v1099
    %1772 = vmatpush.bf16.msra.mxu0 %v1095
    %1773 = vmatpush.bf16.msra.mxu0 %v1091
    %1774 = vmatpush.bf16.msra.mxu0 %v1087
    %1775 = vmatmul.bf16.gmra.mxu0 %v336
    %v1776 = vpop.f32.mrf.mxu0
    %v1777 = vadd.f32 %v1764, %v1776
    %v1778 = vpop.f32.mrf.mxu0
    %1779 = vdwg.mxu0
    %1780 = vmatpush.bf16.msra.mxu0 %v1147
    %1781 = vmatpush.bf16.msra.mxu0 %v1143
    %1782 = vmatpush.bf16.msra.mxu0 %v1139
    %1783 = vmatpush.bf16.msra.mxu0 %v1135
    %1784 = vmatpush.bf16.msra.mxu0 %v1131
    %1785 = vmatpush.bf16.msra.mxu0 %v1127
    %1786 = vmatpush.bf16.msra.mxu0 %v1123
    %1787 = vmatpush.bf16.msra.mxu0 %v1119
    %1788 = vmatmul.bf16.gmra.mxu0 %v337
    %v1789 = vpop.f32.mrf.mxu0
    %v1790 = vadd.f32 %v1777, %v1789
    %v1791 = vpop.f32.mrf.mxu0
    %1792 = vdwg.mxu0
    %1793 = vmatpush.bf16.msra.mxu0 %v1179
    %1794 = vmatpush.bf16.msra.mxu0 %v1175
    %1795 = vmatpush.bf16.msra.mxu0 %v1171
    %1796 = vmatpush.bf16.msra.mxu0 %v1167
    %1797 = vmatpush.bf16.msra.mxu0 %v1163
    %1798 = vmatpush.bf16.msra.mxu0 %v1159
    %1799 = vmatpush.bf16.msra.mxu0 %v1155
    %1800 = vmatpush.bf16.msra.mxu0 %v1151
    %1801 = vmatmul.bf16.gmra.mxu0 %v338
    %v1802 = vpop.f32.mrf.mxu0
    %v1803 = vadd.f32 %v1790, %v1802
    %v1804 = vpop.f32.mrf.mxu0
    %1805 = vdwg.mxu0
    %1806 = vmatpush.bf16.msra.mxu0 %v1211
    %1807 = vmatpush.bf16.msra.mxu0 %v1207
    %1808 = vmatpush.bf16.msra.mxu0 %v1203
    %1809 = vmatpush.bf16.msra.mxu0 %v1199
    %1810 = vmatpush.bf16.msra.mxu0 %v1195
    %1811 = vmatpush.bf16.msra.mxu0 %v1191
    %1812 = vmatpush.bf16.msra.mxu0 %v1187
    %1813 = vmatpush.bf16.msra.mxu0 %v1183
    %1814 = vmatmul.bf16.gmra.mxu0 %v339
    %v1815 = vpop.f32.mrf.mxu0
    %v1816 = vadd.f32 %v1803, %v1815
    %v1817 = vpop.f32.mrf.mxu0
    %1818 = vdwg.mxu0
    %1819 = vmatpush.bf16.msra.mxu0 %v1243
    %1820 = vmatpush.bf16.msra.mxu0 %v1239
    %1821 = vmatpush.bf16.msra.mxu0 %v1235
    %1822 = vmatpush.bf16.msra.mxu0 %v1231
    %1823 = vmatpush.bf16.msra.mxu0 %v1227
    %1824 = vmatpush.bf16.msra.mxu0 %v1223
    %1825 = vmatpush.bf16.msra.mxu0 %v1219
    %1826 = vmatpush.bf16.msra.mxu0 %v1215
    %1827 = vmatmul.bf16.gmra.mxu0 %v340
    %v1828 = vpop.f32.mrf.mxu0
    %v1829 = vadd.f32 %v1816, %v1828
    %v1830 = vpop.f32.mrf.mxu0
    %1831 = vdwg.mxu0
    %v1832 = vmax.f32 %v1556, 0.0
    %v1833 = vmax.f32 %v1647, 0.0
    %v1834 = vmax.f32 %v1738, 0.0
    %v1835 = vmax.f32 %v1829, 0.0
    %v1836 = vpack.c.bf16 %v1832, %v1832
    %v1837 = vpack.c.bf16 %v1833, %v1833
    %v1838 = vpack.c.bf16 %v1834, %v1834
    %v1839 = vpack.c.bf16 %v1835, %v1835
    %v1840 = vld [vmem:[%s4] sm:$0xff]
    %v1841 = vld [vmem:[%s4 + $0x8] sm:$0xff]
    %v1842 = vld [vmem:[%s4 + $0x10] sm:$0xff]
    %v1843 = vld [vmem:[%s4 + $0x18] sm:$0xff]
    %v1844 = vld [vmem:[%s4 + $0x20] sm:$0xff]
    %v1845 = vld [vmem:[%s4 + $0x28] sm:$0xff]
    %v1846 = vld [vmem:[%s4 + $0x30] sm:$0xff]
    %v1847 = vld [vmem:[%s4 + $0x38] sm:$0xff]
    %v1848 = vld [vmem:[%s4 + $0x40] sm:$0xff]
    %v1849 = vld [vmem:[%s4 + $0x48] sm:$0xff]
    %v1850 = vld [vmem:[%s4 + $0x50] sm:$0xff]
    %v1851 = vld [vmem:[%s4 + $0x58] sm:$0xff]
    %v1852 = vld [vmem:[%s4 + $0x60] sm:$0xff]
    %v1853 = vld [vmem:[%s4 + $0x68] sm:$0xff]
    %v1854 = vld [vmem:[%s4 + $0x70] sm:$0xff]
    %v1855 = vld [vmem:[%s4 + $0x78] sm:$0xff]
    %v1856 = vld [vmem:[%s4 + $0x80] sm:$0xff]
    %v1857 = vld [vmem:[%s4 + $0x88] sm:$0xff]
    %v1858 = vld [vmem:[%s4 + $0x90] sm:$0xff]
    %v1859 = vld [vmem:[%s4 + $0x98] sm:$0xff]
    %v1860 = vld [vmem:[%s4 + $0xa0] sm:$0xff]
    %v1861 = vld [vmem:[%s4 + $0xa8] sm:$0xff]
    %v1862 = vld [vmem:[%s4 + $0xb0] sm:$0xff]
    %v1863 = vld [vmem:[%s4 + $0xb8] sm:$0xff]
    %v1864 = vld [vmem:[%s4 + $0xc0] sm:$0xff]
    %v1865 = vld [vmem:[%s4 + $0xc8] sm:$0xff]
    %v1866 = vld [vmem:[%s4 + $0xd0] sm:$0xff]
    %v1867 = vld [vmem:[%s4 + $0xd8] sm:$0xff]
    %v1868 = vld [vmem:[%s4 + $0xe0] sm:$0xff]
    %v1869 = vld [vmem:[%s4 + $0xe8] sm:$0xff]
    %v1870 = vld [vmem:[%s4 + $0xf0] sm:$0xff]
    %v1871 = vld [vmem:[%s4 + $0xf8] sm:$0xff]
    %v1872 = vld [vmem:[%s4 + $0x100] sm:$0xff]
    %v1873 = vld [vmem:[%s4 + $0x108] sm:$0xff]
    %v1874 = vld [vmem:[%s4 + $0x110] sm:$0xff]
    %v1875 = vld [vmem:[%s4 + $0x118] sm:$0xff]
    %v1876 = vld [vmem:[%s4 + $0x120] sm:$0xff]
    %v1877 = vld [vmem:[%s4 + $0x128] sm:$0xff]
    %v1878 = vld [vmem:[%s4 + $0x130] sm:$0xff]
    %v1879 = vld [vmem:[%s4 + $0x138] sm:$0xff]
    %v1880 = vld [vmem:[%s4 + $0x140] sm:$0xff]
    %v1881 = vld [vmem:[%s4 + $0x148] sm:$0xff]
    %v1882 = vld [vmem:[%s4 + $0x150] sm:$0xff]
    %v1883 = vld [vmem:[%s4 + $0x158] sm:$0xff]
    %v1884 = vld [vmem:[%s4 + $0x160] sm:$0xff]
    %v1885 = vld [vmem:[%s4 + $0x168] sm:$0xff]
    %v1886 = vld [vmem:[%s4 + $0x170] sm:$0xff]
    %v1887 = vld [vmem:[%s4 + $0x178] sm:$0xff]
    %v1888 = vld [vmem:[%s4 + $0x180] sm:$0xff]
    %v1889 = vld [vmem:[%s4 + $0x188] sm:$0xff]
    %v1890 = vld [vmem:[%s4 + $0x190] sm:$0xff]
    %v1891 = vld [vmem:[%s4 + $0x198] sm:$0xff]
    %v1892 = vld [vmem:[%s4 + $0x1a0] sm:$0xff]
    %v1893 = vld [vmem:[%s4 + $0x1a8] sm:$0xff]
    %v1894 = vld [vmem:[%s4 + $0x1b0] sm:$0xff]
    %v1895 = vld [vmem:[%s4 + $0x1b8] sm:$0xff]
    %v1896 = vld [vmem:[%s4 + $0x1c0] sm:$0xff]
    %v1897 = vld [vmem:[%s4 + $0x1c8] sm:$0xff]
    %v1898 = vld [vmem:[%s4 + $0x1d0] sm:$0xff]
    %v1899 = vld [vmem:[%s4 + $0x1d8] sm:$0xff]
    %v1900 = vld [vmem:[%s4 + $0x1e0] sm:$0xff]
    %v1901 = vld [vmem:[%s4 + $0x1e8] sm:$0xff]
    %v1902 = vld [vmem:[%s4 + $0x1f0] sm:$0xff]
    %v1903 = vld [vmem:[%s4 + $0x1f8] sm:$0xff]
    %v1904 = vld [vmem:[%s5] sm:$0x3]
    %v1906 = vperm.slane %v1904, 0
    %v1907 = vperm.slane %v1904, 1
    %v1974 = vunpack.c.l.b16 %v1840
    %v1975 = vunpack.c.h.b16 %v1840
    %v1976 = vunpack.c.l.b16 %v1841
    %v1977 = vunpack.c.h.b16 %v1841
    %v1978 = vunpack.c.l.b16 %v1842
    %v1979 = vunpack.c.h.b16 %v1842
    %v1980 = vunpack.c.l.b16 %v1843
    %v1981 = vunpack.c.h.b16 %v1843
    %v1982 = vunpack.c.l.b16 %v1844
    %v1983 = vunpack.c.h.b16 %v1844
    %v1984 = vunpack.c.l.b16 %v1845
    %v1985 = vunpack.c.h.b16 %v1845
    %v1986 = vunpack.c.l.b16 %v1846
    %v1987 = vunpack.c.h.b16 %v1846
    %v1988 = vunpack.c.l.b16 %v1847
    %v1989 = vunpack.c.h.b16 %v1847
    %v1990 = vunpack.c.l.b16 %v1848
    %v1991 = vunpack.c.h.b16 %v1848
    %v1992 = vunpack.c.l.b16 %v1849
    %v1993 = vunpack.c.h.b16 %v1849
    %v1994 = vunpack.c.l.b16 %v1850
    %v1995 = vunpack.c.h.b16 %v1850
    %v1996 = vunpack.c.l.b16 %v1851
    %v1997 = vunpack.c.h.b16 %v1851
    %v1998 = vunpack.c.l.b16 %v1852
    %v1999 = vunpack.c.h.b16 %v1852
    %v2000 = vunpack.c.l.b16 %v1853
    %v2001 = vunpack.c.h.b16 %v1853
    %v2002 = vunpack.c.l.b16 %v1854
    %v2003 = vunpack.c.h.b16 %v1854
    %v2004 = vunpack.c.l.b16 %v1855
    %v2005 = vunpack.c.h.b16 %v1855
    %v2006 = vunpack.c.l.b16 %v1856
    %v2007 = vunpack.c.h.b16 %v1856
    %v2008 = vunpack.c.l.b16 %v1857
    %v2009 = vunpack.c.h.b16 %v1857
    %v2010 = vunpack.c.l.b16 %v1858
    %v2011 = vunpack.c.h.b16 %v1858
    %v2012 = vunpack.c.l.b16 %v1859
    %v2013 = vunpack.c.h.b16 %v1859
    %v2014 = vunpack.c.l.b16 %v1860
    %v2015 = vunpack.c.h.b16 %v1860
    %v2016 = vunpack.c.l.b16 %v1861
    %v2017 = vunpack.c.h.b16 %v1861
    %v2018 = vunpack.c.l.b16 %v1862
    %v2019 = vunpack.c.h.b16 %v1862
    %v2020 = vunpack.c.l.b16 %v1863
    %v2021 = vunpack.c.h.b16 %v1863
    %v2022 = vunpack.c.l.b16 %v1864
    %v2023 = vunpack.c.h.b16 %v1864
    %v2024 = vunpack.c.l.b16 %v1865
    %v2025 = vunpack.c.h.b16 %v1865
    %v2026 = vunpack.c.l.b16 %v1866
    %v2027 = vunpack.c.h.b16 %v1866
    %v2028 = vunpack.c.l.b16 %v1867
    %v2029 = vunpack.c.h.b16 %v1867
    %v2030 = vunpack.c.l.b16 %v1868
    %v2031 = vunpack.c.h.b16 %v1868
    %v2032 = vunpack.c.l.b16 %v1869
    %v2033 = vunpack.c.h.b16 %v1869
    %v2034 = vunpack.c.l.b16 %v1870
    %v2035 = vunpack.c.h.b16 %v1870
    %v2036 = vunpack.c.l.b16 %v1871
    %v2037 = vunpack.c.h.b16 %v1871
    %v2038 = vunpack.c.l.b16 %v1872
    %v2039 = vunpack.c.h.b16 %v1872
    %v2040 = vunpack.c.l.b16 %v1873
    %v2041 = vunpack.c.h.b16 %v1873
    %v2042 = vunpack.c.l.b16 %v1874
    %v2043 = vunpack.c.h.b16 %v1874
    %v2044 = vunpack.c.l.b16 %v1875
    %v2045 = vunpack.c.h.b16 %v1875
    %v2046 = vunpack.c.l.b16 %v1876
    %v2047 = vunpack.c.h.b16 %v1876
    %v2048 = vunpack.c.l.b16 %v1877
    %v2049 = vunpack.c.h.b16 %v1877
    %v2050 = vunpack.c.l.b16 %v1878
    %v2051 = vunpack.c.h.b16 %v1878
    %v2052 = vunpack.c.l.b16 %v1879
    %v2053 = vunpack.c.h.b16 %v1879
    %v2054 = vunpack.c.l.b16 %v1880
    %v2055 = vunpack.c.h.b16 %v1880
    %v2056 = vunpack.c.l.b16 %v1881
    %v2057 = vunpack.c.h.b16 %v1881
    %v2058 = vunpack.c.l.b16 %v1882
    %v2059 = vunpack.c.h.b16 %v1882
    %v2060 = vunpack.c.l.b16 %v1883
    %v2061 = vunpack.c.h.b16 %v1883
    %v2062 = vunpack.c.l.b16 %v1884
    %v2063 = vunpack.c.h.b16 %v1884
    %v2064 = vunpack.c.l.b16 %v1885
    %v2065 = vunpack.c.h.b16 %v1885
    %v2066 = vunpack.c.l.b16 %v1886
    %v2067 = vunpack.c.h.b16 %v1886
    %v2068 = vunpack.c.l.b16 %v1887
    %v2069 = vunpack.c.h.b16 %v1887
    %v2070 = vunpack.c.l.b16 %v1888
    %v2071 = vunpack.c.h.b16 %v1888
    %v2072 = vunpack.c.l.b16 %v1889
    %v2073 = vunpack.c.h.b16 %v1889
    %v2074 = vunpack.c.l.b16 %v1890
    %v2075 = vunpack.c.h.b16 %v1890
    %v2076 = vunpack.c.l.b16 %v1891
    %v2077 = vunpack.c.h.b16 %v1891
    %v2078 = vunpack.c.l.b16 %v1892
    %v2079 = vunpack.c.h.b16 %v1892
    %v2080 = vunpack.c.l.b16 %v1893
    %v2081 = vunpack.c.h.b16 %v1893
    %v2082 = vunpack.c.l.b16 %v1894
    %v2083 = vunpack.c.h.b16 %v1894
    %v2084 = vunpack.c.l.b16 %v1895
    %v2085 = vunpack.c.h.b16 %v1895
    %v2086 = vunpack.c.l.b16 %v1896
    %v2087 = vunpack.c.h.b16 %v1896
    %v2088 = vunpack.c.l.b16 %v1897
    %v2089 = vunpack.c.h.b16 %v1897
    %v2090 = vunpack.c.l.b16 %v1898
    %v2091 = vunpack.c.h.b16 %v1898
    %v2092 = vunpack.c.l.b16 %v1899
    %v2093 = vunpack.c.h.b16 %v1899
    %v2094 = vunpack.c.l.b16 %v1900
    %v2095 = vunpack.c.h.b16 %v1900
    %v2096 = vunpack.c.l.b16 %v1901
    %v2097 = vunpack.c.h.b16 %v1901
    %v2098 = vunpack.c.l.b16 %v1902
    %v2099 = vunpack.c.h.b16 %v1902
    %v2100 = vunpack.c.l.b16 %v1903
    %v2101 = vunpack.c.h.b16 %v1903
    %v2102 = vpack.c.b16 %v1976, %v1974
    %v2103 = vpack.c.b16 %v1977, %v1975
    %v2104 = vpack.c.b16 %v1980, %v1978
    %v2105 = vpack.c.b16 %v1981, %v1979
    %v2106 = vpack.c.b16 %v1984, %v1982
    %v2107 = vpack.c.b16 %v1985, %v1983
    %v2108 = vpack.c.b16 %v1988, %v1986
    %v2109 = vpack.c.b16 %v1989, %v1987
    %v2110 = vpack.c.b16 %v1992, %v1990
    %v2111 = vpack.c.b16 %v1993, %v1991
    %v2112 = vpack.c.b16 %v1996, %v1994
    %v2113 = vpack.c.b16 %v1997, %v1995
    %v2114 = vpack.c.b16 %v2000, %v1998
    %v2115 = vpack.c.b16 %v2001, %v1999
    %v2116 = vpack.c.b16 %v2004, %v2002
    %v2117 = vpack.c.b16 %v2005, %v2003
    %v2118 = vpack.c.b16 %v2008, %v2006
    %v2119 = vpack.c.b16 %v2009, %v2007
    %v2120 = vpack.c.b16 %v2012, %v2010
    %v2121 = vpack.c.b16 %v2013, %v2011
    %v2122 = vpack.c.b16 %v2016, %v2014
    %v2123 = vpack.c.b16 %v2017, %v2015
    %v2124 = vpack.c.b16 %v2020, %v2018
    %v2125 = vpack.c.b16 %v2021, %v2019
    %v2126 = vpack.c.b16 %v2024, %v2022
    %v2127 = vpack.c.b16 %v2025, %v2023
    %v2128 = vpack.c.b16 %v2028, %v2026
    %v2129 = vpack.c.b16 %v2029, %v2027
    %v2130 = vpack.c.b16 %v2032, %v2030
    %v2131 = vpack.c.b16 %v2033, %v2031
    %v2132 = vpack.c.b16 %v2036, %v2034
    %v2133 = vpack.c.b16 %v2037, %v2035
    %v2134 = vpack.c.b16 %v2040, %v2038
    %v2135 = vpack.c.b16 %v2041, %v2039
    %v2136 = vpack.c.b16 %v2044, %v2042
    %v2137 = vpack.c.b16 %v2045, %v2043
    %v2138 = vpack.c.b16 %v2048, %v2046
    %v2139 = vpack.c.b16 %v2049, %v2047
    %v2140 = vpack.c.b16 %v2052, %v2050
    %v2141 = vpack.c.b16 %v2053, %v2051
    %v2142 = vpack.c.b16 %v2056, %v2054
    %v2143 = vpack.c.b16 %v2057, %v2055
    %v2144 = vpack.c.b16 %v2060, %v2058
    %v2145 = vpack.c.b16 %v2061, %v2059
    %v2146 = vpack.c.b16 %v2064, %v2062
    %v2147 = vpack.c.b16 %v2065, %v2063
    %v2148 = vpack.c.b16 %v2068, %v2066
    %v2149 = vpack.c.b16 %v2069, %v2067
    %v2150 = vpack.c.b16 %v2072, %v2070
    %v2151 = vpack.c.b16 %v2073, %v2071
    %v2152 = vpack.c.b16 %v2076, %v2074
    %v2153 = vpack.c.b16 %v2077, %v2075
    %v2154 = vpack.c.b16 %v2080, %v2078
    %v2155 = vpack.c.b16 %v2081, %v2079
    %v2156 = vpack.c.b16 %v2084, %v2082
    %v2157 = vpack.c.b16 %v2085, %v2083
    %v2158 = vpack.c.b16 %v2088, %v2086
    %v2159 = vpack.c.b16 %v2089, %v2087
    %v2160 = vpack.c.b16 %v2092, %v2090
    %v2161 = vpack.c.b16 %v2093, %v2091
    %v2162 = vpack.c.b16 %v2096, %v2094
    %v2163 = vpack.c.b16 %v2097, %v2095
    %v2164 = vpack.c.b16 %v2100, %v2098
    %v2165 = vpack.c.b16 %v2101, %v2099
    %2230 = vmatpush.bf16.msra.mxu0 %v2116
    %2231 = vmatpush.bf16.msra.mxu0 %v2114
    %2232 = vmatpush.bf16.msra.mxu0 %v2112
    %2233 = vmatpush.bf16.msra.mxu0 %v2110
    %2234 = vmatpush.bf16.msra.mxu0 %v2108
    %2235 = vmatpush.bf16.msra.mxu0 %v2106
    %2236 = vmatpush.bf16.msra.mxu0 %v2104
    %2237 = vmatpush.bf16.msra.mxu0 %v2102
    %2238 = vmatmul.bf16.gmra.mxu0 %v1836
    %v2239 = vpop.f32.mrf.mxu0
    %v2240 = vadd.f32 %v1906, %v2239
    %v2241 = vpop.f32.mrf.mxu0
    %2242 = vdwg.mxu0
    %2243 = vmatpush.bf16.msra.mxu0 %v2132
    %2244 = vmatpush.bf16.msra.mxu0 %v2130
    %2245 = vmatpush.bf16.msra.mxu0 %v2128
    %2246 = vmatpush.bf16.msra.mxu0 %v2126
    %2247 = vmatpush.bf16.msra.mxu0 %v2124
    %2248 = vmatpush.bf16.msra.mxu0 %v2122
    %2249 = vmatpush.bf16.msra.mxu0 %v2120
    %2250 = vmatpush.bf16.msra.mxu0 %v2118
    %2251 = vmatmul.bf16.gmra.mxu0 %v1837
    %v2252 = vpop.f32.mrf.mxu0
    %v2253 = vadd.f32 %v2240, %v2252
    %v2254 = vpop.f32.mrf.mxu0
    %2255 = vdwg.mxu0
    %2256 = vmatpush.bf16.msra.mxu0 %v2148
    %2257 = vmatpush.bf16.msra.mxu0 %v2146
    %2258 = vmatpush.bf16.msra.mxu0 %v2144
    %2259 = vmatpush.bf16.msra.mxu0 %v2142
    %2260 = vmatpush.bf16.msra.mxu0 %v2140
    %2261 = vmatpush.bf16.msra.mxu0 %v2138
    %2262 = vmatpush.bf16.msra.mxu0 %v2136
    %2263 = vmatpush.bf16.msra.mxu0 %v2134
    %2264 = vmatmul.bf16.gmra.mxu0 %v1838
    %v2265 = vpop.f32.mrf.mxu0
    %v2266 = vadd.f32 %v2253, %v2265
    %v2267 = vpop.f32.mrf.mxu0
    %2268 = vdwg.mxu0
    %2269 = vmatpush.bf16.msra.mxu0 %v2164
    %2270 = vmatpush.bf16.msra.mxu0 %v2162
    %2271 = vmatpush.bf16.msra.mxu0 %v2160
    %2272 = vmatpush.bf16.msra.mxu0 %v2158
    %2273 = vmatpush.bf16.msra.mxu0 %v2156
    %2274 = vmatpush.bf16.msra.mxu0 %v2154
    %2275 = vmatpush.bf16.msra.mxu0 %v2152
    %2276 = vmatpush.bf16.msra.mxu0 %v2150
    %2277 = vmatmul.bf16.gmra.mxu0 %v1839
    %v2278 = vpop.f32.mrf.mxu0
    %v2279 = vadd.f32 %v2266, %v2278
    %v2280 = vpop.f32.mrf.mxu0
    %2281 = vdwg.mxu0
    %2282 = vmatpush.bf16.msra.mxu0 %v2117
    %2283 = vmatpush.bf16.msra.mxu0 %v2115
    %2284 = vmatpush.bf16.msra.mxu0 %v2113
    %2285 = vmatpush.bf16.msra.mxu0 %v2111
    %2286 = vmatpush.bf16.msra.mxu0 %v2109
    %2287 = vmatpush.bf16.msra.mxu0 %v2107
    %2288 = vmatpush.bf16.msra.mxu0 %v2105
    %2289 = vmatpush.bf16.msra.mxu0 %v2103
    %2290 = vmatmul.bf16.gmra.mxu0 %v1836
    %v2291 = vpop.f32.mrf.mxu0
    %v2292 = vadd.f32 %v1907, %v2291
    %v2293 = vpop.f32.mrf.mxu0
    %2294 = vdwg.mxu0
    %2295 = vmatpush.bf16.msra.mxu0 %v2133
    %2296 = vmatpush.bf16.msra.mxu0 %v2131
    %2297 = vmatpush.bf16.msra.mxu0 %v2129
    %2298 = vmatpush.bf16.msra.mxu0 %v2127
    %2299 = vmatpush.bf16.msra.mxu0 %v2125
    %2300 = vmatpush.bf16.msra.mxu0 %v2123
    %2301 = vmatpush.bf16.msra.mxu0 %v2121
    %2302 = vmatpush.bf16.msra.mxu0 %v2119
    %2303 = vmatmul.bf16.gmra.mxu0 %v1837
    %v2304 = vpop.f32.mrf.mxu0
    %v2305 = vadd.f32 %v2292, %v2304
    %v2306 = vpop.f32.mrf.mxu0
    %2307 = vdwg.mxu0
    %2308 = vmatpush.bf16.msra.mxu0 %v2149
    %2309 = vmatpush.bf16.msra.mxu0 %v2147
    %2310 = vmatpush.bf16.msra.mxu0 %v2145
    %2311 = vmatpush.bf16.msra.mxu0 %v2143
    %2312 = vmatpush.bf16.msra.mxu0 %v2141
    %2313 = vmatpush.bf16.msra.mxu0 %v2139
    %2314 = vmatpush.bf16.msra.mxu0 %v2137
    %2315 = vmatpush.bf16.msra.mxu0 %v2135
    %2316 = vmatmul.bf16.gmra.mxu0 %v1838
    %v2317 = vpop.f32.mrf.mxu0
    %v2318 = vadd.f32 %v2305, %v2317
    %v2319 = vpop.f32.mrf.mxu0
    %2320 = vdwg.mxu0
    %2321 = vmatpush.bf16.msra.mxu0 %v2165
    %2322 = vmatpush.bf16.msra.mxu0 %v2163
    %2323 = vmatpush.bf16.msra.mxu0 %v2161
    %2324 = vmatpush.bf16.msra.mxu0 %v2159
    %2325 = vmatpush.bf16.msra.mxu0 %v2157
    %2326 = vmatpush.bf16.msra.mxu0 %v2155
    %2327 = vmatpush.bf16.msra.mxu0 %v2153
    %2328 = vmatpush.bf16.msra.mxu0 %v2151
    %2329 = vmatmul.bf16.gmra.mxu0 %v1839
    %v2330 = vpop.f32.mrf.mxu0
    %v2331 = vadd.f32 %v2318, %v2330
    %v2332 = vpop.f32.mrf.mxu0
    %2333 = vdwg.mxu0
    %v2334 = vld [vmem:[%s1] sm:$0xff]
    %v2335 = vmul.f32 %v2331, 0.5
    %v2336 = vmul.f32 %v2335, 1.442695
    %v2337 = vpow.pop %v2336
    %v2338 = vmul.f32 %v2334, %v2337
    %v2339 = vadd.f32 %v2279, %v2338
    %v2340 = vpack.c.bf16 %v2339, %v2339
    %v2341 = vld [vmem:[#allocation5] sm:$0xff]
    %v2342 = vld [vmem:[#allocation5 + $0x8] sm:$0xff]
    %v2343 = vld [vmem:[#allocation5 + $0x10] sm:$0xff]
    %v2344 = vld [vmem:[#allocation5 + $0x18] sm:$0xff]
    %v2345 = vld [vmem:[#allocation5 + $0x20] sm:$0xff]
    %v2346 = vld [vmem:[#allocation5 + $0x28] sm:$0xff]
    %v2347 = vld [vmem:[#allocation5 + $0x30] sm:$0xff]
    %v2348 = vld [vmem:[#allocation5 + $0x38] sm:$0xff]
    %v2349 = vld [vmem:[#allocation5 + $0x40] sm:$0xff]
    %v2350 = vld [vmem:[#allocation5 + $0x48] sm:$0xff]
    %v2351 = vld [vmem:[#allocation5 + $0x50] sm:$0xff]
    %v2352 = vld [vmem:[#allocation5 + $0x58] sm:$0xff]
    %v2353 = vld [vmem:[#allocation5 + $0x60] sm:$0xff]
    %v2354 = vld [vmem:[#allocation5 + $0x68] sm:$0xff]
    %v2355 = vld [vmem:[#allocation5 + $0x70] sm:$0xff]
    %v2356 = vld [vmem:[#allocation5 + $0x78] sm:$0xff]
    %v2357 = vld [vmem:[#allocation5 + $0x80] sm:$0xff]
    %v2358 = vld [vmem:[#allocation5 + $0x88] sm:$0xff]
    %v2359 = vld [vmem:[#allocation5 + $0x90] sm:$0xff]
    %v2360 = vld [vmem:[#allocation5 + $0x98] sm:$0xff]
    %v2361 = vld [vmem:[#allocation5 + $0xa0] sm:$0xff]
    %v2362 = vld [vmem:[#allocation5 + $0xa8] sm:$0xff]
    %v2363 = vld [vmem:[#allocation5 + $0xb0] sm:$0xff]
    %v2364 = vld [vmem:[#allocation5 + $0xb8] sm:$0xff]
    %v2365 = vld [vmem:[#allocation5 + $0xc0] sm:$0xff]
    %v2366 = vld [vmem:[#allocation5 + $0xc8] sm:$0xff]
    %v2367 = vld [vmem:[#allocation5 + $0xd0] sm:$0xff]
    %v2368 = vld [vmem:[#allocation5 + $0xd8] sm:$0xff]
    %v2369 = vld [vmem:[#allocation5 + $0xe0] sm:$0xff]
    %v2370 = vld [vmem:[#allocation5 + $0xe8] sm:$0xff]
    %v2371 = vld [vmem:[#allocation5 + $0xf0] sm:$0xff]
    %v2372 = vld [vmem:[#allocation5 + $0xf8] sm:$0xff]
    %v2373 = vld [vmem:[%s7] sm:$0xf]
    %v2375 = vperm.slane %v2373, 0
    %v2376 = vperm.slane %v2373, 1
    %v2377 = vperm.slane %v2373, 2
    %v2378 = vperm.slane %v2373, 3
    %v2415 = vunpack.c.l.b16 %v2341
    %v2416 = vunpack.c.h.b16 %v2341
    %v2417 = vunpack.c.l.b16 %v2342
    %v2418 = vunpack.c.h.b16 %v2342
    %v2419 = vunpack.c.l.b16 %v2343
    %v2420 = vunpack.c.h.b16 %v2343
    %v2421 = vunpack.c.l.b16 %v2344
    %v2422 = vunpack.c.h.b16 %v2344
    %v2423 = vunpack.c.l.b16 %v2345
    %v2424 = vunpack.c.h.b16 %v2345
    %v2425 = vunpack.c.l.b16 %v2346
    %v2426 = vunpack.c.h.b16 %v2346
    %v2427 = vunpack.c.l.b16 %v2347
    %v2428 = vunpack.c.h.b16 %v2347
    %v2429 = vunpack.c.l.b16 %v2348
    %v2430 = vunpack.c.h.b16 %v2348
    %v2431 = vunpack.c.l.b16 %v2349
    %v2432 = vunpack.c.h.b16 %v2349
    %v2433 = vunpack.c.l.b16 %v2350
    %v2434 = vunpack.c.h.b16 %v2350
    %v2435 = vunpack.c.l.b16 %v2351
    %v2436 = vunpack.c.h.b16 %v2351
    %v2437 = vunpack.c.l.b16 %v2352
    %v2438 = vunpack.c.h.b16 %v2352
    %v2439 = vunpack.c.l.b16 %v2353
    %v2440 = vunpack.c.h.b16 %v2353
    %v2441 = vunpack.c.l.b16 %v2354
    %v2442 = vunpack.c.h.b16 %v2354
    %v2443 = vunpack.c.l.b16 %v2355
    %v2444 = vunpack.c.h.b16 %v2355
    %v2445 = vunpack.c.l.b16 %v2356
    %v2446 = vunpack.c.h.b16 %v2356
    %v2447 = vunpack.c.l.b16 %v2357
    %v2448 = vunpack.c.h.b16 %v2357
    %v2449 = vunpack.c.l.b16 %v2358
    %v2450 = vunpack.c.h.b16 %v2358
    %v2451 = vunpack.c.l.b16 %v2359
    %v2452 = vunpack.c.h.b16 %v2359
    %v2453 = vunpack.c.l.b16 %v2360
    %v2454 = vunpack.c.h.b16 %v2360
    %v2455 = vunpack.c.l.b16 %v2361
    %v2456 = vunpack.c.h.b16 %v2361
    %v2457 = vunpack.c.l.b16 %v2362
    %v2458 = vunpack.c.h.b16 %v2362
    %v2459 = vunpack.c.l.b16 %v2363
    %v2460 = vunpack.c.h.b16 %v2363
    %v2461 = vunpack.c.l.b16 %v2364
    %v2462 = vunpack.c.h.b16 %v2364
    %v2463 = vunpack.c.l.b16 %v2365
    %v2464 = vunpack.c.h.b16 %v2365
    %v2465 = vunpack.c.l.b16 %v2366
    %v2466 = vunpack.c.h.b16 %v2366
    %v2467 = vunpack.c.l.b16 %v2367
    %v2468 = vunpack.c.h.b16 %v2367
    %v2469 = vunpack.c.l.b16 %v2368
    %v2470 = vunpack.c.h.b16 %v2368
    %v2471 = vunpack.c.l.b16 %v2369
    %v2472 = vunpack.c.h.b16 %v2369
    %v2473 = vunpack.c.l.b16 %v2370
    %v2474 = vunpack.c.h.b16 %v2370
    %v2475 = vunpack.c.l.b16 %v2371
    %v2476 = vunpack.c.h.b16 %v2371
    %v2477 = vunpack.c.l.b16 %v2372
    %v2478 = vunpack.c.h.b16 %v2372
    %v2479 = vpack.c.b16 %v2419, %v2415
    %v2480 = vpack.c.b16 %v2420, %v2416
    %v2481 = vpack.c.b16 %v2421, %v2417
    %v2482 = vpack.c.b16 %v2422, %v2418
    %v2483 = vpack.c.b16 %v2427, %v2423
    %v2484 = vpack.c.b16 %v2428, %v2424
    %v2485 = vpack.c.b16 %v2429, %v2425
    %v2486 = vpack.c.b16 %v2430, %v2426
    %v2487 = vpack.c.b16 %v2435, %v2431
    %v2488 = vpack.c.b16 %v2436, %v2432
    %v2489 = vpack.c.b16 %v2437, %v2433
    %v2490 = vpack.c.b16 %v2438, %v2434
    %v2491 = vpack.c.b16 %v2443, %v2439
    %v2492 = vpack.c.b16 %v2444, %v2440
    %v2493 = vpack.c.b16 %v2445, %v2441
    %v2494 = vpack.c.b16 %v2446, %v2442
    %v2495 = vpack.c.b16 %v2451, %v2447
    %v2496 = vpack.c.b16 %v2452, %v2448
    %v2497 = vpack.c.b16 %v2453, %v2449
    %v2498 = vpack.c.b16 %v2454, %v2450
    %v2499 = vpack.c.b16 %v2459, %v2455
    %v2500 = vpack.c.b16 %v2460, %v2456
    %v2501 = vpack.c.b16 %v2461, %v2457
    %v2502 = vpack.c.b16 %v2462, %v2458
    %v2503 = vpack.c.b16 %v2467, %v2463
    %v2504 = vpack.c.b16 %v2468, %v2464
    %v2505 = vpack.c.b16 %v2469, %v2465
    %v2506 = vpack.c.b16 %v2470, %v2466
    %v2507 = vpack.c.b16 %v2475, %v2471
    %v2508 = vpack.c.b16 %v2476, %v2472
    %v2509 = vpack.c.b16 %v2477, %v2473
    %v2510 = vpack.c.b16 %v2478, %v2474
    %2543 = vmatpush.bf16.msra.mxu0 %v2507
    %2544 = vmatpush.bf16.msra.mxu0 %v2503
    %2545 = vmatpush.bf16.msra.mxu0 %v2499
    %2546 = vmatpush.bf16.msra.mxu0 %v2495
    %2547 = vmatpush.bf16.msra.mxu0 %v2491
    %2548 = vmatpush.bf16.msra.mxu0 %v2487
    %2549 = vmatpush.bf16.msra.mxu0 %v2483
    %2550 = vmatpush.bf16.msra.mxu0 %v2479
    %2551 = vmatmul.bf16.gmra.mxu0 %v2340
    %v2552 = vpop.f32.mrf.mxu0
    %v2553 = vadd.f32 %v2375, %v2552
    %v2554 = vpop.f32.mrf.mxu0
    %2555 = vdwg.mxu0
    %2556 = vmatpush.bf16.msra.mxu0 %v2508
    %2557 = vmatpush.bf16.msra.mxu0 %v2504
    %2558 = vmatpush.bf16.msra.mxu0 %v2500
    %2559 = vmatpush.bf16.msra.mxu0 %v2496
    %2560 = vmatpush.bf16.msra.mxu0 %v2492
    %2561 = vmatpush.bf16.msra.mxu0 %v2488
    %2562 = vmatpush.bf16.msra.mxu0 %v2484
    %2563 = vmatpush.bf16.msra.mxu0 %v2480
    %2564 = vmatmul.bf16.gmra.mxu0 %v2340
    %v2565 = vpop.f32.mrf.mxu0
    %v2566 = vadd.f32 %v2376, %v2565
    %v2567 = vpop.f32.mrf.mxu0
    %2568 = vdwg.mxu0
    %2569 = vmatpush.bf16.msra.mxu0 %v2509
    %2570 = vmatpush.bf16.msra.mxu0 %v2505
    %2571 = vmatpush.bf16.msra.mxu0 %v2501
    %2572 = vmatpush.bf16.msra.mxu0 %v2497
    %2573 = vmatpush.bf16.msra.mxu0 %v2493
    %2574 = vmatpush.bf16.msra.mxu0 %v2489
    %2575 = vmatpush.bf16.msra.mxu0 %v2485
    %2576 = vmatpush.bf16.msra.mxu0 %v2481
    %2577 = vmatmul.bf16.gmra.mxu0 %v2340
    %v2578 = vpop.f32.mrf.mxu0
    %v2579 = vadd.f32 %v2377, %v2578
    %v2580 = vpop.f32.mrf.mxu0
    %2581 = vdwg.mxu0
    %2582 = vmatpush.bf16.msra.mxu0 %v2510
    %2583 = vmatpush.bf16.msra.mxu0 %v2506
    %2584 = vmatpush.bf16.msra.mxu0 %v2502
    %2585 = vmatpush.bf16.msra.mxu0 %v2498
    %2586 = vmatpush.bf16.msra.mxu0 %v2494
    %2587 = vmatpush.bf16.msra.mxu0 %v2490
    %2588 = vmatpush.bf16.msra.mxu0 %v2486
    %2589 = vmatpush.bf16.msra.mxu0 %v2482
    %2590 = vmatmul.bf16.gmra.mxu0 %v2340
    %v2591 = vpop.f32.mrf.mxu0
    %v2592 = vadd.f32 %v2378, %v2591
    %v2593 = vpop.f32.mrf.mxu0
    %2594 = vdwg.mxu0
    %v2595 = vmax.f32 %v2553, 0.0
    %v2596 = vmax.f32 %v2566, 0.0
    %v2597 = vmax.f32 %v2579, 0.0
    %v2598 = vmax.f32 %v2592, 0.0
    %v2599 = vpack.c.bf16 %v2595, %v2595
    %v2600 = vpack.c.bf16 %v2596, %v2596
    %v2601 = vpack.c.bf16 %v2597, %v2597
    %v2602 = vpack.c.bf16 %v2598, %v2598
    %v2603 = vld [vmem:[#allocation7] sm:$0xff]
    %v2604 = vld [vmem:[#allocation7 + $0x8] sm:$0xff]
    %v2605 = vld [vmem:[#allocation7 + $0x10] sm:$0xff]
    %v2606 = vld [vmem:[#allocation7 + $0x18] sm:$0xf]
    %v2607 = vld [vmem:[#allocation7 + $0x1c] sm:$0xff]
    %v2608 = vld [vmem:[#allocation7 + $0x24] sm:$0xff]
    %v2609 = vld [vmem:[#allocation7 + $0x2c] sm:$0xff]
    %v2610 = vld [vmem:[#allocation7 + $0x34] sm:$0xf]
    %v2611 = vld [vmem:[#allocation7 + $0x38] sm:$0xff]
    %v2612 = vld [vmem:[#allocation7 + $0x40] sm:$0xff]
    %v2613 = vld [vmem:[#allocation7 + $0x48] sm:$0xff]
    %v2614 = vld [vmem:[#allocation7 + $0x50] sm:$0xf]
    %v2615 = vld [vmem:[#allocation7 + $0x54] sm:$0xff]
    %v2616 = vld [vmem:[#allocation7 + $0x5c] sm:$0xff]
    %v2617 = vld [vmem:[#allocation7 + $0x64] sm:$0xff]
    %v2618 = vld [vmem:[#allocation7 + $0x6c] sm:$0xf]
    %v2619 = vld [vmem:[#allocation7 + $0x70] sm:$0xff]
    %v2620 = vld [vmem:[#allocation7 + $0x78] sm:$0xff]
    %v2621 = vld [vmem:[#allocation7 + $0x80] sm:$0xff]
    %v2622 = vld [vmem:[#allocation7 + $0x88] sm:$0xf]
    %v2623 = vld [vmem:[#allocation7 + $0x8c] sm:$0xff]
    %v2624 = vld [vmem:[#allocation7 + $0x94] sm:$0xff]
    %v2625 = vld [vmem:[#allocation7 + $0x9c] sm:$0xff]
    %v2626 = vld [vmem:[#allocation7 + $0xa4] sm:$0xf]
    %v2627 = vld [vmem:[#allocation7 + $0xa8] sm:$0xff]
    %v2628 = vld [vmem:[#allocation7 + $0xb0] sm:$0xff]
    %v2629 = vld [vmem:[#allocation7 + $0xb8] sm:$0xff]
    %v2630 = vld [vmem:[#allocation7 + $0xc0] sm:$0xf]
    %v2631 = vld [vmem:[#allocation7 + $0xc4] sm:$0xff]
    %v2632 = vld [vmem:[#allocation7 + $0xcc] sm:$0xff]
    %v2633 = vld [vmem:[#allocation7 + $0xd4] sm:$0xff]
    %v2634 = vld [vmem:[#allocation7 + $0xdc] sm:$0xf]
    %v2635 = vld [vmem:[#allocation7 + $0xe0] sm:$0xff]
    %v2636 = vld [vmem:[#allocation7 + $0xe8] sm:$0xff]
    %v2637 = vld [vmem:[#allocation7 + $0xf0] sm:$0xff]
    %v2638 = vld [vmem:[#allocation7 + $0xf8] sm:$0xf]
    %v2639 = vld [vmem:[#allocation7 + $0xfc] sm:$0xff]
    %v2640 = vld [vmem:[#allocation7 + $0x104] sm:$0xff]
    %v2641 = vld [vmem:[#allocation7 + $0x10c] sm:$0xff]
    %v2642 = vld [vmem:[#allocation7 + $0x114] sm:$0xf]
    %v2643 = vld [vmem:[#allocation7 + $0x118] sm:$0xff]
    %v2644 = vld [vmem:[#allocation7 + $0x120] sm:$0xff]
    %v2645 = vld [vmem:[#allocation7 + $0x128] sm:$0xff]
    %v2646 = vld [vmem:[#allocation7 + $0x130] sm:$0xf]
    %v2647 = vld [vmem:[#allocation7 + $0x134] sm:$0xff]
    %v2648 = vld [vmem:[#allocation7 + $0x13c] sm:$0xff]
    %v2649 = vld [vmem:[#allocation7 + $0x144] sm:$0xff]
    %v2650 = vld [vmem:[#allocation7 + $0x14c] sm:$0xf]
    %v2651 = vld [vmem:[#allocation7 + $0x150] sm:$0xff]
    %v2652 = vld [vmem:[#allocation7 + $0x158] sm:$0xff]
    %v2653 = vld [vmem:[#allocation7 + $0x160] sm:$0xff]
    %v2654 = vld [vmem:[#allocation7 + $0x168] sm:$0xf]
    %v2655 = vld [vmem:[#allocation7 + $0x16c] sm:$0xff]
    %v2656 = vld [vmem:[#allocation7 + $0x174] sm:$0xff]
    %v2657 = vld [vmem:[#allocation7 + $0x17c] sm:$0xff]
    %v2658 = vld [vmem:[#allocation7 + $0x184] sm:$0xf]
    %v2659 = vld [vmem:[#allocation7 + $0x188] sm:$0xff]
    %v2660 = vld [vmem:[#allocation7 + $0x190] sm:$0xff]
    %v2661 = vld [vmem:[#allocation7 + $0x198] sm:$0xff]
    %v2662 = vld [vmem:[#allocation7 + $0x1a0] sm:$0xf]
    %v2663 = vld [vmem:[#allocation7 + $0x1a4] sm:$0xff]
    %v2664 = vld [vmem:[#allocation7 + $0x1ac] sm:$0xff]
    %v2665 = vld [vmem:[#allocation7 + $0x1b4] sm:$0xff]
    %v2666 = vld [vmem:[#allocation7 + $0x1bc] sm:$0xf]
    %v2667 = vld [vmem:[#allocation7 + $0x1c0] sm:$0xff]
    %v2668 = vld [vmem:[#allocation7 + $0x1c8] sm:$0xff]
    %v2669 = vld [vmem:[#allocation7 + $0x1d0] sm:$0xff]
    %v2670 = vld [vmem:[#allocation7 + $0x1d8] sm:$0xf]
    %v2671 = vld [vmem:[#allocation7 + $0x1dc] sm:$0xff]
    %v2672 = vld [vmem:[#allocation7 + $0x1e4] sm:$0xff]
    %v2673 = vld [vmem:[#allocation7 + $0x1ec] sm:$0xff]
    %v2674 = vld [vmem:[#allocation7 + $0x1f4] sm:$0xf]
    %v2675 = vld [vmem:[#allocation7 + $0x1f8] sm:$0xff]
    %v2676 = vld [vmem:[#allocation7 + $0x200] sm:$0xff]
    %v2677 = vld [vmem:[#allocation7 + $0x208] sm:$0xff]
    %v2678 = vld [vmem:[#allocation7 + $0x210] sm:$0xf]
    %v2679 = vld [vmem:[#allocation7 + $0x214] sm:$0xff]
    %v2680 = vld [vmem:[#allocation7 + $0x21c] sm:$0xff]
    %v2681 = vld [vmem:[#allocation7 + $0x224] sm:$0xff]
    %v2682 = vld [vmem:[#allocation7 + $0x22c] sm:$0xf]
    %v2683 = vld [vmem:[#allocation7 + $0x230] sm:$0xff]
    %v2684 = vld [vmem:[#allocation7 + $0x238] sm:$0xff]
    %v2685 = vld [vmem:[#allocation7 + $0x240] sm:$0xff]
    %v2686 = vld [vmem:[#allocation7 + $0x248] sm:$0xf]
    %v2687 = vld [vmem:[#allocation7 + $0x24c] sm:$0xff]
    %v2688 = vld [vmem:[#allocation7 + $0x254] sm:$0xff]
    %v2689 = vld [vmem:[#allocation7 + $0x25c] sm:$0xff]
    %v2690 = vld [vmem:[#allocation7 + $0x264] sm:$0xf]
    %v2691 = vld [vmem:[#allocation7 + $0x268] sm:$0xff]
    %v2692 = vld [vmem:[#allocation7 + $0x270] sm:$0xff]
    %v2693 = vld [vmem:[#allocation7 + $0x278] sm:$0xff]
    %v2694 = vld [vmem:[#allocation7 + $0x280] sm:$0xf]
    %v2695 = vld [vmem:[#allocation7 + $0x284] sm:$0xff]
    %v2696 = vld [vmem:[#allocation7 + $0x28c] sm:$0xff]
    %v2697 = vld [vmem:[#allocation7 + $0x294] sm:$0xff]
    %v2698 = vld [vmem:[#allocation7 + $0x29c] sm:$0xf]
    %v2699 = vld [vmem:[#allocation7 + $0x2a0] sm:$0xff]
    %v2700 = vld [vmem:[#allocation7 + $0x2a8] sm:$0xff]
    %v2701 = vld [vmem:[#allocation7 + $0x2b0] sm:$0xff]
    %v2702 = vld [vmem:[#allocation7 + $0x2b8] sm:$0xf]
    %v2703 = vld [vmem:[#allocation7 + $0x2bc] sm:$0xff]
    %v2704 = vld [vmem:[#allocation7 + $0x2c4] sm:$0xff]
    %v2705 = vld [vmem:[#allocation7 + $0x2cc] sm:$0xff]
    %v2706 = vld [vmem:[#allocation7 + $0x2d4] sm:$0xf]
    %v2707 = vld [vmem:[#allocation7 + $0x2d8] sm:$0xff]
    %v2708 = vld [vmem:[#allocation7 + $0x2e0] sm:$0xff]
    %v2709 = vld [vmem:[#allocation7 + $0x2e8] sm:$0xff]
    %v2710 = vld [vmem:[#allocation7 + $0x2f0] sm:$0xf]
    %v2711 = vld [vmem:[#allocation7 + $0x2f4] sm:$0xff]
    %v2712 = vld [vmem:[#allocation7 + $0x2fc] sm:$0xff]
    %v2713 = vld [vmem:[#allocation7 + $0x304] sm:$0xff]
    %v2714 = vld [vmem:[#allocation7 + $0x30c] sm:$0xf]
    %v2715 = vld [vmem:[#allocation7 + $0x310] sm:$0xff]
    %v2716 = vld [vmem:[#allocation7 + $0x318] sm:$0xff]
    %v2717 = vld [vmem:[#allocation7 + $0x320] sm:$0xff]
    %v2718 = vld [vmem:[#allocation7 + $0x328] sm:$0xf]
    %v2719 = vld [vmem:[#allocation7 + $0x32c] sm:$0xff]
    %v2720 = vld [vmem:[#allocation7 + $0x334] sm:$0xff]
    %v2721 = vld [vmem:[#allocation7 + $0x33c] sm:$0xff]
    %v2722 = vld [vmem:[#allocation7 + $0x344] sm:$0xf]
    %v2723 = vld [vmem:[#allocation7 + $0x348] sm:$0xff]
    %v2724 = vld [vmem:[#allocation7 + $0x350] sm:$0xff]
    %v2725 = vld [vmem:[#allocation7 + $0x358] sm:$0xff]
    %v2726 = vld [vmem:[#allocation7 + $0x360] sm:$0xf]
    %v2727 = vld [vmem:[#allocation7 + $0x364] sm:$0xff]
    %v2728 = vld [vmem:[#allocation7 + $0x36c] sm:$0xff]
    %v2729 = vld [vmem:[#allocation7 + $0x374] sm:$0xff]
    %v2730 = vld [vmem:[#allocation7 + $0x37c] sm:$0xf]
    %v2731 = vld [vmem:[#allocation7 + $0x380] sm:$0xff]
    %v2732 = vld [vmem:[#allocation7 + $0x388] sm:$0xff]
    %v2733 = vld [vmem:[#allocation7 + $0x390] sm:$0xff]
    %v2734 = vld [vmem:[#allocation7 + $0x398] sm:$0xf]
    %v2735 = vld [vmem:[#allocation7 + $0x39c] sm:$0xff]
    %v2736 = vld [vmem:[#allocation7 + $0x3a4] sm:$0xff]
    %v2737 = vld [vmem:[#allocation7 + $0x3ac] sm:$0xff]
    %v2738 = vld [vmem:[#allocation7 + $0x3b4] sm:$0xf]
    %v2739 = vld [vmem:[#allocation7 + $0x3b8] sm:$0xff]
    %v2740 = vld [vmem:[#allocation7 + $0x3c0] sm:$0xff]
    %v2741 = vld [vmem:[#allocation7 + $0x3c8] sm:$0xff]
    %v2742 = vld [vmem:[#allocation7 + $0x3d0] sm:$0xf]
    %v2743 = vld [vmem:[#allocation7 + $0x3d4] sm:$0xff]
    %v2744 = vld [vmem:[#allocation7 + $0x3dc] sm:$0xff]
    %v2745 = vld [vmem:[#allocation7 + $0x3e4] sm:$0xff]
    %v2746 = vld [vmem:[#allocation7 + $0x3ec] sm:$0xf]
    %v2747 = vld [vmem:[#allocation7 + $0x3f0] sm:$0xff]
    %v2748 = vld [vmem:[#allocation7 + $0x3f8] sm:$0xff]
    %v2749 = vld [vmem:[#allocation7 + $0x400] sm:$0xff]
    %v2750 = vld [vmem:[#allocation7 + $0x408] sm:$0xf]
    %v2751 = vld [vmem:[#allocation7 + $0x40c] sm:$0xff]
    %v2752 = vld [vmem:[#allocation7 + $0x414] sm:$0xff]
    %v2753 = vld [vmem:[#allocation7 + $0x41c] sm:$0xff]
    %v2754 = vld [vmem:[#allocation7 + $0x424] sm:$0xf]
    %v2755 = vld [vmem:[#allocation7 + $0x428] sm:$0xff]
    %v2756 = vld [vmem:[#allocation7 + $0x430] sm:$0xff]
    %v2757 = vld [vmem:[#allocation7 + $0x438] sm:$0xff]
    %v2758 = vld [vmem:[#allocation7 + $0x440] sm:$0xf]
    %v2759 = vld [vmem:[#allocation7 + $0x444] sm:$0xff]
    %v2760 = vld [vmem:[#allocation7 + $0x44c] sm:$0xff]
    %v2761 = vld [vmem:[#allocation7 + $0x454] sm:$0xff]
    %v2762 = vld [vmem:[#allocation7 + $0x45c] sm:$0xf]
    %v2763 = vld [vmem:[#allocation7 + $0x460] sm:$0xff]
    %v2764 = vld [vmem:[#allocation7 + $0x468] sm:$0xff]
    %v2765 = vld [vmem:[#allocation7 + $0x470] sm:$0xff]
    %v2766 = vld [vmem:[#allocation7 + $0x478] sm:$0xf]
    %v2767 = vld [vmem:[#allocation7 + $0x47c] sm:$0xff]
    %v2768 = vld [vmem:[#allocation7 + $0x484] sm:$0xff]
    %v2769 = vld [vmem:[#allocation7 + $0x48c] sm:$0xff]
    %v2770 = vld [vmem:[#allocation7 + $0x494] sm:$0xf]
    %v2771 = vld [vmem:[#allocation7 + $0x498] sm:$0xff]
    %v2772 = vld [vmem:[#allocation7 + $0x4a0] sm:$0xff]
    %v2773 = vld [vmem:[#allocation7 + $0x4a8] sm:$0xff]
    %v2774 = vld [vmem:[#allocation7 + $0x4b0] sm:$0xf]
    %v2775 = vld [vmem:[#allocation7 + $0x4b4] sm:$0xff]
    %v2776 = vld [vmem:[#allocation7 + $0x4bc] sm:$0xff]
    %v2777 = vld [vmem:[#allocation7 + $0x4c4] sm:$0xff]
    %v2778 = vld [vmem:[#allocation7 + $0x4cc] sm:$0xf]
    %v2779 = vld [vmem:[#allocation7 + $0x4d0] sm:$0xff]
    %v2780 = vld [vmem:[#allocation7 + $0x4d8] sm:$0xff]
    %v2781 = vld [vmem:[#allocation7 + $0x4e0] sm:$0xff]
    %v2782 = vld [vmem:[#allocation7 + $0x4e8] sm:$0xf]
    %v2783 = vld [vmem:[#allocation7 + $0x4ec] sm:$0xff]
    %v2784 = vld [vmem:[#allocation7 + $0x4f4] sm:$0xff]
    %v2785 = vld [vmem:[#allocation7 + $0x4fc] sm:$0xff]
    %v2786 = vld [vmem:[#allocation7 + $0x504] sm:$0xf]
    %v2787 = vld [vmem:[#allocation7 + $0x508] sm:$0xff]
    %v2788 = vld [vmem:[#allocation7 + $0x510] sm:$0xff]
    %v2789 = vld [vmem:[#allocation7 + $0x518] sm:$0xff]
    %v2790 = vld [vmem:[#allocation7 + $0x520] sm:$0xf]
    %v2791 = vld [vmem:[#allocation7 + $0x524] sm:$0xff]
    %v2792 = vld [vmem:[#allocation7 + $0x52c] sm:$0xff]
    %v2793 = vld [vmem:[#allocation7 + $0x534] sm:$0xff]
    %v2794 = vld [vmem:[#allocation7 + $0x53c] sm:$0xf]
    %v2795 = vld [vmem:[#allocation7 + $0x540] sm:$0xff]
    %v2796 = vld [vmem:[#allocation7 + $0x548] sm:$0xff]
    %v2797 = vld [vmem:[#allocation7 + $0x550] sm:$0xff]
    %v2798 = vld [vmem:[#allocation7 + $0x558] sm:$0xf]
    %v2799 = vld [vmem:[#allocation7 + $0x55c] sm:$0xff]
    %v2800 = vld [vmem:[#allocation7 + $0x564] sm:$0xff]
    %v2801 = vld [vmem:[#allocation7 + $0x56c] sm:$0xff]
    %v2802 = vld [vmem:[#allocation7 + $0x574] sm:$0xf]
    %v2803 = vld [vmem:[#allocation7 + $0x578] sm:$0xff]
    %v2804 = vld [vmem:[#allocation7 + $0x580] sm:$0xff]
    %v2805 = vld [vmem:[#allocation7 + $0x588] sm:$0xff]
    %v2806 = vld [vmem:[#allocation7 + $0x590] sm:$0xf]
    %v2807 = vld [vmem:[#allocation7 + $0x594] sm:$0xff]
    %v2808 = vld [vmem:[#allocation7 + $0x59c] sm:$0xff]
    %v2809 = vld [vmem:[#allocation7 + $0x5a4] sm:$0xff]
    %v2810 = vld [vmem:[#allocation7 + $0x5ac] sm:$0xf]
    %v2811 = vld [vmem:[#allocation7 + $0x5b0] sm:$0xff]
    %v2812 = vld [vmem:[#allocation7 + $0x5b8] sm:$0xff]
    %v2813 = vld [vmem:[#allocation7 + $0x5c0] sm:$0xff]
    %v2814 = vld [vmem:[#allocation7 + $0x5c8] sm:$0xf]
    %v2815 = vld [vmem:[#allocation7 + $0x5cc] sm:$0xff]
    %v2816 = vld [vmem:[#allocation7 + $0x5d4] sm:$0xff]
    %v2817 = vld [vmem:[#allocation7 + $0x5dc] sm:$0xff]
    %v2818 = vld [vmem:[#allocation7 + $0x5e4] sm:$0xf]
    %v2819 = vld [vmem:[#allocation7 + $0x5e8] sm:$0xff]
    %v2820 = vld [vmem:[#allocation7 + $0x5f0] sm:$0xff]
    %v2821 = vld [vmem:[#allocation7 + $0x5f8] sm:$0xff]
    %v2822 = vld [vmem:[#allocation7 + $0x600] sm:$0xf]
    %v2823 = vld [vmem:[#allocation7 + $0x604] sm:$0xff]
    %v2824 = vld [vmem:[#allocation7 + $0x60c] sm:$0xff]
    %v2825 = vld [vmem:[#allocation7 + $0x614] sm:$0xff]
    %v2826 = vld [vmem:[#allocation7 + $0x61c] sm:$0xf]
    %v2827 = vld [vmem:[#allocation7 + $0x620] sm:$0xff]
    %v2828 = vld [vmem:[#allocation7 + $0x628] sm:$0xff]
    %v2829 = vld [vmem:[#allocation7 + $0x630] sm:$0xff]
    %v2830 = vld [vmem:[#allocation7 + $0x638] sm:$0xf]
    %v2831 = vld [vmem:[#allocation7 + $0x63c] sm:$0xff]
    %v2832 = vld [vmem:[#allocation7 + $0x644] sm:$0xff]
    %v2833 = vld [vmem:[#allocation7 + $0x64c] sm:$0xff]
    %v2834 = vld [vmem:[#allocation7 + $0x654] sm:$0xf]
    %v2835 = vld [vmem:[#allocation7 + $0x658] sm:$0xff]
    %v2836 = vld [vmem:[#allocation7 + $0x660] sm:$0xff]
    %v2837 = vld [vmem:[#allocation7 + $0x668] sm:$0xff]
    %v2838 = vld [vmem:[#allocation7 + $0x670] sm:$0xf]
    %v2839 = vld [vmem:[#allocation7 + $0x674] sm:$0xff]
    %v2840 = vld [vmem:[#allocation7 + $0x67c] sm:$0xff]
    %v2841 = vld [vmem:[#allocation7 + $0x684] sm:$0xff]
    %v2842 = vld [vmem:[#allocation7 + $0x68c] sm:$0xf]
    %v2843 = vld [vmem:[#allocation7 + $0x690] sm:$0xff]
    %v2844 = vld [vmem:[#allocation7 + $0x698] sm:$0xff]
    %v2845 = vld [vmem:[#allocation7 + $0x6a0] sm:$0xff]
    %v2846 = vld [vmem:[#allocation7 + $0x6a8] sm:$0xf]
    %v2847 = vld [vmem:[#allocation7 + $0x6ac] sm:$0xff]
    %v2848 = vld [vmem:[#allocation7 + $0x6b4] sm:$0xff]
    %v2849 = vld [vmem:[#allocation7 + $0x6bc] sm:$0xff]
    %v2850 = vld [vmem:[#allocation7 + $0x6c4] sm:$0xf]
    %v2851 = vld [vmem:[#allocation7 + $0x6c8] sm:$0xff]
    %v2852 = vld [vmem:[#allocation7 + $0x6d0] sm:$0xff]
    %v2853 = vld [vmem:[#allocation7 + $0x6d8] sm:$0xff]
    %v2854 = vld [vmem:[#allocation7 + $0x6e0] sm:$0xf]
    %v2855 = vld [vmem:[#allocation7 + $0x6e4] sm:$0xff]
    %v2856 = vld [vmem:[#allocation7 + $0x6ec] sm:$0xff]
    %v2857 = vld [vmem:[#allocation7 + $0x6f4] sm:$0xff]
    %v2858 = vld [vmem:[#allocation7 + $0x6fc] sm:$0xf]
    %v2859 = vld [vmem:[%s9] sm:$0xff]
    %v2861 = vperm.slane %v2859, 0
    %v2862 = vperm.slane %v2859, 1
    %v2863 = vperm.slane %v2859, 2
    %v2864 = vperm.slane %v2859, 3
    %v2865 = vperm.slane %v2859, 4
    %v2866 = vperm.slane %v2859, 5
    %v2867 = vperm.slane %v2859, 6
    %v3131 = vunpack.c.l.b16 %v2603
    %v3132 = vunpack.c.h.b16 %v2603
    %v3133 = vunpack.c.l.b16 %v2604
    %v3134 = vunpack.c.h.b16 %v2604
    %v3135 = vunpack.c.l.b16 %v2605
    %v3136 = vunpack.c.h.b16 %v2605
    %v3137 = vunpack.c.l.b16 %v2606
    %v3138 = vunpack.c.l.b16 %v2607
    %v3139 = vunpack.c.h.b16 %v2607
    %v3140 = vunpack.c.l.b16 %v2608
    %v3141 = vunpack.c.h.b16 %v2608
    %v3142 = vunpack.c.l.b16 %v2609
    %v3143 = vunpack.c.h.b16 %v2609
    %v3144 = vunpack.c.l.b16 %v2610
    %v3145 = vunpack.c.l.b16 %v2611
    %v3146 = vunpack.c.h.b16 %v2611
    %v3147 = vunpack.c.l.b16 %v2612
    %v3148 = vunpack.c.h.b16 %v2612
    %v3149 = vunpack.c.l.b16 %v2613
    %v3150 = vunpack.c.h.b16 %v2613
    %v3151 = vunpack.c.l.b16 %v2614
    %v3152 = vunpack.c.l.b16 %v2615
    %v3153 = vunpack.c.h.b16 %v2615
    %v3154 = vunpack.c.l.b16 %v2616
    %v3155 = vunpack.c.h.b16 %v2616
    %v3156 = vunpack.c.l.b16 %v2617
    %v3157 = vunpack.c.h.b16 %v2617
    %v3158 = vunpack.c.l.b16 %v2618
    %v3159 = vunpack.c.l.b16 %v2619
    %v3160 = vunpack.c.h.b16 %v2619
    %v3161 = vunpack.c.l.b16 %v2620
    %v3162 = vunpack.c.h.b16 %v2620
    %v3163 = vunpack.c.l.b16 %v2621
    %v3164 = vunpack.c.h.b16 %v2621
    %v3165 = vunpack.c.l.b16 %v2622
    %v3166 = vunpack.c.l.b16 %v2623
    %v3167 = vunpack.c.h.b16 %v2623
    %v3168 = vunpack.c.l.b16 %v2624
    %v3169 = vunpack.c.h.b16 %v2624
    %v3170 = vunpack.c.l.b16 %v2625
    %v3171 = vunpack.c.h.b16 %v2625
    %v3172 = vunpack.c.l.b16 %v2626
    %v3173 = vunpack.c.l.b16 %v2627
    %v3174 = vunpack.c.h.b16 %v2627
    %v3175 = vunpack.c.l.b16 %v2628
    %v3176 = vunpack.c.h.b16 %v2628
    %v3177 = vunpack.c.l.b16 %v2629
    %v3178 = vunpack.c.h.b16 %v2629
    %v3179 = vunpack.c.l.b16 %v2630
    %v3180 = vunpack.c.l.b16 %v2631
    %v3181 = vunpack.c.h.b16 %v2631
    %v3182 = vunpack.c.l.b16 %v2632
    %v3183 = vunpack.c.h.b16 %v2632
    %v3184 = vunpack.c.l.b16 %v2633
    %v3185 = vunpack.c.h.b16 %v2633
    %v3186 = vunpack.c.l.b16 %v2634
    %v3187 = vunpack.c.l.b16 %v2635
    %v3188 = vunpack.c.h.b16 %v2635
    %v3189 = vunpack.c.l.b16 %v2636
    %v3190 = vunpack.c.h.b16 %v2636
    %v3191 = vunpack.c.l.b16 %v2637
    %v3192 = vunpack.c.h.b16 %v2637
    %v3193 = vunpack.c.l.b16 %v2638
    %v3194 = vunpack.c.l.b16 %v2639
    %v3195 = vunpack.c.h.b16 %v2639
    %v3196 = vunpack.c.l.b16 %v2640
    %v3197 = vunpack.c.h.b16 %v2640
    %v3198 = vunpack.c.l.b16 %v2641
    %v3199 = vunpack.c.h.b16 %v2641
    %v3200 = vunpack.c.l.b16 %v2642
    %v3201 = vunpack.c.l.b16 %v2643
    %v3202 = vunpack.c.h.b16 %v2643
    %v3203 = vunpack.c.l.b16 %v2644
    %v3204 = vunpack.c.h.b16 %v2644
    %v3205 = vunpack.c.l.b16 %v2645
    %v3206 = vunpack.c.h.b16 %v2645
    %v3207 = vunpack.c.l.b16 %v2646
    %v3208 = vunpack.c.l.b16 %v2647
    %v3209 = vunpack.c.h.b16 %v2647
    %v3210 = vunpack.c.l.b16 %v2648
    %v3211 = vunpack.c.h.b16 %v2648
    %v3212 = vunpack.c.l.b16 %v2649
    %v3213 = vunpack.c.h.b16 %v2649
    %v3214 = vunpack.c.l.b16 %v2650
    %v3215 = vunpack.c.l.b16 %v2651
    %v3216 = vunpack.c.h.b16 %v2651
    %v3217 = vunpack.c.l.b16 %v2652
    %v3218 = vunpack.c.h.b16 %v2652
    %v3219 = vunpack.c.l.b16 %v2653
    %v3220 = vunpack.c.h.b16 %v2653
    %v3221 = vunpack.c.l.b16 %v2654
    %v3222 = vunpack.c.l.b16 %v2655
    %v3223 = vunpack.c.h.b16 %v2655
    %v3224 = vunpack.c.l.b16 %v2656
    %v3225 = vunpack.c.h.b16 %v2656
    %v3226 = vunpack.c.l.b16 %v2657
    %v3227 = vunpack.c.h.b16 %v2657
    %v3228 = vunpack.c.l.b16 %v2658
    %v3229 = vunpack.c.l.b16 %v2659
    %v3230 = vunpack.c.h.b16 %v2659
    %v3231 = vunpack.c.l.b16 %v2660
    %v3232 = vunpack.c.h.b16 %v2660
    %v3233 = vunpack.c.l.b16 %v2661
    %v3234 = vunpack.c.h.b16 %v2661
    %v3235 = vunpack.c.l.b16 %v2662
    %v3236 = vunpack.c.l.b16 %v2663
    %v3237 = vunpack.c.h.b16 %v2663
    %v3238 = vunpack.c.l.b16 %v2664
    %v3239 = vunpack.c.h.b16 %v2664
    %v3240 = vunpack.c.l.b16 %v2665
    %v3241 = vunpack.c.h.b16 %v2665
    %v3242 = vunpack.c.l.b16 %v2666
    %v3243 = vunpack.c.l.b16 %v2667
    %v3244 = vunpack.c.h.b16 %v2667
    %v3245 = vunpack.c.l.b16 %v2668
    %v3246 = vunpack.c.h.b16 %v2668
    %v3247 = vunpack.c.l.b16 %v2669
    %v3248 = vunpack.c.h.b16 %v2669
    %v3249 = vunpack.c.l.b16 %v2670
    %v3250 = vunpack.c.l.b16 %v2671
    %v3251 = vunpack.c.h.b16 %v2671
    %v3252 = vunpack.c.l.b16 %v2672
    %v3253 = vunpack.c.h.b16 %v2672
    %v3254 = vunpack.c.l.b16 %v2673
    %v3255 = vunpack.c.h.b16 %v2673
    %v3256 = vunpack.c.l.b16 %v2674
    %v3257 = vunpack.c.l.b16 %v2675
    %v3258 = vunpack.c.h.b16 %v2675
    %v3259 = vunpack.c.l.b16 %v2676
    %v3260 = vunpack.c.h.b16 %v2676
    %v3261 = vunpack.c.l.b16 %v2677
    %v3262 = vunpack.c.h.b16 %v2677
    %v3263 = vunpack.c.l.b16 %v2678
    %v3264 = vunpack.c.l.b16 %v2679
    %v3265 = vunpack.c.h.b16 %v2679
    %v3266 = vunpack.c.l.b16 %v2680
    %v3267 = vunpack.c.h.b16 %v2680
    %v3268 = vunpack.c.l.b16 %v2681
    %v3269 = vunpack.c.h.b16 %v2681
    %v3270 = vunpack.c.l.b16 %v2682
    %v3271 = vunpack.c.l.b16 %v2683
    %v3272 = vunpack.c.h.b16 %v2683
    %v3273 = vunpack.c.l.b16 %v2684
    %v3274 = vunpack.c.h.b16 %v2684
    %v3275 = vunpack.c.l.b16 %v2685
    %v3276 = vunpack.c.h.b16 %v2685
    %v3277 = vunpack.c.l.b16 %v2686
    %v3278 = vunpack.c.l.b16 %v2687
    %v3279 = vunpack.c.h.b16 %v2687
    %v3280 = vunpack.c.l.b16 %v2688
    %v3281 = vunpack.c.h.b16 %v2688
    %v3282 = vunpack.c.l.b16 %v2689
    %v3283 = vunpack.c.h.b16 %v2689
    %v3284 = vunpack.c.l.b16 %v2690
    %v3285 = vunpack.c.l.b16 %v2691
    %v3286 = vunpack.c.h.b16 %v2691
    %v3287 = vunpack.c.l.b16 %v2692
    %v3288 = vunpack.c.h.b16 %v2692
    %v3289 = vunpack.c.l.b16 %v2693
    %v3290 = vunpack.c.h.b16 %v2693
    %v3291 = vunpack.c.l.b16 %v2694
    %v3292 = vunpack.c.l.b16 %v2695
    %v3293 = vunpack.c.h.b16 %v2695
    %v3294 = vunpack.c.l.b16 %v2696
    %v3295 = vunpack.c.h.b16 %v2696
    %v3296 = vunpack.c.l.b16 %v2697
    %v3297 = vunpack.c.h.b16 %v2697
    %v3298 = vunpack.c.l.b16 %v2698
    %v3299 = vunpack.c.l.b16 %v2699
    %v3300 = vunpack.c.h.b16 %v2699
    %v3301 = vunpack.c.l.b16 %v2700
    %v3302 = vunpack.c.h.b16 %v2700
    %v3303 = vunpack.c.l.b16 %v2701
    %v3304 = vunpack.c.h.b16 %v2701
    %v3305 = vunpack.c.l.b16 %v2702
    %v3306 = vunpack.c.l.b16 %v2703
    %v3307 = vunpack.c.h.b16 %v2703
    %v3308 = vunpack.c.l.b16 %v2704
    %v3309 = vunpack.c.h.b16 %v2704
    %v3310 = vunpack.c.l.b16 %v2705
    %v3311 = vunpack.c.h.b16 %v2705
    %v3312 = vunpack.c.l.b16 %v2706
    %v3313 = vunpack.c.l.b16 %v2707
    %v3314 = vunpack.c.h.b16 %v2707
    %v3315 = vunpack.c.l.b16 %v2708
    %v3316 = vunpack.c.h.b16 %v2708
    %v3317 = vunpack.c.l.b16 %v2709
    %v3318 = vunpack.c.h.b16 %v2709
    %v3319 = vunpack.c.l.b16 %v2710
    %v3320 = vunpack.c.l.b16 %v2711
    %v3321 = vunpack.c.h.b16 %v2711
    %v3322 = vunpack.c.l.b16 %v2712
    %v3323 = vunpack.c.h.b16 %v2712
    %v3324 = vunpack.c.l.b16 %v2713
    %v3325 = vunpack.c.h.b16 %v2713
    %v3326 = vunpack.c.l.b16 %v2714
    %v3327 = vunpack.c.l.b16 %v2715
    %v3328 = vunpack.c.h.b16 %v2715
    %v3329 = vunpack.c.l.b16 %v2716
    %v3330 = vunpack.c.h.b16 %v2716
    %v3331 = vunpack.c.l.b16 %v2717
    %v3332 = vunpack.c.h.b16 %v2717
    %v3333 = vunpack.c.l.b16 %v2718
    %v3334 = vunpack.c.l.b16 %v2719
    %v3335 = vunpack.c.h.b16 %v2719
    %v3336 = vunpack.c.l.b16 %v2720
    %v3337 = vunpack.c.h.b16 %v2720
    %v3338 = vunpack.c.l.b16 %v2721
    %v3339 = vunpack.c.h.b16 %v2721
    %v3340 = vunpack.c.l.b16 %v2722
    %v3341 = vunpack.c.l.b16 %v2723
    %v3342 = vunpack.c.h.b16 %v2723
    %v3343 = vunpack.c.l.b16 %v2724
    %v3344 = vunpack.c.h.b16 %v2724
    %v3345 = vunpack.c.l.b16 %v2725
    %v3346 = vunpack.c.h.b16 %v2725
    %v3347 = vunpack.c.l.b16 %v2726
    %v3348 = vunpack.c.l.b16 %v2727
    %v3349 = vunpack.c.h.b16 %v2727
    %v3350 = vunpack.c.l.b16 %v2728
    %v3351 = vunpack.c.h.b16 %v2728
    %v3352 = vunpack.c.l.b16 %v2729
    %v3353 = vunpack.c.h.b16 %v2729
    %v3354 = vunpack.c.l.b16 %v2730
    %v3355 = vunpack.c.l.b16 %v2731
    %v3356 = vunpack.c.h.b16 %v2731
    %v3357 = vunpack.c.l.b16 %v2732
    %v3358 = vunpack.c.h.b16 %v2732
    %v3359 = vunpack.c.l.b16 %v2733
    %v3360 = vunpack.c.h.b16 %v2733
    %v3361 = vunpack.c.l.b16 %v2734
    %v3362 = vunpack.c.l.b16 %v2735
    %v3363 = vunpack.c.h.b16 %v2735
    %v3364 = vunpack.c.l.b16 %v2736
    %v3365 = vunpack.c.h.b16 %v2736
    %v3366 = vunpack.c.l.b16 %v2737
    %v3367 = vunpack.c.h.b16 %v2737
    %v3368 = vunpack.c.l.b16 %v2738
    %v3369 = vunpack.c.l.b16 %v2739
    %v3370 = vunpack.c.h.b16 %v2739
    %v3371 = vunpack.c.l.b16 %v2740
    %v3372 = vunpack.c.h.b16 %v2740
    %v3373 = vunpack.c.l.b16 %v2741
    %v3374 = vunpack.c.h.b16 %v2741
    %v3375 = vunpack.c.l.b16 %v2742
    %v3376 = vunpack.c.l.b16 %v2743
    %v3377 = vunpack.c.h.b16 %v2743
    %v3378 = vunpack.c.l.b16 %v2744
    %v3379 = vunpack.c.h.b16 %v2744
    %v3380 = vunpack.c.l.b16 %v2745
    %v3381 = vunpack.c.h.b16 %v2745
    %v3382 = vunpack.c.l.b16 %v2746
    %v3383 = vunpack.c.l.b16 %v2747
    %v3384 = vunpack.c.h.b16 %v2747
    %v3385 = vunpack.c.l.b16 %v2748
    %v3386 = vunpack.c.h.b16 %v2748
    %v3387 = vunpack.c.l.b16 %v2749
    %v3388 = vunpack.c.h.b16 %v2749
    %v3389 = vunpack.c.l.b16 %v2750
    %v3390 = vunpack.c.l.b16 %v2751
    %v3391 = vunpack.c.h.b16 %v2751
    %v3392 = vunpack.c.l.b16 %v2752
    %v3393 = vunpack.c.h.b16 %v2752
    %v3394 = vunpack.c.l.b16 %v2753
    %v3395 = vunpack.c.h.b16 %v2753
    %v3396 = vunpack.c.l.b16 %v2754
    %v3397 = vunpack.c.l.b16 %v2755
    %v3398 = vunpack.c.h.b16 %v2755
    %v3399 = vunpack.c.l.b16 %v2756
    %v3400 = vunpack.c.h.b16 %v2756
    %v3401 = vunpack.c.l.b16 %v2757
    %v3402 = vunpack.c.h.b16 %v2757
    %v3403 = vunpack.c.l.b16 %v2758
    %v3404 = vunpack.c.l.b16 %v2759
    %v3405 = vunpack.c.h.b16 %v2759
    %v3406 = vunpack.c.l.b16 %v2760
    %v3407 = vunpack.c.h.b16 %v2760
    %v3408 = vunpack.c.l.b16 %v2761
    %v3409 = vunpack.c.h.b16 %v2761
    %v3410 = vunpack.c.l.b16 %v2762
    %v3411 = vunpack.c.l.b16 %v2763
    %v3412 = vunpack.c.h.b16 %v2763
    %v3413 = vunpack.c.l.b16 %v2764
    %v3414 = vunpack.c.h.b16 %v2764
    %v3415 = vunpack.c.l.b16 %v2765
    %v3416 = vunpack.c.h.b16 %v2765
    %v3417 = vunpack.c.l.b16 %v2766
    %v3418 = vunpack.c.l.b16 %v2767
    %v3419 = vunpack.c.h.b16 %v2767
    %v3420 = vunpack.c.l.b16 %v2768
    %v3421 = vunpack.c.h.b16 %v2768
    %v3422 = vunpack.c.l.b16 %v2769
    %v3423 = vunpack.c.h.b16 %v2769
    %v3424 = vunpack.c.l.b16 %v2770
    %v3425 = vunpack.c.l.b16 %v2771
    %v3426 = vunpack.c.h.b16 %v2771
    %v3427 = vunpack.c.l.b16 %v2772
    %v3428 = vunpack.c.h.b16 %v2772
    %v3429 = vunpack.c.l.b16 %v2773
    %v3430 = vunpack.c.h.b16 %v2773
    %v3431 = vunpack.c.l.b16 %v2774
    %v3432 = vunpack.c.l.b16 %v2775
    %v3433 = vunpack.c.h.b16 %v2775
    %v3434 = vunpack.c.l.b16 %v2776
    %v3435 = vunpack.c.h.b16 %v2776
    %v3436 = vunpack.c.l.b16 %v2777
    %v3437 = vunpack.c.h.b16 %v2777
    %v3438 = vunpack.c.l.b16 %v2778
    %v3439 = vunpack.c.l.b16 %v2779
    %v3440 = vunpack.c.h.b16 %v2779
    %v3441 = vunpack.c.l.b16 %v2780
    %v3442 = vunpack.c.h.b16 %v2780
    %v3443 = vunpack.c.l.b16 %v2781
    %v3444 = vunpack.c.h.b16 %v2781
    %v3445 = vunpack.c.l.b16 %v2782
    %v3446 = vunpack.c.l.b16 %v2783
    %v3447 = vunpack.c.h.b16 %v2783
    %v3448 = vunpack.c.l.b16 %v2784
    %v3449 = vunpack.c.h.b16 %v2784
    %v3450 = vunpack.c.l.b16 %v2785
    %v3451 = vunpack.c.h.b16 %v2785
    %v3452 = vunpack.c.l.b16 %v2786
    %v3453 = vunpack.c.l.b16 %v2787
    %v3454 = vunpack.c.h.b16 %v2787
    %v3455 = vunpack.c.l.b16 %v2788
    %v3456 = vunpack.c.h.b16 %v2788
    %v3457 = vunpack.c.l.b16 %v2789
    %v3458 = vunpack.c.h.b16 %v2789
    %v3459 = vunpack.c.l.b16 %v2790
    %v3460 = vunpack.c.l.b16 %v2791
    %v3461 = vunpack.c.h.b16 %v2791
    %v3462 = vunpack.c.l.b16 %v2792
    %v3463 = vunpack.c.h.b16 %v2792
    %v3464 = vunpack.c.l.b16 %v2793
    %v3465 = vunpack.c.h.b16 %v2793
    %v3466 = vunpack.c.l.b16 %v2794
    %v3467 = vunpack.c.l.b16 %v2795
    %v3468 = vunpack.c.h.b16 %v2795
    %v3469 = vunpack.c.l.b16 %v2796
    %v3470 = vunpack.c.h.b16 %v2796
    %v3471 = vunpack.c.l.b16 %v2797
    %v3472 = vunpack.c.h.b16 %v2797
    %v3473 = vunpack.c.l.b16 %v2798
    %v3474 = vunpack.c.l.b16 %v2799
    %v3475 = vunpack.c.h.b16 %v2799
    %v3476 = vunpack.c.l.b16 %v2800
    %v3477 = vunpack.c.h.b16 %v2800
    %v3478 = vunpack.c.l.b16 %v2801
    %v3479 = vunpack.c.h.b16 %v2801
    %v3480 = vunpack.c.l.b16 %v2802
    %v3481 = vunpack.c.l.b16 %v2803
    %v3482 = vunpack.c.h.b16 %v2803
    %v3483 = vunpack.c.l.b16 %v2804
    %v3484 = vunpack.c.h.b16 %v2804
    %v3485 = vunpack.c.l.b16 %v2805
    %v3486 = vunpack.c.h.b16 %v2805
    %v3487 = vunpack.c.l.b16 %v2806
    %v3488 = vunpack.c.l.b16 %v2807
    %v3489 = vunpack.c.h.b16 %v2807
    %v3490 = vunpack.c.l.b16 %v2808
    %v3491 = vunpack.c.h.b16 %v2808
    %v3492 = vunpack.c.l.b16 %v2809
    %v3493 = vunpack.c.h.b16 %v2809
    %v3494 = vunpack.c.l.b16 %v2810
    %v3495 = vunpack.c.l.b16 %v2811
    %v3496 = vunpack.c.h.b16 %v2811
    %v3497 = vunpack.c.l.b16 %v2812
    %v3498 = vunpack.c.h.b16 %v2812
    %v3499 = vunpack.c.l.b16 %v2813
    %v3500 = vunpack.c.h.b16 %v2813
    %v3501 = vunpack.c.l.b16 %v2814
    %v3502 = vunpack.c.l.b16 %v2815
    %v3503 = vunpack.c.h.b16 %v2815
    %v3504 = vunpack.c.l.b16 %v2816
    %v3505 = vunpack.c.h.b16 %v2816
    %v3506 = vunpack.c.l.b16 %v2817
    %v3507 = vunpack.c.h.b16 %v2817
    %v3508 = vunpack.c.l.b16 %v2818
    %v3509 = vunpack.c.l.b16 %v2819
    %v3510 = vunpack.c.h.b16 %v2819
    %v3511 = vunpack.c.l.b16 %v2820
    %v3512 = vunpack.c.h.b16 %v2820
    %v3513 = vunpack.c.l.b16 %v2821
    %v3514 = vunpack.c.h.b16 %v2821
    %v3515 = vunpack.c.l.b16 %v2822
    %v3516 = vunpack.c.l.b16 %v2823
    %v3517 = vunpack.c.h.b16 %v2823
    %v3518 = vunpack.c.l.b16 %v2824
    %v3519 = vunpack.c.h.b16 %v2824
    %v3520 = vunpack.c.l.b16 %v2825
    %v3521 = vunpack.c.h.b16 %v2825
    %v3522 = vunpack.c.l.b16 %v2826
    %v3523 = vunpack.c.l.b16 %v2827
    %v3524 = vunpack.c.h.b16 %v2827
    %v3525 = vunpack.c.l.b16 %v2828
    %v3526 = vunpack.c.h.b16 %v2828
    %v3527 = vunpack.c.l.b16 %v2829
    %v3528 = vunpack.c.h.b16 %v2829
    %v3529 = vunpack.c.l.b16 %v2830
    %v3530 = vunpack.c.l.b16 %v2831
    %v3531 = vunpack.c.h.b16 %v2831
    %v3532 = vunpack.c.l.b16 %v2832
    %v3533 = vunpack.c.h.b16 %v2832
    %v3534 = vunpack.c.l.b16 %v2833
    %v3535 = vunpack.c.h.b16 %v2833
    %v3536 = vunpack.c.l.b16 %v2834
    %v3537 = vunpack.c.l.b16 %v2835
    %v3538 = vunpack.c.h.b16 %v2835
    %v3539 = vunpack.c.l.b16 %v2836
    %v3540 = vunpack.c.h.b16 %v2836
    %v3541 = vunpack.c.l.b16 %v2837
    %v3542 = vunpack.c.h.b16 %v2837
    %v3543 = vunpack.c.l.b16 %v2838
    %v3544 = vunpack.c.l.b16 %v2839
    %v3545 = vunpack.c.h.b16 %v2839
    %v3546 = vunpack.c.l.b16 %v2840
    %v3547 = vunpack.c.h.b16 %v2840
    %v3548 = vunpack.c.l.b16 %v2841
    %v3549 = vunpack.c.h.b16 %v2841
    %v3550 = vunpack.c.l.b16 %v2842
    %v3551 = vunpack.c.l.b16 %v2843
    %v3552 = vunpack.c.h.b16 %v2843
    %v3553 = vunpack.c.l.b16 %v2844
    %v3554 = vunpack.c.h.b16 %v2844
    %v3555 = vunpack.c.l.b16 %v2845
    %v3556 = vunpack.c.h.b16 %v2845
    %v3557 = vunpack.c.l.b16 %v2846
    %v3558 = vunpack.c.l.b16 %v2847
    %v3559 = vunpack.c.h.b16 %v2847
    %v3560 = vunpack.c.l.b16 %v2848
    %v3561 = vunpack.c.h.b16 %v2848
    %v3562 = vunpack.c.l.b16 %v2849
    %v3563 = vunpack.c.h.b16 %v2849
    %v3564 = vunpack.c.l.b16 %v2850
    %v3565 = vunpack.c.l.b16 %v2851
    %v3566 = vunpack.c.h.b16 %v2851
    %v3567 = vunpack.c.l.b16 %v2852
    %v3568 = vunpack.c.h.b16 %v2852
    %v3569 = vunpack.c.l.b16 %v2853
    %v3570 = vunpack.c.h.b16 %v2853
    %v3571 = vunpack.c.l.b16 %v2854
    %v3572 = vunpack.c.l.b16 %v2855
    %v3573 = vunpack.c.h.b16 %v2855
    %v3574 = vunpack.c.l.b16 %v2856
    %v3575 = vunpack.c.h.b16 %v2856
    %v3576 = vunpack.c.l.b16 %v2857
    %v3577 = vunpack.c.h.b16 %v2857
    %v3578 = vunpack.c.l.b16 %v2858
    %v3579 = vpack.c.b16 %v3138, %v3131
    %v3580 = vpack.c.b16 %v3139, %v3132
    %v3581 = vpack.c.b16 %v3140, %v3133
    %v3582 = vpack.c.b16 %v3141, %v3134
    %v3583 = vpack.c.b16 %v3142, %v3135
    %v3584 = vpack.c.b16 %v3143, %v3136
    %v3585 = vpack.c.b16 %v3144, %v3137
    %v3586 = vpack.c.b16 %v3152, %v3145
    %v3587 = vpack.c.b16 %v3153, %v3146
    %v3588 = vpack.c.b16 %v3154, %v3147
    %v3589 = vpack.c.b16 %v3155, %v3148
    %v3590 = vpack.c.b16 %v3156, %v3149
    %v3591 = vpack.c.b16 %v3157, %v3150
    %v3592 = vpack.c.b16 %v3158, %v3151
    %v3593 = vpack.c.b16 %v3166, %v3159
    %v3594 = vpack.c.b16 %v3167, %v3160
    %v3595 = vpack.c.b16 %v3168, %v3161
    %v3596 = vpack.c.b16 %v3169, %v3162
    %v3597 = vpack.c.b16 %v3170, %v3163
    %v3598 = vpack.c.b16 %v3171, %v3164
    %v3599 = vpack.c.b16 %v3172, %v3165
    %v3600 = vpack.c.b16 %v3180, %v3173
    %v3601 = vpack.c.b16 %v3181, %v3174
    %v3602 = vpack.c.b16 %v3182, %v3175
    %v3603 = vpack.c.b16 %v3183, %v3176
    %v3604 = vpack.c.b16 %v3184, %v3177
    %v3605 = vpack.c.b16 %v3185, %v3178
    %v3606 = vpack.c.b16 %v3186, %v3179
    %v3607 = vpack.c.b16 %v3194, %v3187
    %v3608 = vpack.c.b16 %v3195, %v3188
    %v3609 = vpack.c.b16 %v3196, %v3189
    %v3610 = vpack.c.b16 %v3197, %v3190
    %v3611 = vpack.c.b16 %v3198, %v3191
    %v3612 = vpack.c.b16 %v3199, %v3192
    %v3613 = vpack.c.b16 %v3200, %v3193
    %v3614 = vpack.c.b16 %v3208, %v3201
    %v3615 = vpack.c.b16 %v3209, %v3202
    %v3616 = vpack.c.b16 %v3210, %v3203
    %v3617 = vpack.c.b16 %v3211, %v3204
    %v3618 = vpack.c.b16 %v3212, %v3205
    %v3619 = vpack.c.b16 %v3213, %v3206
    %v3620 = vpack.c.b16 %v3214, %v3207
    %v3621 = vpack.c.b16 %v3222, %v3215
    %v3622 = vpack.c.b16 %v3223, %v3216
    %v3623 = vpack.c.b16 %v3224, %v3217
    %v3624 = vpack.c.b16 %v3225, %v3218
    %v3625 = vpack.c.b16 %v3226, %v3219
    %v3626 = vpack.c.b16 %v3227, %v3220
    %v3627 = vpack.c.b16 %v3228, %v3221
    %v3628 = vpack.c.b16 %v3236, %v3229
    %v3629 = vpack.c.b16 %v3237, %v3230
    %v3630 = vpack.c.b16 %v3238, %v3231
    %v3631 = vpack.c.b16 %v3239, %v3232
    %v3632 = vpack.c.b16 %v3240, %v3233
    %v3633 = vpack.c.b16 %v3241, %v3234
    %v3634 = vpack.c.b16 %v3242, %v3235
    %v3635 = vpack.c.b16 %v3250, %v3243
    %v3636 = vpack.c.b16 %v3251, %v3244
    %v3637 = vpack.c.b16 %v3252, %v3245
    %v3638 = vpack.c.b16 %v3253, %v3246
    %v3639 = vpack.c.b16 %v3254, %v3247
    %v3640 = vpack.c.b16 %v3255, %v3248
    %v3641 = vpack.c.b16 %v3256, %v3249
    %v3642 = vpack.c.b16 %v3264, %v3257
    %v3643 = vpack.c.b16 %v3265, %v3258
    %v3644 = vpack.c.b16 %v3266, %v3259
    %v3645 = vpack.c.b16 %v3267, %v3260
    %v3646 = vpack.c.b16 %v3268, %v3261
    %v3647 = vpack.c.b16 %v3269, %v3262
    %v3648 = vpack.c.b16 %v3270, %v3263
    %v3649 = vpack.c.b16 %v3278, %v3271
    %v3650 = vpack.c.b16 %v3279, %v3272
    %v3651 = vpack.c.b16 %v3280, %v3273
    %v3652 = vpack.c.b16 %v3281, %v3274
    %v3653 = vpack.c.b16 %v3282, %v3275
    %v3654 = vpack.c.b16 %v3283, %v3276
    %v3655 = vpack.c.b16 %v3284, %v3277
    %v3656 = vpack.c.b16 %v3292, %v3285
    %v3657 = vpack.c.b16 %v3293, %v3286
    %v3658 = vpack.c.b16 %v3294, %v3287
    %v3659 = vpack.c.b16 %v3295, %v3288
    %v3660 = vpack.c.b16 %v3296, %v3289
    %v3661 = vpack.c.b16 %v3297, %v3290
    %v3662 = vpack.c.b16 %v3298, %v3291
    %v3663 = vpack.c.b16 %v3306, %v3299
    %v3664 = vpack.c.b16 %v3307, %v3300
    %v3665 = vpack.c.b16 %v3308, %v3301
    %v3666 = vpack.c.b16 %v3309, %v3302
    %v3667 = vpack.c.b16 %v3310, %v3303
    %v3668 = vpack.c.b16 %v3311, %v3304
    %v3669 = vpack.c.b16 %v3312, %v3305
    %v3670 = vpack.c.b16 %v3320, %v3313
    %v3671 = vpack.c.b16 %v3321, %v3314
    %v3672 = vpack.c.b16 %v3322, %v3315
    %v3673 = vpack.c.b16 %v3323, %v3316
    %v3674 = vpack.c.b16 %v3324, %v3317
    %v3675 = vpack.c.b16 %v3325, %v3318
    %v3676 = vpack.c.b16 %v3326, %v3319
    %v3677 = vpack.c.b16 %v3334, %v3327
    %v3678 = vpack.c.b16 %v3335, %v3328
    %v3679 = vpack.c.b16 %v3336, %v3329
    %v3680 = vpack.c.b16 %v3337, %v3330
    %v3681 = vpack.c.b16 %v3338, %v3331
    %v3682 = vpack.c.b16 %v3339, %v3332
    %v3683 = vpack.c.b16 %v3340, %v3333
    %v3684 = vpack.c.b16 %v3348, %v3341
    %v3685 = vpack.c.b16 %v3349, %v3342
    %v3686 = vpack.c.b16 %v3350, %v3343
    %v3687 = vpack.c.b16 %v3351, %v3344
    %v3688 = vpack.c.b16 %v3352, %v3345
    %v3689 = vpack.c.b16 %v3353, %v3346
    %v3690 = vpack.c.b16 %v3354, %v3347
    %v3691 = vpack.c.b16 %v3362, %v3355
    %v3692 = vpack.c.b16 %v3363, %v3356
    %v3693 = vpack.c.b16 %v3364, %v3357
    %v3694 = vpack.c.b16 %v3365, %v3358
    %v3695 = vpack.c.b16 %v3366, %v3359
    %v3696 = vpack.c.b16 %v3367, %v3360
    %v3697 = vpack.c.b16 %v3368, %v3361
    %v3698 = vpack.c.b16 %v3376, %v3369
    %v3699 = vpack.c.b16 %v3377, %v3370
    %v3700 = vpack.c.b16 %v3378, %v3371
    %v3701 = vpack.c.b16 %v3379, %v3372
    %v3702 = vpack.c.b16 %v3380, %v3373
    %v3703 = vpack.c.b16 %v3381, %v3374
    %v3704 = vpack.c.b16 %v3382, %v3375
    %v3705 = vpack.c.b16 %v3390, %v3383
    %v3706 = vpack.c.b16 %v3391, %v3384
    %v3707 = vpack.c.b16 %v3392, %v3385
    %v3708 = vpack.c.b16 %v3393, %v3386
    %v3709 = vpack.c.b16 %v3394, %v3387
    %v3710 = vpack.c.b16 %v3395, %v3388
    %v3711 = vpack.c.b16 %v3396, %v3389
    %v3712 = vpack.c.b16 %v3404, %v3397
    %v3713 = vpack.c.b16 %v3405, %v3398
    %v3714 = vpack.c.b16 %v3406, %v3399
    %v3715 = vpack.c.b16 %v3407, %v3400
    %v3716 = vpack.c.b16 %v3408, %v3401
    %v3717 = vpack.c.b16 %v3409, %v3402
    %v3718 = vpack.c.b16 %v3410, %v3403
    %v3719 = vpack.c.b16 %v3418, %v3411
    %v3720 = vpack.c.b16 %v3419, %v3412
    %v3721 = vpack.c.b16 %v3420, %v3413
    %v3722 = vpack.c.b16 %v3421, %v3414
    %v3723 = vpack.c.b16 %v3422, %v3415
    %v3724 = vpack.c.b16 %v3423, %v3416
    %v3725 = vpack.c.b16 %v3424, %v3417
    %v3726 = vpack.c.b16 %v3432, %v3425
    %v3727 = vpack.c.b16 %v3433, %v3426
    %v3728 = vpack.c.b16 %v3434, %v3427
    %v3729 = vpack.c.b16 %v3435, %v3428
    %v3730 = vpack.c.b16 %v3436, %v3429
    %v3731 = vpack.c.b16 %v3437, %v3430
    %v3732 = vpack.c.b16 %v3438, %v3431
    %v3733 = vpack.c.b16 %v3446, %v3439
    %v3734 = vpack.c.b16 %v3447, %v3440
    %v3735 = vpack.c.b16 %v3448, %v3441
    %v3736 = vpack.c.b16 %v3449, %v3442
    %v3737 = vpack.c.b16 %v3450, %v3443
    %v3738 = vpack.c.b16 %v3451, %v3444
    %v3739 = vpack.c.b16 %v3452, %v3445
    %v3740 = vpack.c.b16 %v3460, %v3453
    %v3741 = vpack.c.b16 %v3461, %v3454
    %v3742 = vpack.c.b16 %v3462, %v3455
    %v3743 = vpack.c.b16 %v3463, %v3456
    %v3744 = vpack.c.b16 %v3464, %v3457
    %v3745 = vpack.c.b16 %v3465, %v3458
    %v3746 = vpack.c.b16 %v3466, %v3459
    %v3747 = vpack.c.b16 %v3474, %v3467
    %v3748 = vpack.c.b16 %v3475, %v3468
    %v3749 = vpack.c.b16 %v3476, %v3469
    %v3750 = vpack.c.b16 %v3477, %v3470
    %v3751 = vpack.c.b16 %v3478, %v3471
    %v3752 = vpack.c.b16 %v3479, %v3472
    %v3753 = vpack.c.b16 %v3480, %v3473
    %v3754 = vpack.c.b16 %v3488, %v3481
    %v3755 = vpack.c.b16 %v3489, %v3482
    %v3756 = vpack.c.b16 %v3490, %v3483
    %v3757 = vpack.c.b16 %v3491, %v3484
    %v3758 = vpack.c.b16 %v3492, %v3485
    %v3759 = vpack.c.b16 %v3493, %v3486
    %v3760 = vpack.c.b16 %v3494, %v3487
    %v3761 = vpack.c.b16 %v3502, %v3495
    %v3762 = vpack.c.b16 %v3503, %v3496
    %v3763 = vpack.c.b16 %v3504, %v3497
    %v3764 = vpack.c.b16 %v3505, %v3498
    %v3765 = vpack.c.b16 %v3506, %v3499
    %v3766 = vpack.c.b16 %v3507, %v3500
    %v3767 = vpack.c.b16 %v3508, %v3501
    %v3768 = vpack.c.b16 %v3516, %v3509
    %v3769 = vpack.c.b16 %v3517, %v3510
    %v3770 = vpack.c.b16 %v3518, %v3511
    %v3771 = vpack.c.b16 %v3519, %v3512
    %v3772 = vpack.c.b16 %v3520, %v3513
    %v3773 = vpack.c.b16 %v3521, %v3514
    %v3774 = vpack.c.b16 %v3522, %v3515
    %v3775 = vpack.c.b16 %v3530, %v3523
    %v3776 = vpack.c.b16 %v3531, %v3524
    %v3777 = vpack.c.b16 %v3532, %v3525
    %v3778 = vpack.c.b16 %v3533, %v3526
    %v3779 = vpack.c.b16 %v3534, %v3527
    %v3780 = vpack.c.b16 %v3535, %v3528
    %v3781 = vpack.c.b16 %v3536, %v3529
    %v3782 = vpack.c.b16 %v3544, %v3537
    %v3783 = vpack.c.b16 %v3545, %v3538
    %v3784 = vpack.c.b16 %v3546, %v3539
    %v3785 = vpack.c.b16 %v3547, %v3540
    %v3786 = vpack.c.b16 %v3548, %v3541
    %v3787 = vpack.c.b16 %v3549, %v3542
    %v3788 = vpack.c.b16 %v3550, %v3543
    %v3789 = vpack.c.b16 %v3558, %v3551
    %v3790 = vpack.c.b16 %v3559, %v3552
    %v3791 = vpack.c.b16 %v3560, %v3553
    %v3792 = vpack.c.b16 %v3561, %v3554
    %v3793 = vpack.c.b16 %v3562, %v3555
    %v3794 = vpack.c.b16 %v3563, %v3556
    %v3795 = vpack.c.b16 %v3564, %v3557
    %v3796 = vpack.c.b16 %v3572, %v3565
    %v3797 = vpack.c.b16 %v3573, %v3566
    %v3798 = vpack.c.b16 %v3574, %v3567
    %v3799 = vpack.c.b16 %v3575, %v3568
    %v3800 = vpack.c.b16 %v3576, %v3569
    %v3801 = vpack.c.b16 %v3577, %v3570
    %v3802 = vpack.c.b16 %v3578, %v3571
    %4027 = vmatpush.bf16.msra.mxu0 %v3628
    %4028 = vmatpush.bf16.msra.mxu0 %v3621
    %4029 = vmatpush.bf16.msra.mxu0 %v3614
    %4030 = vmatpush.bf16.msra.mxu0 %v3607
    %4031 = vmatpush.bf16.msra.mxu0 %v3600
    %4032 = vmatpush.bf16.msra.mxu0 %v3593
    %4033 = vmatpush.bf16.msra.mxu0 %v3586
    %4034 = vmatpush.bf16.msra.mxu0 %v3579
    %4035 = vmatmul.bf16.gmra.mxu0 %v2599
    %v4036 = vpop.f32.mrf.mxu0
    %v4037 = vadd.f32 %v2861, %v4036
    %v4038 = vpop.f32.mrf.mxu0
    %4039 = vdwg.mxu0
    %4040 = vmatpush.bf16.msra.mxu0 %v3684
    %4041 = vmatpush.bf16.msra.mxu0 %v3677
    %4042 = vmatpush.bf16.msra.mxu0 %v3670
    %4043 = vmatpush.bf16.msra.mxu0 %v3663
    %4044 = vmatpush.bf16.msra.mxu0 %v3656
    %4045 = vmatpush.bf16.msra.mxu0 %v3649
    %4046 = vmatpush.bf16.msra.mxu0 %v3642
    %4047 = vmatpush.bf16.msra.mxu0 %v3635
    %4048 = vmatmul.bf16.gmra.mxu0 %v2600
    %v4049 = vpop.f32.mrf.mxu0
    %v4050 = vadd.f32 %v4037, %v4049
    %v4051 = vpop.f32.mrf.mxu0
    %4052 = vdwg.mxu0
    %4053 = vmatpush.bf16.msra.mxu0 %v3740
    %4054 = vmatpush.bf16.msra.mxu0 %v3733
    %4055 = vmatpush.bf16.msra.mxu0 %v3726
    %4056 = vmatpush.bf16.msra.mxu0 %v3719
    %4057 = vmatpush.bf16.msra.mxu0 %v3712
    %4058 = vmatpush.bf16.msra.mxu0 %v3705
    %4059 = vmatpush.bf16.msra.mxu0 %v3698
    %4060 = vmatpush.bf16.msra.mxu0 %v3691
    %4061 = vmatmul.bf16.gmra.mxu0 %v2601
    %v4062 = vpop.f32.mrf.mxu0
    %v4063 = vadd.f32 %v4050, %v4062
    %v4064 = vpop.f32.mrf.mxu0
    %4065 = vdwg.mxu0
    %4066 = vmatpush.bf16.msra.mxu0 %v3796
    %4067 = vmatpush.bf16.msra.mxu0 %v3789
    %4068 = vmatpush.bf16.msra.mxu0 %v3782
    %4069 = vmatpush.bf16.msra.mxu0 %v3775
    %4070 = vmatpush.bf16.msra.mxu0 %v3768
    %4071 = vmatpush.bf16.msra.mxu0 %v3761
    %4072 = vmatpush.bf16.msra.mxu0 %v3754
    %4073 = vmatpush.bf16.msra.mxu0 %v3747
    %4074 = vmatmul.bf16.gmra.mxu0 %v2602
    %v4075 = vpop.f32.mrf.mxu0
    %v4076 = vadd.f32 %v4063, %v4075
    %v4077 = vpop.f32.mrf.mxu0
    %4078 = vdwg.mxu0
    %4079 = vmatpush.bf16.msra.mxu0 %v3629
    %4080 = vmatpush.bf16.msra.mxu0 %v3622
    %4081 = vmatpush.bf16.msra.mxu0 %v3615
    %4082 = vmatpush.bf16.msra.mxu0 %v3608
    %4083 = vmatpush.bf16.msra.mxu0 %v3601
    %4084 = vmatpush.bf16.msra.mxu0 %v3594
    %4085 = vmatpush.bf16.msra.mxu0 %v3587
    %4086 = vmatpush.bf16.msra.mxu0 %v3580
    %4087 = vmatmul.bf16.gmra.mxu0 %v2599
    %v4088 = vpop.f32.mrf.mxu0
    %v4089 = vadd.f32 %v2862, %v4088
    %v4090 = vpop.f32.mrf.mxu0
    %4091 = vdwg.mxu0
    %4092 = vmatpush.bf16.msra.mxu0 %v3685
    %4093 = vmatpush.bf16.msra.mxu0 %v3678
    %4094 = vmatpush.bf16.msra.mxu0 %v3671
    %4095 = vmatpush.bf16.msra.mxu0 %v3664
    %4096 = vmatpush.bf16.msra.mxu0 %v3657
    %4097 = vmatpush.bf16.msra.mxu0 %v3650
    %4098 = vmatpush.bf16.msra.mxu0 %v3643
    %4099 = vmatpush.bf16.msra.mxu0 %v3636
    %4100 = vmatmul.bf16.gmra.mxu0 %v2600
    %v4101 = vpop.f32.mrf.mxu0
    %v4102 = vadd.f32 %v4089, %v4101
    %v4103 = vpop.f32.mrf.mxu0
    %4104 = vdwg.mxu0
    %4105 = vmatpush.bf16.msra.mxu0 %v3741
    %4106 = vmatpush.bf16.msra.mxu0 %v3734
    %4107 = vmatpush.bf16.msra.mxu0 %v3727
    %4108 = vmatpush.bf16.msra.mxu0 %v3720
    %4109 = vmatpush.bf16.msra.mxu0 %v3713
    %4110 = vmatpush.bf16.msra.mxu0 %v3706
    %4111 = vmatpush.bf16.msra.mxu0 %v3699
    %4112 = vmatpush.bf16.msra.mxu0 %v3692
    %4113 = vmatmul.bf16.gmra.mxu0 %v2601
    %v4114 = vpop.f32.mrf.mxu0
    %v4115 = vadd.f32 %v4102, %v4114
    %v4116 = vpop.f32.mrf.mxu0
    %4117 = vdwg.mxu0
    %4118 = vmatpush.bf16.msra.mxu0 %v3797
    %4119 = vmatpush.bf16.msra.mxu0 %v3790
    %4120 = vmatpush.bf16.msra.mxu0 %v3783
    %4121 = vmatpush.bf16.msra.mxu0 %v3776
    %4122 = vmatpush.bf16.msra.mxu0 %v3769
    %4123 = vmatpush.bf16.msra.mxu0 %v3762
    %4124 = vmatpush.bf16.msra.mxu0 %v3755
    %4125 = vmatpush.bf16.msra.mxu0 %v3748
    %4126 = vmatmul.bf16.gmra.mxu0 %v2602
    %v4127 = vpop.f32.mrf.mxu0
    %v4128 = vadd.f32 %v4115, %v4127
    %v4129 = vpop.f32.mrf.mxu0
    %4130 = vdwg.mxu0
    %4131 = vmatpush.bf16.msra.mxu0 %v3630
    %4132 = vmatpush.bf16.msra.mxu0 %v3623
    %4133 = vmatpush.bf16.msra.mxu0 %v3616
    %4134 = vmatpush.bf16.msra.mxu0 %v3609
    %4135 = vmatpush.bf16.msra.mxu0 %v3602
    %4136 = vmatpush.bf16.msra.mxu0 %v3595
    %4137 = vmatpush.bf16.msra.mxu0 %v3588
    %4138 = vmatpush.bf16.msra.mxu0 %v3581
    %4139 = vmatmul.bf16.gmra.mxu0 %v2599
    %v4140 = vpop.f32.mrf.mxu0
    %v4141 = vadd.f32 %v2863, %v4140
    %v4142 = vpop.f32.mrf.mxu0
    %4143 = vdwg.mxu0
    %4144 = vmatpush.bf16.msra.mxu0 %v3686
    %4145 = vmatpush.bf16.msra.mxu0 %v3679
    %4146 = vmatpush.bf16.msra.mxu0 %v3672
    %4147 = vmatpush.bf16.msra.mxu0 %v3665
    %4148 = vmatpush.bf16.msra.mxu0 %v3658
    %4149 = vmatpush.bf16.msra.mxu0 %v3651
    %4150 = vmatpush.bf16.msra.mxu0 %v3644
    %4151 = vmatpush.bf16.msra.mxu0 %v3637
    %4152 = vmatmul.bf16.gmra.mxu0 %v2600
    %v4153 = vpop.f32.mrf.mxu0
    %v4154 = vadd.f32 %v4141, %v4153
    %v4155 = vpop.f32.mrf.mxu0
    %4156 = vdwg.mxu0
    %4157 = vmatpush.bf16.msra.mxu0 %v3742
    %4158 = vmatpush.bf16.msra.mxu0 %v3735
    %4159 = vmatpush.bf16.msra.mxu0 %v3728
    %4160 = vmatpush.bf16.msra.mxu0 %v3721
    %4161 = vmatpush.bf16.msra.mxu0 %v3714
    %4162 = vmatpush.bf16.msra.mxu0 %v3707
    %4163 = vmatpush.bf16.msra.mxu0 %v3700
    %4164 = vmatpush.bf16.msra.mxu0 %v3693
    %4165 = vmatmul.bf16.gmra.mxu0 %v2601
    %v4166 = vpop.f32.mrf.mxu0
    %v4167 = vadd.f32 %v4154, %v4166
    %v4168 = vpop.f32.mrf.mxu0
    %4169 = vdwg.mxu0
    %4170 = vmatpush.bf16.msra.mxu0 %v3798
    %4171 = vmatpush.bf16.msra.mxu0 %v3791
    %4172 = vmatpush.bf16.msra.mxu0 %v3784
    %4173 = vmatpush.bf16.msra.mxu0 %v3777
    %4174 = vmatpush.bf16.msra.mxu0 %v3770
    %4175 = vmatpush.bf16.msra.mxu0 %v3763
    %4176 = vmatpush.bf16.msra.mxu0 %v3756
    %4177 = vmatpush.bf16.msra.mxu0 %v3749
    %4178 = vmatmul.bf16.gmra.mxu0 %v2602
    %v4179 = vpop.f32.mrf.mxu0
    %v4180 = vadd.f32 %v4167, %v4179
    %v4181 = vpop.f32.mrf.mxu0
    %4182 = vdwg.mxu0
    %4183 = vmatpush.bf16.msra.mxu0 %v3631
    %4184 = vmatpush.bf16.msra.mxu0 %v3624
    %4185 = vmatpush.bf16.msra.mxu0 %v3617
    %4186 = vmatpush.bf16.msra.mxu0 %v3610
    %4187 = vmatpush.bf16.msra.mxu0 %v3603
    %4188 = vmatpush.bf16.msra.mxu0 %v3596
    %4189 = vmatpush.bf16.msra.mxu0 %v3589
    %4190 = vmatpush.bf16.msra.mxu0 %v3582
    %4191 = vmatmul.bf16.gmra.mxu0 %v2599
    %v4192 = vpop.f32.mrf.mxu0
    %v4193 = vadd.f32 %v2864, %v4192
    %v4194 = vpop.f32.mrf.mxu0
    %4195 = vdwg.mxu0
    %4196 = vmatpush.bf16.msra.mxu0 %v3687
    %4197 = vmatpush.bf16.msra.mxu0 %v3680
    %4198 = vmatpush.bf16.msra.mxu0 %v3673
    %4199 = vmatpush.bf16.msra.mxu0 %v3666
    %4200 = vmatpush.bf16.msra.mxu0 %v3659
    %4201 = vmatpush.bf16.msra.mxu0 %v3652
    %4202 = vmatpush.bf16.msra.mxu0 %v3645
    %4203 = vmatpush.bf16.msra.mxu0 %v3638
    %4204 = vmatmul.bf16.gmra.mxu0 %v2600
    %v4205 = vpop.f32.mrf.mxu0
    %v4206 = vadd.f32 %v4193, %v4205
    %v4207 = vpop.f32.mrf.mxu0
    %4208 = vdwg.mxu0
    %4209 = vmatpush.bf16.msra.mxu0 %v3743
    %4210 = vmatpush.bf16.msra.mxu0 %v3736
    %4211 = vmatpush.bf16.msra.mxu0 %v3729
    %4212 = vmatpush.bf16.msra.mxu0 %v3722
    %4213 = vmatpush.bf16.msra.mxu0 %v3715
    %4214 = vmatpush.bf16.msra.mxu0 %v3708
    %4215 = vmatpush.bf16.msra.mxu0 %v3701
    %4216 = vmatpush.bf16.msra.mxu0 %v3694
    %4217 = vmatmul.bf16.gmra.mxu0 %v2601
    %v4218 = vpop.f32.mrf.mxu0
    %v4219 = vadd.f32 %v4206, %v4218
    %v4220 = vpop.f32.mrf.mxu0
    %4221 = vdwg.mxu0
    %4222 = vmatpush.bf16.msra.mxu0 %v3799
    %4223 = vmatpush.bf16.msra.mxu0 %v3792
    %4224 = vmatpush.bf16.msra.mxu0 %v3785
    %4225 = vmatpush.bf16.msra.mxu0 %v3778
    %4226 = vmatpush.bf16.msra.mxu0 %v3771
    %4227 = vmatpush.bf16.msra.mxu0 %v3764
    %4228 = vmatpush.bf16.msra.mxu0 %v3757
    %4229 = vmatpush.bf16.msra.mxu0 %v3750
    %4230 = vmatmul.bf16.gmra.mxu0 %v2602
    %v4231 = vpop.f32.mrf.mxu0
    %v4232 = vadd.f32 %v4219, %v4231
    %v4233 = vpop.f32.mrf.mxu0
    %4234 = vdwg.mxu0
    %4235 = vmatpush.bf16.msra.mxu0 %v3632
    %4236 = vmatpush.bf16.msra.mxu0 %v3625
    %4237 = vmatpush.bf16.msra.mxu0 %v3618
    %4238 = vmatpush.bf16.msra.mxu0 %v3611
    %4239 = vmatpush.bf16.msra.mxu0 %v3604
    %4240 = vmatpush.bf16.msra.mxu0 %v3597
    %4241 = vmatpush.bf16.msra.mxu0 %v3590
    %4242 = vmatpush.bf16.msra.mxu0 %v3583
    %4243 = vmatmul.bf16.gmra.mxu0 %v2599
    %v4244 = vpop.f32.mrf.mxu0
    %v4245 = vadd.f32 %v2865, %v4244
    %v4246 = vpop.f32.mrf.mxu0
    %4247 = vdwg.mxu0
    %4248 = vmatpush.bf16.msra.mxu0 %v3688
    %4249 = vmatpush.bf16.msra.mxu0 %v3681
    %4250 = vmatpush.bf16.msra.mxu0 %v3674
    %4251 = vmatpush.bf16.msra.mxu0 %v3667
    %4252 = vmatpush.bf16.msra.mxu0 %v3660
    %4253 = vmatpush.bf16.msra.mxu0 %v3653
    %4254 = vmatpush.bf16.msra.mxu0 %v3646
    %4255 = vmatpush.bf16.msra.mxu0 %v3639
    %4256 = vmatmul.bf16.gmra.mxu0 %v2600
    %v4257 = vpop.f32.mrf.mxu0
    %v4258 = vadd.f32 %v4245, %v4257
    %v4259 = vpop.f32.mrf.mxu0
    %4260 = vdwg.mxu0
    %4261 = vmatpush.bf16.msra.mxu0 %v3744
    %4262 = vmatpush.bf16.msra.mxu0 %v3737
    %4263 = vmatpush.bf16.msra.mxu0 %v3730
    %4264 = vmatpush.bf16.msra.mxu0 %v3723
    %4265 = vmatpush.bf16.msra.mxu0 %v3716
    %4266 = vmatpush.bf16.msra.mxu0 %v3709
    %4267 = vmatpush.bf16.msra.mxu0 %v3702
    %4268 = vmatpush.bf16.msra.mxu0 %v3695
    %4269 = vmatmul.bf16.gmra.mxu0 %v2601
    %v4270 = vpop.f32.mrf.mxu0
    %v4271 = vadd.f32 %v4258, %v4270
    %v4272 = vpop.f32.mrf.mxu0
    %4273 = vdwg.mxu0
    %4274 = vmatpush.bf16.msra.mxu0 %v3800
    %4275 = vmatpush.bf16.msra.mxu0 %v3793
    %4276 = vmatpush.bf16.msra.mxu0 %v3786
    %4277 = vmatpush.bf16.msra.mxu0 %v3779
    %4278 = vmatpush.bf16.msra.mxu0 %v3772
    %4279 = vmatpush.bf16.msra.mxu0 %v3765
    %4280 = vmatpush.bf16.msra.mxu0 %v3758
    %4281 = vmatpush.bf16.msra.mxu0 %v3751
    %4282 = vmatmul.bf16.gmra.mxu0 %v2602
    %v4283 = vpop.f32.mrf.mxu0
    %v4284 = vadd.f32 %v4271, %v4283
    %v4285 = vpop.f32.mrf.mxu0
    %4286 = vdwg.mxu0
    %4287 = vmatpush.bf16.msra.mxu0 %v3633
    %4288 = vmatpush.bf16.msra.mxu0 %v3626
    %4289 = vmatpush.bf16.msra.mxu0 %v3619
    %4290 = vmatpush.bf16.msra.mxu0 %v3612
    %4291 = vmatpush.bf16.msra.mxu0 %v3605
    %4292 = vmatpush.bf16.msra.mxu0 %v3598
    %4293 = vmatpush.bf16.msra.mxu0 %v3591
    %4294 = vmatpush.bf16.msra.mxu0 %v3584
    %4295 = vmatmul.bf16.gmra.mxu0 %v2599
    %v4296 = vpop.f32.mrf.mxu0
    %v4297 = vadd.f32 %v2866, %v4296
    %v4298 = vpop.f32.mrf.mxu0
    %4299 = vdwg.mxu0
    %4300 = vmatpush.bf16.msra.mxu0 %v3689
    %4301 = vmatpush.bf16.msra.mxu0 %v3682
    %4302 = vmatpush.bf16.msra.mxu0 %v3675
    %4303 = vmatpush.bf16.msra.mxu0 %v3668
    %4304 = vmatpush.bf16.msra.mxu0 %v3661
    %4305 = vmatpush.bf16.msra.mxu0 %v3654
    %4306 = vmatpush.bf16.msra.mxu0 %v3647
    %4307 = vmatpush.bf16.msra.mxu0 %v3640
    %4308 = vmatmul.bf16.gmra.mxu0 %v2600
    %v4309 = vpop.f32.mrf.mxu0
    %v4310 = vadd.f32 %v4297, %v4309
    %v4311 = vpop.f32.mrf.mxu0
    %4312 = vdwg.mxu0
    %4313 = vmatpush.bf16.msra.mxu0 %v3745
    %4314 = vmatpush.bf16.msra.mxu0 %v3738
    %4315 = vmatpush.bf16.msra.mxu0 %v3731
    %4316 = vmatpush.bf16.msra.mxu0 %v3724
    %4317 = vmatpush.bf16.msra.mxu0 %v3717
    %4318 = vmatpush.bf16.msra.mxu0 %v3710
    %4319 = vmatpush.bf16.msra.mxu0 %v3703
    %4320 = vmatpush.bf16.msra.mxu0 %v3696
    %4321 = vmatmul.bf16.gmra.mxu0 %v2601
    %v4322 = vpop.f32.mrf.mxu0
    %v4323 = vadd.f32 %v4310, %v4322
    %v4324 = vpop.f32.mrf.mxu0
    %4325 = vdwg.mxu0
    %4326 = vmatpush.bf16.msra.mxu0 %v3801
    %4327 = vmatpush.bf16.msra.mxu0 %v3794
    %4328 = vmatpush.bf16.msra.mxu0 %v3787
    %4329 = vmatpush.bf16.msra.mxu0 %v3780
    %4330 = vmatpush.bf16.msra.mxu0 %v3773
    %4331 = vmatpush.bf16.msra.mxu0 %v3766
    %4332 = vmatpush.bf16.msra.mxu0 %v3759
    %4333 = vmatpush.bf16.msra.mxu0 %v3752
    %4334 = vmatmul.bf16.gmra.mxu0 %v2602
    %v4335 = vpop.f32.mrf.mxu0
    %v4336 = vadd.f32 %v4323, %v4335
    %v4337 = vpop.f32.mrf.mxu0
    %4338 = vdwg.mxu0
    %4339 = vmatpush.bf16.msra.mxu0 %v3634
    %4340 = vmatpush.bf16.msra.mxu0 %v3627
    %4341 = vmatpush.bf16.msra.mxu0 %v3620
    %4342 = vmatpush.bf16.msra.mxu0 %v3613
    %4343 = vmatpush.bf16.msra.mxu0 %v3606
    %4344 = vmatpush.bf16.msra.mxu0 %v3599
    %4345 = vmatpush.bf16.msra.mxu0 %v3592
    %4346 = vmatpush.bf16.msra.mxu0 %v3585
    %4347 = vmatmul.bf16.gmra.mxu0 %v2599
    %v4348 = vpop.f32.mrf.mxu0
    %v4349 = vadd.f32 %v2867, %v4348
    %v4350 = vpop.f32.mrf.mxu0
    %4351 = vdwg.mxu0
    %4352 = vmatpush.bf16.msra.mxu0 %v3690
    %4353 = vmatpush.bf16.msra.mxu0 %v3683
    %4354 = vmatpush.bf16.msra.mxu0 %v3676
    %4355 = vmatpush.bf16.msra.mxu0 %v3669
    %4356 = vmatpush.bf16.msra.mxu0 %v3662
    %4357 = vmatpush.bf16.msra.mxu0 %v3655
    %4358 = vmatpush.bf16.msra.mxu0 %v3648
    %4359 = vmatpush.bf16.msra.mxu0 %v3641
    %4360 = vmatmul.bf16.gmra.mxu0 %v2600
    %v4361 = vpop.f32.mrf.mxu0
    %v4362 = vadd.f32 %v4349, %v4361
    %v4363 = vpop.f32.mrf.mxu0
    %4364 = vdwg.mxu0
    %4365 = vmatpush.bf16.msra.mxu0 %v3746
    %4366 = vmatpush.bf16.msra.mxu0 %v3739
    %4367 = vmatpush.bf16.msra.mxu0 %v3732
    %4368 = vmatpush.bf16.msra.mxu0 %v3725
    %4369 = vmatpush.bf16.msra.mxu0 %v3718
    %4370 = vmatpush.bf16.msra.mxu0 %v3711
    %4371 = vmatpush.bf16.msra.mxu0 %v3704
    %4372 = vmatpush.bf16.msra.mxu0 %v3697
    %4373 = vmatmul.bf16.gmra.mxu0 %v2601
    %v4374 = vpop.f32.mrf.mxu0
    %v4375 = vadd.f32 %v4362, %v4374
    %v4376 = vpop.f32.mrf.mxu0
    %4377 = vdwg.mxu0
    %4378 = vmatpush.bf16.msra.mxu0 %v3802
    %4379 = vmatpush.bf16.msra.mxu0 %v3795
    %4380 = vmatpush.bf16.msra.mxu0 %v3788
    %4381 = vmatpush.bf16.msra.mxu0 %v3781
    %4382 = vmatpush.bf16.msra.mxu0 %v3774
    %4383 = vmatpush.bf16.msra.mxu0 %v3767
    %4384 = vmatpush.bf16.msra.mxu0 %v3760
    %4385 = vmatpush.bf16.msra.mxu0 %v3753
    %4386 = vmatmul.bf16.gmra.mxu0 %v2602
    %v4387 = vpop.f32.mrf.mxu0
    %v4388 = vadd.f32 %v4375, %v4387
    %v4389 = vpop.f32.mrf.mxu0
    %4390 = vdwg.mxu0
    %v4391 = vsub.f32 0.0, %v4076
    %v4392 = vsub.f32 0.0, %v4128
    %v4393 = vsub.f32 0.0, %v4180
    %v4394 = vsub.f32 0.0, %v4232
    %v4395 = vsub.f32 0.0, %v4284
    %v4396 = vsub.f32 0.0, %v4336
    %v4397 = vsub.f32 0.0, %v4388
    %v4398 = vmul.f32 %v4391, 1.442695
    %v4399 = vpow.pop %v4398
    %v4400 = vmul.f32 %v4392, 1.442695
    %v4401 = vpow.pop %v4400
    %v4402 = vmul.f32 %v4393, 1.442695
    %v4403 = vpow.pop %v4402
    %v4404 = vmul.f32 %v4394, 1.442695
    %v4405 = vpow.pop %v4404
    %v4406 = vmul.f32 %v4395, 1.442695
    %v4407 = vpow.pop %v4406
    %v4408 = vmul.f32 %v4396, 1.442695
    %v4409 = vpow.pop %v4408
    %v4410 = vmul.f32 %v4397, 1.442695
    %v4411 = vpow.pop %v4410
    %v4412 = vadd.f32 %v4399, 1.0
    %v4413 = vadd.f32 %v4401, 1.0
    %v4414 = vadd.f32 %v4403, 1.0
    %v4415 = vadd.f32 %v4405, 1.0
    %v4416 = vadd.f32 %v4407, 1.0
    %v4417 = vadd.f32 %v4409, 1.0
    %v4418 = vadd.f32 %v4411, 1.0
    %v4419 = vrcp.pop %v4412
    %v4420 = vrcp.pop %v4413
    %v4421 = vrcp.pop %v4414
    %v4422 = vrcp.pop %v4415
    %v4423 = vrcp.pop %v4416
    %v4424 = vrcp.pop %v4417
    %v4425 = vrcp.pop %v4418
    %4426 = vst [vmem:[#allocation8] sm:$0xff] %v4419
    %4427 = vst [vmem:[#allocation8 + $0x8] sm:$0xff] %v4420
    %4428 = vst [vmem:[#allocation8 + $0x10] sm:$0xff] %v4421
    %4429 = vst [vmem:[#allocation8 + $0x18] sm:$0xff] %v4422
    %4430 = vst [vmem:[#allocation8 + $0x20] sm:$0xff] %v4423
    %4431 = vst [vmem:[#allocation8 + $0x28] sm:$0xff] %v4424
    %4432 = vst [vmem:[#allocation8 + $0x30] sm:$0xff] %v4425
    %4433 = vst [vmem:[%s11] sm:$0xff] %v2279
    %4434 = vst [vmem:[%s11 + $0x8] sm:$0xff] %v2331
    // Predicated region
    $region54: #{vae_forward.1} parent=1 // pred_check
      _
    $region55: #{vae_forward.1} parent=1 // pred_check_branch
      %4436 = sbr.rel (0) target = $region57
    $region56: #{vae_forward.1} parent=1 // pred_region
      %4438 = vsyncadd [#allocation4], 0
      %s4440 = sshll.u32 [#allocation8], 4
      %s4441 = int_to_ptr.vmem [resolvable:$true] %s4440
      %s4442 = sshll.u32 %s10, 4
      %s4443 = int_to_ptr.hbm [resolvable:$true] %s4442
      %4445 = dma.vmem_to_hbm [thread:$0]  %s4441, 896, %s4443, [#allocation4]
    $region57: #{vae_forward.1} parent=1 // pred_fallthru
      _
    // Predicated region
    $region58: #{vae_forward.1} parent=1 // pred_check
      _
    $region59: #{vae_forward.1} parent=1 // pred_check_branch
      %4447 = sbr.rel (0) target = $region61
    $region60: #{vae_forward.1} parent=1 // pred_region
      _
    $region61: #{vae_forward.1} parent=1 // pred_fallthru
      _
    // Predicated region
    $region62: #{vae_forward.1} parent=1 // pred_check
      _
    $region63: #{vae_forward.1} parent=1 // pred_check_branch
      %4449 = sbr.rel (0) target = $region65
    $region64: #{vae_forward.1} parent=1 // pred_region
      %4451 = dma.done [#allocation4], 896
    $region65: #{vae_forward.1} parent=1 // pred_fallthru
      _
    // Predicated region
    $region66: #{vae_forward.1} parent=1 // pred_check
      _
    $region67: #{vae_forward.1} parent=1 // pred_check_branch
      %4453 = sbr.rel (0) target = $region69
    $region68: #{vae_forward.1} parent=1 // pred_region
      _
    $region69: #{vae_forward.1} parent=1 // pred_fallthru
      _
    %4454 = vsyncpa [#allocation3], 1
    %4455 = vsyncpa [#allocation6], 1
    %4456 = vsyncpa [#allocation4], 1

</llo_original>
